<compile_context>
chip_gen: v5e
topology: v5e:2x2
jax: 0.10.0
libtpu: 0.0.40
codegen_flags: <defaults>
</compile_context>

<pallas_src>
from functools import partial

import jax
import jax.numpy as jnp
from jax import lax
from jax.experimental import pallas as pl
from jax.experimental.pallas import tpu as pltpu


def self_attn_block_kernel(x_ref, grp_ref,
                           wq_ref, wk_ref, wv_ref,
                           bq_ref, bk_ref, bv_ref,
                           wo_ref, bo_ref,
                           o_ref,
                           *, num_heads, eps):
    bb, C, S = x_ref.shape                       # bb batch elements per grid step
    hd = C // num_heads
    T = bb * S                                   # stacked tokens for this grid step

    # Hoist all parameter loads out of the loops (resident VMEM constants).
    grp = grp_ref[...]                           # (C, C) f32: group-sum + broadcast / (S*cg)
    wq = wq_ref[...]                             # (C, C) bf16 (GroupNorm gamma & head scale folded)
    wk = wk_ref[...]                             # (C, C) bf16 (GroupNorm gamma folded)
    wv = wv_ref[...]
    wo = wo_ref[...]                             # (C, C) bf16
    bq = bq_ref[...]                             # (1, C) f32 (GroupNorm beta & head scale folded)
    bk = bk_ref[...]
    bv = bv_ref[...]
    bo = bo_ref[...]

    # -------- GroupNorm per batch element (f32, two-pass: mean, then centered variance) --------
    # The affine (gamma, beta) is folded into the QKV projections on the host.
    xn_parts = []
    for b in range(bb):                          # static unroll over the batch block
        # (C, S) -> (S, C): one small XLU transpose replaces a host-side HBM transpose pass.
        x = x_ref[b].astype(jnp.float32).T       # (S, C)
        ch_sum = jnp.sum(x, axis=0, keepdims=True)                              # (1, C)
        mean_c = jnp.dot(ch_sum, grp, preferred_element_type=jnp.float32)       # (1, C)
        xc = x - mean_c
        ch_var = jnp.sum(xc * xc, axis=0, keepdims=True)                        # (1, C)
        var_c = jnp.dot(ch_var, grp, preferred_element_type=jnp.float32)        # (1, C)
        xn_parts.append(xc * lax.rsqrt(var_c + eps))                            # (S, C)
    xn = xn_parts[0] if bb == 1 else jnp.concatenate(xn_parts, axis=0)          # (T, C)
    xn_b = xn.astype(jnp.bfloat16)

    # -------- Q / K / V projections: one matmul each for the whole block (bf16 ops, f32 acc) ----
    q = (jnp.dot(xn_b, wq, preferred_element_type=jnp.float32) + bq).astype(jnp.bfloat16)  # (T, C)
    k = (jnp.dot(xn_b, wk, preferred_element_type=jnp.float32) + bk).astype(jnp.bfloat16)
    v = (jnp.dot(xn_b, wv, preferred_element_type=jnp.float32) + bv).astype(jnp.bfloat16)

    # -------- per-head attention; out-projection accumulated per head over the whole block -----
    acc = jnp.zeros((T, C), jnp.float32)
    for h in range(num_heads):
        lo = h * hd
        qh = q[:, lo:lo + hd]                    # (T, hd) bf16, already scaled
        kh = k[:, lo:lo + hd]
        vh = v[:, lo:lo + hd]
        head_parts = []
        for b in range(bb):
            r0 = b * S
            qb = qh[r0:r0 + S]                   # (S, hd) sublane slice, 8-aligned
            kb = kh[r0:r0 + S]
            vb = vh[r0:r0 + S]
            # q @ k^T without materializing a transposed K (contract last dims).
            s = lax.dot_general(qb, kb, (((1,), (1,)), ((), ())),
                                preferred_element_type=jnp.float32)             # (S, S)
            s = s - jnp.max(s, axis=-1, keepdims=True)
            p = jnp.exp(s)                                                      # unnormalized
            l = jnp.sum(p, axis=-1, keepdims=True)                              # (S, 1)
            head = jnp.dot(p.astype(jnp.bfloat16), vb,
                           preferred_element_type=jnp.float32)                  # (S, hd)
            head_parts.append(head * pl.reciprocal(l, approx=True))             # softmax norm (EUP)
        head_blk = head_parts[0] if bb == 1 else jnp.concatenate(head_parts, axis=0)  # (T, hd)
        # out-projection contribution of this head: sublane row-slice of the resident Wout^T.
        acc = acc + jnp.dot(head_blk.astype(jnp.bfloat16), wo[lo:lo + hd, :],
                            preferred_element_type=jnp.float32)                 # (T, C)

    out = acc + bo                                                              # (T, C)
    for b in range(bb):
        o_ref[b] = out[b * S:(b + 1) * S].T.astype(o_ref.dtype)                 # store as (C, S)


def _default_grid_batches(B: int) -> int:
    """1 grid step on single-TensorCore chips (v5e/v6e) to amortize per-step overhead;
    2 'parallel' steps on v7x (2 TensorCores/chip) so both cores get half the batch."""
    try:
        kind = jax.devices()[0].device_kind.lower()
    except Exception:
        kind = ""
    if B % 2 == 0 and ("v7" in kind or "tpu7" in kind):
        return 2
    return 1


def self_attention_block(x_nchw, params, *, num_groups=8, num_heads=4, grid_batches=None):
    B, C, H, W = x_nchw.shape
    S = H * W
    x_bcs = x_nchw.reshape(B, C, S)              # pure reshape, no host transpose

    if grid_batches is None:
        grid_batches = _default_grid_batches(B)
    assert B % grid_batches == 0
    bb = B // grid_batches

    cg = C // num_groups
    hd = C // num_heads
    scale = 1.0 / (hd ** 0.5)

    # Group-sum + broadcast-back matrix, pre-divided by the group element count (S*cg).
    g_ids = jnp.arange(C) // cg
    grp = (g_ids[:, None] == g_ids[None, :]).astype(jnp.float32) / float(S * cg)

    gamma_col = params["gn_weight"].reshape(C, 1).astype(jnp.float32)
    beta_row = params["gn_bias"].reshape(1, C).astype(jnp.float32)

    wqkv = params["in_proj_weight"].astype(jnp.float32)      # (3C, C), rows = [Wq; Wk; Wv]
    bqkv = params["in_proj_bias"].astype(jnp.float32)        # (3C,)

    def fold_proj(w_rows, b_row, extra=1.0):
        # (xn*gamma + beta) @ W^T + b  ==  xn @ (gamma[:,None] * W^T) + (beta @ W^T + b)
        wt = w_rows.T                                        # (C_in, C_out)
        w_eff = (gamma_col * wt) * extra
        b_eff = (beta_row @ wt + b_row.reshape(1, C)) * extra
        return w_eff.astype(jnp.bfloat16), b_eff.astype(jnp.float32)

    wq_t, bq = fold_proj(wqkv[:C], bqkv[:C], extra=scale)    # head scale folded into q path
    wk_t, bk = fold_proj(wqkv[C:2 * C], bqkv[C:2 * C])
    wv_t, bv = fold_proj(wqkv[2 * C:], bqkv[2 * C:])
    wo_t = params["out_proj_weight"].T.astype(jnp.bfloat16)  # (C, C)
    bo = params["out_proj_bias"].reshape(1, C).astype(jnp.float32)

    kernel = partial(self_attn_block_kernel, num_heads=num_heads, eps=1e-5)

    const = lambda i: (0, 0)                     # weights: constant block -> VMEM-resident
    out = pl.pallas_call(
        kernel,
        out_shape=jax.ShapeDtypeStruct((B, C, S), x_bcs.dtype),
        grid_spec=pltpu.PrefetchScalarGridSpec(
            num_scalar_prefetch=0,
            grid=(grid_batches,),
            in_specs=[
                pl.BlockSpec((bb, C, S), lambda i: (i, 0, 0)),   # x, (C,S) per batch element
                pl.BlockSpec((C, C), const),                     # group matrix
                pl.BlockSpec((C, C), const),                     # Wq^T (gamma, scale folded)
                pl.BlockSpec((C, C), const),                     # Wk^T (gamma folded)
                pl.BlockSpec((C, C), const),                     # Wv^T (gamma folded)
                pl.BlockSpec((1, C), const),                     # bq (beta, scale folded)
                pl.BlockSpec((1, C), const),                     # bk (beta folded)
                pl.BlockSpec((1, C), const),                     # bv (beta folded)
                pl.BlockSpec((C, C), const),                     # Wout^T
                pl.BlockSpec((1, C), const),                     # bout
            ],
            out_specs=pl.BlockSpec((bb, C, S), lambda i: (i, 0, 0)),
        ),
        compiler_params=pltpu.CompilerParams(dimension_semantics=("parallel",)),
    )(x_bcs, grp, wq_t, wk_t, wv_t, bq, bk, bv, wo_t, bo)

    return out.reshape(B, C, H, W)               # pure reshape back to NCHW


def reference(x_nchw, params, num_groups=8, num_heads=4, eps=1e-5):
    """Pure-JAX f32 reference matching PyTorch GroupNorm + nn.MultiheadAttention semantics."""
    B, C, H, W = x_nchw.shape
    S = H * W
    x = x_nchw.reshape(B, C, S)
    xg = x.reshape(B, num_groups, (C // num_groups) * S)
    mean = xg.mean(axis=-1, keepdims=True)
    var = xg.var(axis=-1, keepdims=True)                    # biased, as PyTorch
    xg = (xg - mean) / jnp.sqrt(var + eps)
    x = xg.reshape(B, C, S) * params["gn_weight"][None, :, None] + params["gn_bias"][None, :, None]
    x = x.transpose(0, 2, 1)                                # (B, S, C)
    qkv = x @ params["in_proj_weight"].T + params["in_proj_bias"]
    q, k, v = jnp.split(qkv, 3, axis=-1)
    hd = C // num_heads
    q = q.reshape(B, S, num_heads, hd).transpose(0, 2, 1, 3)
    k = k.reshape(B, S, num_heads, hd).transpose(0, 2, 1, 3)
    v = v.reshape(B, S, num_heads, hd).transpose(0, 2, 1, 3)
    s = jnp.einsum("bhqd,bhkd->bhqk", q, k) / jnp.sqrt(jnp.float32(hd))
    p = jax.nn.softmax(s, axis=-1)
    o = jnp.einsum("bhqk,bhkd->bhqd", p, v)
    o = o.transpose(0, 2, 1, 3).reshape(B, S, C)
    o = o @ params["out_proj_weight"].T + params["out_proj_bias"]
    return o.transpose(0, 2, 1).reshape(B, C, H, W)


if __name__ == "__main__":
    key = jax.random.PRNGKey(0)
    B, C, H, W = 2, 32, 8, 8          # num_channels=32 (divisible by 8 groups and 4 heads)
    keys = jax.random.split(key, 7)
    x = jax.random.normal(keys[0], (B, C, H, W), jnp.float32)
    params = {
        "gn_weight": 1.0 + 0.1 * jax.random.normal(keys[1], (C,), jnp.float32),
        "gn_bias": 0.1 * jax.random.normal(keys[2], (C,), jnp.float32),
        "in_proj_weight": jax.random.normal(keys[3], (3 * C, C), jnp.float32) / jnp.sqrt(jnp.float32(C)),
        "in_proj_bias": 0.02 * jax.random.normal(keys[4], (3 * C,), jnp.float32),
        "out_proj_weight": jax.random.normal(keys[5], (C, C), jnp.float32) / jnp.sqrt(jnp.float32(C)),
        "out_proj_bias": 0.02 * jax.random.normal(keys[6], (C,), jnp.float32),
    }

    out = jax.block_until_ready(self_attention_block(x, params))
    ref = reference(x, params)

    assert out.shape == (B, C, H, W), out.shape
    # Tolerance reflects bf16 MXU operands (f32 accumulation) + approx reciprocal vs f32 reference.
    assert jnp.allclose(out, ref, atol=3e-2, rtol=3e-2), float(jnp.max(jnp.abs(out - ref)))
    print("KERNEL_OK")
</pallas_src>

<mosaic_0001>
module attributes {stable_mosaic.version = 11 : i64} {
  func.func @self_attn_block_kernel(%arg0: i32, %arg1: memref<2x32x64xf32, #tpu.memory_space<vmem>>, %arg2: memref<32x32xf32, #tpu.memory_space<vmem>>, %arg3: memref<32x32xbf16, #tpu.memory_space<vmem>>, %arg4: memref<32x32xbf16, #tpu.memory_space<vmem>>, %arg5: memref<32x32xbf16, #tpu.memory_space<vmem>>, %arg6: memref<1x32xf32, #tpu.memory_space<vmem>>, %arg7: memref<1x32xf32, #tpu.memory_space<vmem>>, %arg8: memref<1x32xf32, #tpu.memory_space<vmem>>, %arg9: memref<32x32xbf16, #tpu.memory_space<vmem>>, %arg10: memref<1x32xf32, #tpu.memory_space<vmem>>, %arg11: memref<2x32x64xf32, #tpu.memory_space<vmem>>) attributes {dimension_semantics = [#tpu.dimension_semantics<parallel>], iteration_bounds = array<i64: 1>, scalar_prefetch = 0 : i64, scratch_operands = 0 : i64, tpu.core_type = #tpu.core_type<tc>, window_params = [{transform_indices = @transform_0, window_bounds = array<i64: 2, 32, 64>}, {pipeline_mode = #tpu.pipeline_mode<synchronous>, transform_indices = @transform_1, window_bounds = array<i64: 32, 32>}, {pipeline_mode = #tpu.pipeline_mode<synchronous>, transform_indices = @transform_2, window_bounds = array<i64: 32, 32>}, {pipeline_mode = #tpu.pipeline_mode<synchronous>, transform_indices = @transform_3, window_bounds = array<i64: 32, 32>}, {pipeline_mode = #tpu.pipeline_mode<synchronous>, transform_indices = @transform_4, window_bounds = array<i64: 32, 32>}, {pipeline_mode = #tpu.pipeline_mode<synchronous>, transform_indices = @transform_5, window_bounds = array<i64: 1, 32>}, {pipeline_mode = #tpu.pipeline_mode<synchronous>, transform_indices = @transform_6, window_bounds = array<i64: 1, 32>}, {pipeline_mode = #tpu.pipeline_mode<synchronous>, transform_indices = @transform_7, window_bounds = array<i64: 1, 32>}, {pipeline_mode = #tpu.pipeline_mode<synchronous>, transform_indices = @transform_8, window_bounds = array<i64: 32, 32>}, {pipeline_mode = #tpu.pipeline_mode<synchronous>, transform_indices = @transform_9, window_bounds = array<i64: 1, 32>}, {transform_indices = @transform_10, window_bounds = array<i64: 2, 32, 64>}]} {
    %c0 = arith.constant 0 : index
    %c0_0 = arith.constant 0 : index
    %0 = vector.load %arg2[%c0, %c0_0] : memref<32x32xf32, #tpu.memory_space<vmem>>, vector<32x32xf32>
    %c0_1 = arith.constant 0 : index
    %c0_2 = arith.constant 0 : index
    %1 = vector.load %arg3[%c0_1, %c0_2] : memref<32x32xbf16, #tpu.memory_space<vmem>>, vector<32x32xbf16>
    %c0_3 = arith.constant 0 : index
    %c0_4 = arith.constant 0 : index
    %2 = vector.load %arg4[%c0_3, %c0_4] : memref<32x32xbf16, #tpu.memory_space<vmem>>, vector<32x32xbf16>
    %c0_5 = arith.constant 0 : index
    %c0_6 = arith.constant 0 : index
    %3 = vector.load %arg5[%c0_5, %c0_6] : memref<32x32xbf16, #tpu.memory_space<vmem>>, vector<32x32xbf16>
    %c0_7 = arith.constant 0 : index
    %c0_8 = arith.constant 0 : index
    %4 = vector.load %arg9[%c0_7, %c0_8] : memref<32x32xbf16, #tpu.memory_space<vmem>>, vector<32x32xbf16>
    %c0_9 = arith.constant 0 : index
    %c0_10 = arith.constant 0 : index
    %5 = vector.load %arg6[%c0_9, %c0_10] : memref<1x32xf32, #tpu.memory_space<vmem>>, vector<1x32xf32>
    %c0_11 = arith.constant 0 : index
    %c0_12 = arith.constant 0 : index
    %6 = vector.load %arg7[%c0_11, %c0_12] : memref<1x32xf32, #tpu.memory_space<vmem>>, vector<1x32xf32>
    %c0_13 = arith.constant 0 : index
    %c0_14 = arith.constant 0 : index
    %7 = vector.load %arg8[%c0_13, %c0_14] : memref<1x32xf32, #tpu.memory_space<vmem>>, vector<1x32xf32>
    %c0_15 = arith.constant 0 : index
    %c0_16 = arith.constant 0 : index
    %8 = vector.load %arg10[%c0_15, %c0_16] : memref<1x32xf32, #tpu.memory_space<vmem>>, vector<1x32xf32>
    %c0_17 = arith.constant 0 : index
    %c0_18 = arith.constant 0 : index
    %c0_19 = arith.constant 0 : index
    %9 = vector.load %arg1[%c0_17, %c0_18, %c0_19] : memref<2x32x64xf32, #tpu.memory_space<vmem>>, vector<1x32x64xf32>
    %10 = vector.shape_cast %9 : vector<1x32x64xf32> to vector<32x64xf32>
    %11 = tpu.transpose %10, [1, 0] : vector<32x64xf32> -> vector<64x32xf32>
    %cst = arith.constant dense<0.000000e+00> : vector<32xf32>
    %12 = vector.multi_reduction <add>, %11, %cst [0] : vector<64x32xf32> to vector<32xf32>
    %13 = vector.shape_cast %12 : vector<32xf32> to vector<1x32xf32>
    %cst_20 = arith.constant dense<0.000000e+00> : vector<1x32xf32>
    %14 = tpu.matmul %13, %0, %cst_20 {dimension_numbers = #tpu.dot_dimension_numbers<[1], [0], [0], [1], [0, 0, 1, 1], [], []>} : vector<1x32xf32>, vector<32x32xf32>, vector<1x32xf32> -> vector<1x32xf32>
    %15 = vector.broadcast %14 : vector<1x32xf32> to vector<64x32xf32>
    %16 = arith.subf %11, %15 : vector<64x32xf32>
    %17 = arith.mulf %16, %16 : vector<64x32xf32>
    %cst_21 = arith.constant dense<0.000000e+00> : vector<32xf32>
    %18 = vector.multi_reduction <add>, %17, %cst_21 [0] : vector<64x32xf32> to vector<32xf32>
    %19 = vector.shape_cast %18 : vector<32xf32> to vector<1x32xf32>
    %cst_22 = arith.constant dense<0.000000e+00> : vector<1x32xf32>
    %20 = tpu.matmul %19, %0, %cst_22 {dimension_numbers = #tpu.dot_dimension_numbers<[1], [0], [0], [1], [0, 0, 1, 1], [], []>} : vector<1x32xf32>, vector<32x32xf32>, vector<1x32xf32> -> vector<1x32xf32>
    %cst_23 = arith.constant 9.99999974E-6 : f32
    %21 = vector.broadcast %cst_23 : f32 to vector<1x32xf32>
    %22 = arith.addf %20, %21 : vector<1x32xf32>
    %23 = math.rsqrt %22 : vector<1x32xf32>
    %24 = vector.broadcast %23 : vector<1x32xf32> to vector<64x32xf32>
    %25 = arith.mulf %16, %24 : vector<64x32xf32>
    %c1 = arith.constant 1 : index
    %c0_24 = arith.constant 0 : index
    %c0_25 = arith.constant 0 : index
    %26 = vector.load %arg1[%c1, %c0_24, %c0_25] : memref<2x32x64xf32, #tpu.memory_space<vmem>>, vector<1x32x64xf32>
    %27 = vector.shape_cast %26 : vector<1x32x64xf32> to vector<32x64xf32>
    %28 = tpu.transpose %27, [1, 0] : vector<32x64xf32> -> vector<64x32xf32>
    %cst_26 = arith.constant dense<0.000000e+00> : vector<32xf32>
    %29 = vector.multi_reduction <add>, %28, %cst_26 [0] : vector<64x32xf32> to vector<32xf32>
    %30 = vector.shape_cast %29 : vector<32xf32> to vector<1x32xf32>
    %cst_27 = arith.constant dense<0.000000e+00> : vector<1x32xf32>
    %31 = tpu.matmul %30, %0, %cst_27 {dimension_numbers = #tpu.dot_dimension_numbers<[1], [0], [0], [1], [0, 0, 1, 1], [], []>} : vector<1x32xf32>, vector<32x32xf32>, vector<1x32xf32> -> vector<1x32xf32>
    %32 = vector.broadcast %31 : vector<1x32xf32> to vector<64x32xf32>
    %33 = arith.subf %28, %32 : vector<64x32xf32>
    %34 = arith.mulf %33, %33 : vector<64x32xf32>
    %cst_28 = arith.constant dense<0.000000e+00> : vector<32xf32>
    %35 = vector.multi_reduction <add>, %34, %cst_28 [0] : vector<64x32xf32> to vector<32xf32>
    %36 = vector.shape_cast %35 : vector<32xf32> to vector<1x32xf32>
    %cst_29 = arith.constant dense<0.000000e+00> : vector<1x32xf32>
    %37 = tpu.matmul %36, %0, %cst_29 {dimension_numbers = #tpu.dot_dimension_numbers<[1], [0], [0], [1], [0, 0, 1, 1], [], []>} : vector<1x32xf32>, vector<32x32xf32>, vector<1x32xf32> -> vector<1x32xf32>
    %cst_30 = arith.constant 9.99999974E-6 : f32
    %38 = vector.broadcast %cst_30 : f32 to vector<1x32xf32>
    %39 = arith.addf %37, %38 : vector<1x32xf32>
    %40 = math.rsqrt %39 : vector<1x32xf32>
    %41 = vector.broadcast %40 : vector<1x32xf32> to vector<64x32xf32>
    %42 = arith.mulf %33, %41 : vector<64x32xf32>
    %43 = tpu.concatenate %25, %42 in 0 : vector<64x32xf32>, vector<64x32xf32> -> vector<128x32xf32>
    %44 = arith.truncf %43 : vector<128x32xf32> to vector<128x32xbf16>
    %cst_31 = arith.constant dense<0.000000e+00> : vector<128x32xf32>
    %45 = tpu.matmul %44, %1, %cst_31 {dimension_numbers = #tpu.dot_dimension_numbers<[1], [0], [0], [1], [0, 0, 1, 1], [], []>} : vector<128x32xbf16>, vector<32x32xbf16>, vector<128x32xf32> -> vector<128x32xf32>
    %46 = vector.broadcast %5 : vector<1x32xf32> to vector<128x32xf32>
    %47 = arith.addf %45, %46 : vector<128x32xf32>
    %48 = arith.truncf %47 : vector<128x32xf32> to vector<128x32xbf16>
    %cst_32 = arith.constant dense<0.000000e+00> : vector<128x32xf32>
    %49 = tpu.matmul %44, %2, %cst_32 {dimension_numbers = #tpu.dot_dimension_numbers<[1], [0], [0], [1], [0, 0, 1, 1], [], []>} : vector<128x32xbf16>, vector<32x32xbf16>, vector<128x32xf32> -> vector<128x32xf32>
    %50 = vector.broadcast %6 : vector<1x32xf32> to vector<128x32xf32>
    %51 = arith.addf %49, %50 : vector<128x32xf32>
    %52 = arith.truncf %51 : vector<128x32xf32> to vector<128x32xbf16>
    %cst_33 = arith.constant dense<0.000000e+00> : vector<128x32xf32>
    %53 = tpu.matmul %44, %3, %cst_33 {dimension_numbers = #tpu.dot_dimension_numbers<[1], [0], [0], [1], [0, 0, 1, 1], [], []>} : vector<128x32xbf16>, vector<32x32xbf16>, vector<128x32xf32> -> vector<128x32xf32>
    %54 = vector.broadcast %7 : vector<1x32xf32> to vector<128x32xf32>
    %55 = arith.addf %53, %54 : vector<128x32xf32>
    %56 = arith.truncf %55 : vector<128x32xf32> to vector<128x32xbf16>
    %cst_34 = arith.constant 0.000000e+00 : f32
    %57 = vector.broadcast %cst_34 : f32 to vector<128x32xf32>
    %58 = vector.extract_strided_slice %48 {offsets = [0, 0], sizes = [128, 8], strides = [1, 1]} : vector<128x32xbf16> to vector<128x8xbf16>
    %59 = vector.extract_strided_slice %52 {offsets = [0, 0], sizes = [128, 8], strides = [1, 1]} : vector<128x32xbf16> to vector<128x8xbf16>
    %60 = vector.extract_strided_slice %56 {offsets = [0, 0], sizes = [128, 8], strides = [1, 1]} : vector<128x32xbf16> to vector<128x8xbf16>
    %61 = vector.extract_strided_slice %58 {offsets = [0, 0], sizes = [64, 8], strides = [1, 1]} : vector<128x8xbf16> to vector<64x8xbf16>
    %62 = vector.extract_strided_slice %59 {offsets = [0, 0], sizes = [64, 8], strides = [1, 1]} : vector<128x8xbf16> to vector<64x8xbf16>
    %63 = vector.extract_strided_slice %60 {offsets = [0, 0], sizes = [64, 8], strides = [1, 1]} : vector<128x8xbf16> to vector<64x8xbf16>
    %cst_35 = arith.constant dense<0.000000e+00> : vector<64x64xf32>
    %64 = tpu.matmul %61, %62, %cst_35 {dimension_numbers = #tpu.dot_dimension_numbers<[1], [1], [0], [0], [0, 0, 1, 0], [], []>} : vector<64x8xbf16>, vector<64x8xbf16>, vector<64x64xf32> -> vector<64x64xf32>
    %cst_36 = arith.constant dense<0xFF800000> : vector<64xf32>
    %65 = vector.multi_reduction <maximumf>, %64, %cst_36 [1] : vector<64x64xf32> to vector<64xf32>
    %66 = vector.shape_cast %65 : vector<64xf32> to vector<64x1xf32>
    %67 = vector.broadcast %66 : vector<64x1xf32> to vector<64x64xf32>
    %68 = arith.subf %64, %67 : vector<64x64xf32>
    %69 = math.exp %68 : vector<64x64xf32>
    %cst_37 = arith.constant dense<0.000000e+00> : vector<64xf32>
    %70 = vector.multi_reduction <add>, %69, %cst_37 [1] : vector<64x64xf32> to vector<64xf32>
    %71 = vector.shape_cast %70 : vector<64xf32> to vector<64x1xf32>
    %72 = arith.truncf %69 : vector<64x64xf32> to vector<64x64xbf16>
    %cst_38 = arith.constant dense<0.000000e+00> : vector<64x8xf32>
    %73 = tpu.matmul %72, %63, %cst_38 {dimension_numbers = #tpu.dot_dimension_numbers<[1], [0], [0], [1], [0, 0, 1, 1], [], []>} : vector<64x64xbf16>, vector<64x8xbf16>, vector<64x8xf32> -> vector<64x8xf32>
    %74 = tpu.reciprocal %71 {approx = true} : vector<64x1xf32> -> vector<64x1xf32>
    %75 = vector.broadcast %74 : vector<64x1xf32> to vector<64x8xf32>
    %76 = arith.mulf %73, %75 : vector<64x8xf32>
    %77 = vector.extract_strided_slice %58 {offsets = [64, 0], sizes = [64, 8], strides = [1, 1]} : vector<128x8xbf16> to vector<64x8xbf16>
    %78 = vector.extract_strided_slice %59 {offsets = [64, 0], sizes = [64, 8], strides = [1, 1]} : vector<128x8xbf16> to vector<64x8xbf16>
    %79 = vector.extract_strided_slice %60 {offsets = [64, 0], sizes = [64, 8], strides = [1, 1]} : vector<128x8xbf16> to vector<64x8xbf16>
    %cst_39 = arith.constant dense<0.000000e+00> : vector<64x64xf32>
    %80 = tpu.matmul %77, %78, %cst_39 {dimension_numbers = #tpu.dot_dimension_numbers<[1], [1], [0], [0], [0, 0, 1, 0], [], []>} : vector<64x8xbf16>, vector<64x8xbf16>, vector<64x64xf32> -> vector<64x64xf32>
    %cst_40 = arith.constant dense<0xFF800000> : vector<64xf32>
    %81 = vector.multi_reduction <maximumf>, %80, %cst_40 [1] : vector<64x64xf32> to vector<64xf32>
    %82 = vector.shape_cast %81 : vector<64xf32> to vector<64x1xf32>
    %83 = vector.broadcast %82 : vector<64x1xf32> to vector<64x64xf32>
    %84 = arith.subf %80, %83 : vector<64x64xf32>
    %85 = math.exp %84 : vector<64x64xf32>
    %cst_41 = arith.constant dense<0.000000e+00> : vector<64xf32>
    %86 = vector.multi_reduction <add>, %85, %cst_41 [1] : vector<64x64xf32> to vector<64xf32>
    %87 = vector.shape_cast %86 : vector<64xf32> to vector<64x1xf32>
    %88 = arith.truncf %85 : vector<64x64xf32> to vector<64x64xbf16>
    %cst_42 = arith.constant dense<0.000000e+00> : vector<64x8xf32>
    %89 = tpu.matmul %88, %79, %cst_42 {dimension_numbers = #tpu.dot_dimension_numbers<[1], [0], [0], [1], [0, 0, 1, 1], [], []>} : vector<64x64xbf16>, vector<64x8xbf16>, vector<64x8xf32> -> vector<64x8xf32>
    %90 = tpu.reciprocal %87 {approx = true} : vector<64x1xf32> -> vector<64x1xf32>
    %91 = vector.broadcast %90 : vector<64x1xf32> to vector<64x8xf32>
    %92 = arith.mulf %89, %91 : vector<64x8xf32>
    %93 = tpu.concatenate %76, %92 in 0 : vector<64x8xf32>, vector<64x8xf32> -> vector<128x8xf32>
    %94 = arith.truncf %93 : vector<128x8xf32> to vector<128x8xbf16>
    %95 = vector.extract_strided_slice %4 {offsets = [0, 0], sizes = [8, 32], strides = [1, 1]} : vector<32x32xbf16> to vector<8x32xbf16>
    %cst_43 = arith.constant dense<0.000000e+00> : vector<128x32xf32>
    %96 = tpu.matmul %94, %95, %cst_43 {dimension_numbers = #tpu.dot_dimension_numbers<[1], [0], [0], [1], [0, 0, 1, 1], [], []>} : vector<128x8xbf16>, vector<8x32xbf16>, vector<128x32xf32> -> vector<128x32xf32>
    %97 = arith.addf %57, %96 : vector<128x32xf32>
    %98 = vector.extract_strided_slice %48 {offsets = [0, 8], sizes = [128, 8], strides = [1, 1]} : vector<128x32xbf16> to vector<128x8xbf16>
    %99 = vector.extract_strided_slice %52 {offsets = [0, 8], sizes = [128, 8], strides = [1, 1]} : vector<128x32xbf16> to vector<128x8xbf16>
    %100 = vector.extract_strided_slice %56 {offsets = [0, 8], sizes = [128, 8], strides = [1, 1]} : vector<128x32xbf16> to vector<128x8xbf16>
    %101 = vector.extract_strided_slice %98 {offsets = [0, 0], sizes = [64, 8], strides = [1, 1]} : vector<128x8xbf16> to vector<64x8xbf16>
    %102 = vector.extract_strided_slice %99 {offsets = [0, 0], sizes = [64, 8], strides = [1, 1]} : vector<128x8xbf16> to vector<64x8xbf16>
    %103 = vector.extract_strided_slice %100 {offsets = [0, 0], sizes = [64, 8], strides = [1, 1]} : vector<128x8xbf16> to vector<64x8xbf16>
    %cst_44 = arith.constant dense<0.000000e+00> : vector<64x64xf32>
    %104 = tpu.matmul %101, %102, %cst_44 {dimension_numbers = #tpu.dot_dimension_numbers<[1], [1], [0], [0], [0, 0, 1, 0], [], []>} : vector<64x8xbf16>, vector<64x8xbf16>, vector<64x64xf32> -> vector<64x64xf32>
    %cst_45 = arith.constant dense<0xFF800000> : vector<64xf32>
    %105 = vector.multi_reduction <maximumf>, %104, %cst_45 [1] : vector<64x64xf32> to vector<64xf32>
    %106 = vector.shape_cast %105 : vector<64xf32> to vector<64x1xf32>
    %107 = vector.broadcast %106 : vector<64x1xf32> to vector<64x64xf32>
    %108 = arith.subf %104, %107 : vector<64x64xf32>
    %109 = math.exp %108 : vector<64x64xf32>
    %cst_46 = arith.constant dense<0.000000e+00> : vector<64xf32>
    %110 = vector.multi_reduction <add>, %109, %cst_46 [1] : vector<64x64xf32> to vector<64xf32>
    %111 = vector.shape_cast %110 : vector<64xf32> to vector<64x1xf32>
    %112 = arith.truncf %109 : vector<64x64xf32> to vector<64x64xbf16>
    %cst_47 = arith.constant dense<0.000000e+00> : vector<64x8xf32>
    %113 = tpu.matmul %112, %103, %cst_47 {dimension_numbers = #tpu.dot_dimension_numbers<[1], [0], [0], [1], [0, 0, 1, 1], [], []>} : vector<64x64xbf16>, vector<64x8xbf16>, vector<64x8xf32> -> vector<64x8xf32>
    %114 = tpu.reciprocal %111 {approx = true} : vector<64x1xf32> -> vector<64x1xf32>
    %115 = vector.broadcast %114 : vector<64x1xf32> to vector<64x8xf32>
    %116 = arith.mulf %113, %115 : vector<64x8xf32>
    %117 = vector.extract_strided_slice %98 {offsets = [64, 0], sizes = [64, 8], strides = [1, 1]} : vector<128x8xbf16> to vector<64x8xbf16>
    %118 = vector.extract_strided_slice %99 {offsets = [64, 0], sizes = [64, 8], strides = [1, 1]} : vector<128x8xbf16> to vector<64x8xbf16>
    %119 = vector.extract_strided_slice %100 {offsets = [64, 0], sizes = [64, 8], strides = [1, 1]} : vector<128x8xbf16> to vector<64x8xbf16>
    %cst_48 = arith.constant dense<0.000000e+00> : vector<64x64xf32>
    %120 = tpu.matmul %117, %118, %cst_48 {dimension_numbers = #tpu.dot_dimension_numbers<[1], [1], [0], [0], [0, 0, 1, 0], [], []>} : vector<64x8xbf16>, vector<64x8xbf16>, vector<64x64xf32> -> vector<64x64xf32>
    %cst_49 = arith.constant dense<0xFF800000> : vector<64xf32>
    %121 = vector.multi_reduction <maximumf>, %120, %cst_49 [1] : vector<64x64xf32> to vector<64xf32>
    %122 = vector.shape_cast %121 : vector<64xf32> to vector<64x1xf32>
    %123 = vector.broadcast %122 : vector<64x1xf32> to vector<64x64xf32>
    %124 = arith.subf %120, %123 : vector<64x64xf32>
    %125 = math.exp %124 : vector<64x64xf32>
    %cst_50 = arith.constant dense<0.000000e+00> : vector<64xf32>
    %126 = vector.multi_reduction <add>, %125, %cst_50 [1] : vector<64x64xf32> to vector<64xf32>
    %127 = vector.shape_cast %126 : vector<64xf32> to vector<64x1xf32>
    %128 = arith.truncf %125 : vector<64x64xf32> to vector<64x64xbf16>
    %cst_51 = arith.constant dense<0.000000e+00> : vector<64x8xf32>
    %129 = tpu.matmul %128, %119, %cst_51 {dimension_numbers = #tpu.dot_dimension_numbers<[1], [0], [0], [1], [0, 0, 1, 1], [], []>} : vector<64x64xbf16>, vector<64x8xbf16>, vector<64x8xf32> -> vector<64x8xf32>
    %130 = tpu.reciprocal %127 {approx = true} : vector<64x1xf32> -> vector<64x1xf32>
    %131 = vector.broadcast %130 : vector<64x1xf32> to vector<64x8xf32>
    %132 = arith.mulf %129, %131 : vector<64x8xf32>
    %133 = tpu.concatenate %116, %132 in 0 : vector<64x8xf32>, vector<64x8xf32> -> vector<128x8xf32>
    %134 = arith.truncf %133 : vector<128x8xf32> to vector<128x8xbf16>
    %135 = vector.extract_strided_slice %4 {offsets = [8, 0], sizes = [8, 32], strides = [1, 1]} : vector<32x32xbf16> to vector<8x32xbf16>
    %cst_52 = arith.constant dense<0.000000e+00> : vector<128x32xf32>
    %136 = tpu.matmul %134, %135, %cst_52 {dimension_numbers = #tpu.dot_dimension_numbers<[1], [0], [0], [1], [0, 0, 1, 1], [], []>} : vector<128x8xbf16>, vector<8x32xbf16>, vector<128x32xf32> -> vector<128x32xf32>
    %137 = arith.addf %97, %136 : vector<128x32xf32>
    %138 = vector.extract_strided_slice %48 {offsets = [0, 16], sizes = [128, 8], strides = [1, 1]} : vector<128x32xbf16> to vector<128x8xbf16>
    %139 = vector.extract_strided_slice %52 {offsets = [0, 16], sizes = [128, 8], strides = [1, 1]} : vector<128x32xbf16> to vector<128x8xbf16>
    %140 = vector.extract_strided_slice %56 {offsets = [0, 16], sizes = [128, 8], strides = [1, 1]} : vector<128x32xbf16> to vector<128x8xbf16>
    %141 = vector.extract_strided_slice %138 {offsets = [0, 0], sizes = [64, 8], strides = [1, 1]} : vector<128x8xbf16> to vector<64x8xbf16>
    %142 = vector.extract_strided_slice %139 {offsets = [0, 0], sizes = [64, 8], strides = [1, 1]} : vector<128x8xbf16> to vector<64x8xbf16>
    %143 = vector.extract_strided_slice %140 {offsets = [0, 0], sizes = [64, 8], strides = [1, 1]} : vector<128x8xbf16> to vector<64x8xbf16>
    %cst_53 = arith.constant dense<0.000000e+00> : vector<64x64xf32>
    %144 = tpu.matmul %141, %142, %cst_53 {dimension_numbers = #tpu.dot_dimension_numbers<[1], [1], [0], [0], [0, 0, 1, 0], [], []>} : vector<64x8xbf16>, vector<64x8xbf16>, vector<64x64xf32> -> vector<64x64xf32>
    %cst_54 = arith.constant dense<0xFF800000> : vector<64xf32>
    %145 = vector.multi_reduction <maximumf>, %144, %cst_54 [1] : vector<64x64xf32> to vector<64xf32>
    %146 = vector.shape_cast %145 : vector<64xf32> to vector<64x1xf32>
    %147 = vector.broadcast %146 : vector<64x1xf32> to vector<64x64xf32>
    %148 = arith.subf %144, %147 : vector<64x64xf32>
    %149 = math.exp %148 : vector<64x64xf32>
    %cst_55 = arith.constant dense<0.000000e+00> : vector<64xf32>
    %150 = vector.multi_reduction <add>, %149, %cst_55 [1] : vector<64x64xf32> to vector<64xf32>
    %151 = vector.shape_cast %150 : vector<64xf32> to vector<64x1xf32>
    %152 = arith.truncf %149 : vector<64x64xf32> to vector<64x64xbf16>
    %cst_56 = arith.constant dense<0.000000e+00> : vector<64x8xf32>
    %153 = tpu.matmul %152, %143, %cst_56 {dimension_numbers = #tpu.dot_dimension_numbers<[1], [0], [0], [1], [0, 0, 1, 1], [], []>} : vector<64x64xbf16>, vector<64x8xbf16>, vector<64x8xf32> -> vector<64x8xf32>
    %154 = tpu.reciprocal %151 {approx = true} : vector<64x1xf32> -> vector<64x1xf32>
    %155 = vector.broadcast %154 : vector<64x1xf32> to vector<64x8xf32>
    %156 = arith.mulf %153, %155 : vector<64x8xf32>
    %157 = vector.extract_strided_slice %138 {offsets = [64, 0], sizes = [64, 8], strides = [1, 1]} : vector<128x8xbf16> to vector<64x8xbf16>
    %158 = vector.extract_strided_slice %139 {offsets = [64, 0], sizes = [64, 8], strides = [1, 1]} : vector<128x8xbf16> to vector<64x8xbf16>
    %159 = vector.extract_strided_slice %140 {offsets = [64, 0], sizes = [64, 8], strides = [1, 1]} : vector<128x8xbf16> to vector<64x8xbf16>
    %cst_57 = arith.constant dense<0.000000e+00> : vector<64x64xf32>
    %160 = tpu.matmul %157, %158, %cst_57 {dimension_numbers = #tpu.dot_dimension_numbers<[1], [1], [0], [0], [0, 0, 1, 0], [], []>} : vector<64x8xbf16>, vector<64x8xbf16>, vector<64x64xf32> -> vector<64x64xf32>
    %cst_58 = arith.constant dense<0xFF800000> : vector<64xf32>
    %161 = vector.multi_reduction <maximumf>, %160, %cst_58 [1] : vector<64x64xf32> to vector<64xf32>
    %162 = vector.shape_cast %161 : vector<64xf32> to vector<64x1xf32>
    %163 = vector.broadcast %162 : vector<64x1xf32> to vector<64x64xf32>
    %164 = arith.subf %160, %163 : vector<64x64xf32>
    %165 = math.exp %164 : vector<64x64xf32>
    %cst_59 = arith.constant dense<0.000000e+00> : vector<64xf32>
    %166 = vector.multi_reduction <add>, %165, %cst_59 [1] : vector<64x64xf32> to vector<64xf32>
    %167 = vector.shape_cast %166 : vector<64xf32> to vector<64x1xf32>
    %168 = arith.truncf %165 : vector<64x64xf32> to vector<64x64xbf16>
    %cst_60 = arith.constant dense<0.000000e+00> : vector<64x8xf32>
    %169 = tpu.matmul %168, %159, %cst_60 {dimension_numbers = #tpu.dot_dimension_numbers<[1], [0], [0], [1], [0, 0, 1, 1], [], []>} : vector<64x64xbf16>, vector<64x8xbf16>, vector<64x8xf32> -> vector<64x8xf32>
    %170 = tpu.reciprocal %167 {approx = true} : vector<64x1xf32> -> vector<64x1xf32>
    %171 = vector.broadcast %170 : vector<64x1xf32> to vector<64x8xf32>
    %172 = arith.mulf %169, %171 : vector<64x8xf32>
    %173 = tpu.concatenate %156, %172 in 0 : vector<64x8xf32>, vector<64x8xf32> -> vector<128x8xf32>
    %174 = arith.truncf %173 : vector<128x8xf32> to vector<128x8xbf16>
    %175 = vector.extract_strided_slice %4 {offsets = [16, 0], sizes = [8, 32], strides = [1, 1]} : vector<32x32xbf16> to vector<8x32xbf16>
    %cst_61 = arith.constant dense<0.000000e+00> : vector<128x32xf32>
    %176 = tpu.matmul %174, %175, %cst_61 {dimension_numbers = #tpu.dot_dimension_numbers<[1], [0], [0], [1], [0, 0, 1, 1], [], []>} : vector<128x8xbf16>, vector<8x32xbf16>, vector<128x32xf32> -> vector<128x32xf32>
    %177 = arith.addf %137, %176 : vector<128x32xf32>
    %178 = vector.extract_strided_slice %48 {offsets = [0, 24], sizes = [128, 8], strides = [1, 1]} : vector<128x32xbf16> to vector<128x8xbf16>
    %179 = vector.extract_strided_slice %52 {offsets = [0, 24], sizes = [128, 8], strides = [1, 1]} : vector<128x32xbf16> to vector<128x8xbf16>
    %180 = vector.extract_strided_slice %56 {offsets = [0, 24], sizes = [128, 8], strides = [1, 1]} : vector<128x32xbf16> to vector<128x8xbf16>
    %181 = vector.extract_strided_slice %178 {offsets = [0, 0], sizes = [64, 8], strides = [1, 1]} : vector<128x8xbf16> to vector<64x8xbf16>
    %182 = vector.extract_strided_slice %179 {offsets = [0, 0], sizes = [64, 8], strides = [1, 1]} : vector<128x8xbf16> to vector<64x8xbf16>
    %183 = vector.extract_strided_slice %180 {offsets = [0, 0], sizes = [64, 8], strides = [1, 1]} : vector<128x8xbf16> to vector<64x8xbf16>
    %cst_62 = arith.constant dense<0.000000e+00> : vector<64x64xf32>
    %184 = tpu.matmul %181, %182, %cst_62 {dimension_numbers = #tpu.dot_dimension_numbers<[1], [1], [0], [0], [0, 0, 1, 0], [], []>} : vector<64x8xbf16>, vector<64x8xbf16>, vector<64x64xf32> -> vector<64x64xf32>
    %cst_63 = arith.constant dense<0xFF800000> : vector<64xf32>
    %185 = vector.multi_reduction <maximumf>, %184, %cst_63 [1] : vector<64x64xf32> to vector<64xf32>
    %186 = vector.shape_cast %185 : vector<64xf32> to vector<64x1xf32>
    %187 = vector.broadcast %186 : vector<64x1xf32> to vector<64x64xf32>
    %188 = arith.subf %184, %187 : vector<64x64xf32>
    %189 = math.exp %188 : vector<64x64xf32>
    %cst_64 = arith.constant dense<0.000000e+00> : vector<64xf32>
    %190 = vector.multi_reduction <add>, %189, %cst_64 [1] : vector<64x64xf32> to vector<64xf32>
    %191 = vector.shape_cast %190 : vector<64xf32> to vector<64x1xf32>
    %192 = arith.truncf %189 : vector<64x64xf32> to vector<64x64xbf16>
    %cst_65 = arith.constant dense<0.000000e+00> : vector<64x8xf32>
    %193 = tpu.matmul %192, %183, %cst_65 {dimension_numbers = #tpu.dot_dimension_numbers<[1], [0], [0], [1], [0, 0, 1, 1], [], []>} : vector<64x64xbf16>, vector<64x8xbf16>, vector<64x8xf32> -> vector<64x8xf32>
    %194 = tpu.reciprocal %191 {approx = true} : vector<64x1xf32> -> vector<64x1xf32>
    %195 = vector.broadcast %194 : vector<64x1xf32> to vector<64x8xf32>
    %196 = arith.mulf %193, %195 : vector<64x8xf32>
    %197 = vector.extract_strided_slice %178 {offsets = [64, 0], sizes = [64, 8], strides = [1, 1]} : vector<128x8xbf16> to vector<64x8xbf16>
    %198 = vector.extract_strided_slice %179 {offsets = [64, 0], sizes = [64, 8], strides = [1, 1]} : vector<128x8xbf16> to vector<64x8xbf16>
    %199 = vector.extract_strided_slice %180 {offsets = [64, 0], sizes = [64, 8], strides = [1, 1]} : vector<128x8xbf16> to vector<64x8xbf16>
    %cst_66 = arith.constant dense<0.000000e+00> : vector<64x64xf32>
    %200 = tpu.matmul %197, %198, %cst_66 {dimension_numbers = #tpu.dot_dimension_numbers<[1], [1], [0], [0], [0, 0, 1, 0], [], []>} : vector<64x8xbf16>, vector<64x8xbf16>, vector<64x64xf32> -> vector<64x64xf32>
    %cst_67 = arith.constant dense<0xFF800000> : vector<64xf32>
    %201 = vector.multi_reduction <maximumf>, %200, %cst_67 [1] : vector<64x64xf32> to vector<64xf32>
    %202 = vector.shape_cast %201 : vector<64xf32> to vector<64x1xf32>
    %203 = vector.broadcast %202 : vector<64x1xf32> to vector<64x64xf32>
    %204 = arith.subf %200, %203 : vector<64x64xf32>
    %205 = math.exp %204 : vector<64x64xf32>
    %cst_68 = arith.constant dense<0.000000e+00> : vector<64xf32>
    %206 = vector.multi_reduction <add>, %205, %cst_68 [1] : vector<64x64xf32> to vector<64xf32>
    %207 = vector.shape_cast %206 : vector<64xf32> to vector<64x1xf32>
    %208 = arith.truncf %205 : vector<64x64xf32> to vector<64x64xbf16>
    %cst_69 = arith.constant dense<0.000000e+00> : vector<64x8xf32>
    %209 = tpu.matmul %208, %199, %cst_69 {dimension_numbers = #tpu.dot_dimension_numbers<[1], [0], [0], [1], [0, 0, 1, 1], [], []>} : vector<64x64xbf16>, vector<64x8xbf16>, vector<64x8xf32> -> vector<64x8xf32>
    %210 = tpu.reciprocal %207 {approx = true} : vector<64x1xf32> -> vector<64x1xf32>
    %211 = vector.broadcast %210 : vector<64x1xf32> to vector<64x8xf32>
    %212 = arith.mulf %209, %211 : vector<64x8xf32>
    %213 = tpu.concatenate %196, %212 in 0 : vector<64x8xf32>, vector<64x8xf32> -> vector<128x8xf32>
    %214 = arith.truncf %213 : vector<128x8xf32> to vector<128x8xbf16>
    %215 = vector.extract_strided_slice %4 {offsets = [24, 0], sizes = [8, 32], strides = [1, 1]} : vector<32x32xbf16> to vector<8x32xbf16>
    %cst_70 = arith.constant dense<0.000000e+00> : vector<128x32xf32>
    %216 = tpu.matmul %214, %215, %cst_70 {dimension_numbers = #tpu.dot_dimension_numbers<[1], [0], [0], [1], [0, 0, 1, 1], [], []>} : vector<128x8xbf16>, vector<8x32xbf16>, vector<128x32xf32> -> vector<128x32xf32>
    %217 = arith.addf %177, %216 : vector<128x32xf32>
    %218 = vector.broadcast %8 : vector<1x32xf32> to vector<128x32xf32>
    %219 = arith.addf %217, %218 : vector<128x32xf32>
    %220 = vector.extract_strided_slice %219 {offsets = [0, 0], sizes = [64, 32], strides = [1, 1]} : vector<128x32xf32> to vector<64x32xf32>
    %221 = tpu.transpose %220, [1, 0] : vector<64x32xf32> -> vector<32x64xf32>
    %c0_71 = arith.constant 0 : index
    %c0_72 = arith.constant 0 : index
    %c0_73 = arith.constant 0 : index
    %222 = vector.load %arg11[%c0_71, %c0_72, %c0_73] : memref<2x32x64xf32, #tpu.memory_space<vmem>>, vector<1x32x64xf32>
    %223 = vector.shape_cast %222 : vector<1x32x64xf32> to vector<32x64xf32>
    %224 = vector.shape_cast %221 : vector<32x64xf32> to vector<1x32x64xf32>
    tpu.vector_store %arg11[%c0_71, %c0_72, %c0_73], %224 {strides = array<i32>} : memref<2x32x64xf32, #tpu.memory_space<vmem>>, vector<1x32x64xf32>,
    %225 = vector.extract_strided_slice %219 {offsets = [64, 0], sizes = [64, 32], strides = [1, 1]} : vector<128x32xf32> to vector<64x32xf32>
    %226 = tpu.transpose %225, [1, 0] : vector<64x32xf32> -> vector<32x64xf32>
    %c1_74 = arith.constant 1 : index
    %c0_75 = arith.constant 0 : index
    %c0_76 = arith.constant 0 : index
    %227 = vector.load %arg11[%c1_74, %c0_75, %c0_76] : memref<2x32x64xf32, #tpu.memory_space<vmem>>, vector<1x32x64xf32>
    %228 = vector.shape_cast %227 : vector<1x32x64xf32> to vector<32x64xf32>
    %229 = vector.shape_cast %226 : vector<32x64xf32> to vector<1x32x64xf32>
    tpu.vector_store %arg11[%c1_74, %c0_75, %c0_76], %229 {strides = array<i32>} : memref<2x32x64xf32, #tpu.memory_space<vmem>>, vector<1x32x64xf32>,
    return
  }
  func.func @transform_0(%arg0: i32) -> (i32, i32, i32) {
    %c0_i32 = arith.constant 0 : i32
    %c0_i32_0 = arith.constant 0 : i32
    %c0_i32_1 = arith.constant 0 : i32
    return %arg0, %c0_i32, %c0_i32_0 : i32, i32, i32
  }
  func.func @transform_1(%arg0: i32) -> (i32, i32) {
    %c0_i32 = arith.constant 0 : i32
    %c0_i32_0 = arith.constant 0 : i32
    %c0_i32_1 = arith.constant 0 : i32
    return %c0_i32, %c0_i32_0 : i32, i32
  }
  func.func @transform_2(%arg0: i32) -> (i32, i32) {
    %c0_i32 = arith.constant 0 : i32
    %c0_i32_0 = arith.constant 0 : i32
    %c0_i32_1 = arith.constant 0 : i32
    return %c0_i32, %c0_i32_0 : i32, i32
  }
  func.func @transform_3(%arg0: i32) -> (i32, i32) {
    %c0_i32 = arith.constant 0 : i32
    %c0_i32_0 = arith.constant 0 : i32
    %c0_i32_1 = arith.constant 0 : i32
    return %c0_i32, %c0_i32_0 : i32, i32
  }
  func.func @transform_4(%arg0: i32) -> (i32, i32) {
    %c0_i32 = arith.constant 0 : i32
    %c0_i32_0 = arith.constant 0 : i32
    %c0_i32_1 = arith.constant 0 : i32
    return %c0_i32, %c0_i32_0 : i32, i32
  }
  func.func @transform_5(%arg0: i32) -> (i32, i32) {
    %c0_i32 = arith.constant 0 : i32
    %c0_i32_0 = arith.constant 0 : i32
    %c0_i32_1 = arith.constant 0 : i32
    return %c0_i32, %c0_i32_0 : i32, i32
  }
  func.func @transform_6(%arg0: i32) -> (i32, i32) {
    %c0_i32 = arith.constant 0 : i32
    %c0_i32_0 = arith.constant 0 : i32
    %c0_i32_1 = arith.constant 0 : i32
    return %c0_i32, %c0_i32_0 : i32, i32
  }
  func.func @transform_7(%arg0: i32) -> (i32, i32) {
    %c0_i32 = arith.constant 0 : i32
    %c0_i32_0 = arith.constant 0 : i32
    %c0_i32_1 = arith.constant 0 : i32
    return %c0_i32, %c0_i32_0 : i32, i32
  }
  func.func @transform_8(%arg0: i32) -> (i32, i32) {
    %c0_i32 = arith.constant 0 : i32
    %c0_i32_0 = arith.constant 0 : i32
    %c0_i32_1 = arith.constant 0 : i32
    return %c0_i32, %c0_i32_0 : i32, i32
  }
  func.func @transform_9(%arg0: i32) -> (i32, i32) {
    %c0_i32 = arith.constant 0 : i32
    %c0_i32_0 = arith.constant 0 : i32
    %c0_i32_1 = arith.constant 0 : i32
    return %c0_i32, %c0_i32_0 : i32, i32
  }
  func.func @transform_10(%arg0: i32) -> (i32, i32, i32) {
    %c0_i32 = arith.constant 0 : i32
    %c0_i32_0 = arith.constant 0 : i32
    %c0_i32_1 = arith.constant 0 : i32
    return %arg0, %c0_i32, %c0_i32_0 : i32, i32, i32
  }
}

</mosaic_0001>

<llo_original>
// kernel: tpu_custom_call.1
$region0: #{tpu_custom_call.1}
  #allocation0 [shape = 'u32[]', space=smem, size = 0x4, offset = 0x4, fixed_abs, tag = 'smem constant byte address 0x4 - core index']
  #allocation1 [shape = 'u32[72,128]{1,0:T(1,128)}', space=vmem, size = 0x9000, scoped, tag = 'internal scratch']
  %s0 = inlined_call_operand.hbm [shape: f32[2,32,64], index: 0, kind: input, shape index: {}]
  %s1 = inlined_call_operand.hbm [shape: f32[32,32], index: 1, kind: input, shape index: {}]
  %s2 = inlined_call_operand.hbm [shape: bf16[32,32], index: 2, kind: input, shape index: {}]
  %s3 = inlined_call_operand.hbm [shape: bf16[32,32], index: 3, kind: input, shape index: {}]
  %s4 = inlined_call_operand.hbm [shape: bf16[32,32], index: 4, kind: input, shape index: {}]
  %s5 = inlined_call_operand.vmem [shape: f32[1,32], index: 5, kind: input, shape index: {}]
  %s6 = inlined_call_operand.vmem [shape: f32[1,32], index: 6, kind: input, shape index: {}]
  %s7 = inlined_call_operand.vmem [shape: f32[1,32], index: 7, kind: input, shape index: {}]
  %s8 = inlined_call_operand.hbm [shape: bf16[32,32], index: 8, kind: input, shape index: {}]
  %s9 = inlined_call_operand.vmem [shape: f32[1,32], index: 9, kind: input, shape index: {}]
  %s10 = inlined_call_operand.hbm [shape: f32[2,32,64], index: 10, kind: output, shape index: {}]
  %s11 = sld [smem:[#allocation0]]
  $region74: #{tpu_custom_call.1} parent=0
    _
  %s13 = ssub.s32 1, %s11
  %s14 = scalar_select 0, %s13, %s11
  $region1: #{tpu_custom_call.1} parent=0
    #allocation2 [shape = 'u8[32768]{0}', space=vmem, size = 0x8000, scoped, tag = 'input window, operand 0, single buffered']
    #allocation3 [shape = 's32[1]{0}', space=sflag, size = 0x4, scoped, tag = 'scoped memory for tpu_custom_call.1']
    #allocation4 [shape = 's32[1]{0}', space=sflag, size = 0x4, scoped, tag = 'scoped memory for tpu_custom_call.1']
    #allocation5 [shape = 'u8[16384]{0}', space=vmem, size = 0x4000, scoped, tag = 'input window, operand 1, single buffered']
    #allocation6 [shape = 's32[1]{0}', space=sflag, size = 0x4, scoped, tag = 'scoped memory for tpu_custom_call.1']
    #allocation7 [shape = 'u8[8192]{0}', space=vmem, size = 0x2000, scoped, tag = 'input window, operand 2, single buffered']
    #allocation8 [shape = 'u8[8192]{0}', space=vmem, size = 0x2000, scoped, tag = 'input window, operand 3, single buffered']
    #allocation9 [shape = 's32[1]{0}', space=sflag, size = 0x4, scoped, tag = 'scoped memory for tpu_custom_call.1']
    #allocation10 [shape = 'u8[8192]{0}', space=vmem, size = 0x2000, scoped, tag = 'input window, operand 4, single buffered']
    #allocation11 [shape = 'u8[8192]{0}', space=vmem, size = 0x2000, scoped, tag = 'input window, operand 8, single buffered']
    #allocation12 [shape = 's32[1]{0}', space=sflag, size = 0x4, scoped, tag = 'scoped memory for tpu_custom_call.1']
    #allocation13 [shape = 'u8[32768]{0}', space=vmem, size = 0x8000, scoped, tag = 'output window, operand 0, single buffered']
    %15 = vsyncpa [#allocation3], 0
    %16 = vsyncpa [#allocation6], 0
    %17 = vsyncpa [#allocation9], 0
    %18 = vsyncpa [#allocation12], 0
    %19 = vsyncpa [#allocation4], 0
    // Predicated region
    $region2: #{tpu_custom_call.1} parent=1 // pred_check
      _
    $region3: #{tpu_custom_call.1} parent=1 // pred_check_branch
      %21 = sbr.rel (0) target = $region5
    $region4: #{tpu_custom_call.1} parent=1 // pred_region
      %23 = vsyncadd [#allocation3], 0
      %s24 = sshll.u32 %s0, 4
      %s25 = int_to_ptr.hbm [resolvable:$true] %s24
      %s26 = sshll.u32 [#allocation2], 4
      %s27 = int_to_ptr.vmem [resolvable:$true] %s26
      %32 = dma.hbm_to_vmem [thread:$0]  %s25, 1024, %s27, [#allocation3], 128, 128, 8
    $region5: #{tpu_custom_call.1} parent=1 // pred_fallthru
      _
    // Predicated region
    $region6: #{tpu_custom_call.1} parent=1 // pred_check
      _
    $region7: #{tpu_custom_call.1} parent=1 // pred_check_branch
      %34 = sbr.rel (0) target = $region9
    $region8: #{tpu_custom_call.1} parent=1 // pred_region
      %36 = vsyncadd [#allocation6], 0
      %s37 = sshll.u32 %s1, 4
      %s38 = int_to_ptr.hbm [resolvable:$true] %s37
      %s39 = sshll.u32 [#allocation5], 4
      %s40 = int_to_ptr.vmem [resolvable:$true] %s39
      %45 = dma.hbm_to_vmem [thread:$0]  %s38, 512, %s40, [#allocation6], 128, 128, 8
    $region9: #{tpu_custom_call.1} parent=1 // pred_fallthru
      _
    // Predicated region
    $region10: #{tpu_custom_call.1} parent=1 // pred_check
      _
    $region11: #{tpu_custom_call.1} parent=1 // pred_check_branch
      %47 = sbr.rel (0) target = $region13
    $region12: #{tpu_custom_call.1} parent=1 // pred_region
      %49 = vsyncadd [#allocation6], 0
      %s50 = sshll.u32 %s2, 4
      %s51 = int_to_ptr.hbm [resolvable:$true] %s50
      %s52 = sshll.u32 [#allocation7], 4
      %s53 = int_to_ptr.vmem [resolvable:$true] %s52
      %58 = dma.hbm_to_vmem [thread:$0]  %s51, 256, %s53, [#allocation6], 64, 64, 4
    $region13: #{tpu_custom_call.1} parent=1 // pred_fallthru
      _
    // Predicated region
    $region14: #{tpu_custom_call.1} parent=1 // pred_check
      _
    $region15: #{tpu_custom_call.1} parent=1 // pred_check_branch
      %60 = sbr.rel (0) target = $region17
    $region16: #{tpu_custom_call.1} parent=1 // pred_region
      %62 = vsyncadd [#allocation9], 0
      %s63 = sshll.u32 %s3, 4
      %s64 = int_to_ptr.hbm [resolvable:$true] %s63
      %s65 = sshll.u32 [#allocation8], 4
      %s66 = int_to_ptr.vmem [resolvable:$true] %s65
      %71 = dma.hbm_to_vmem [thread:$0]  %s64, 256, %s66, [#allocation9], 64, 64, 4
    $region17: #{tpu_custom_call.1} parent=1 // pred_fallthru
      _
    // Predicated region
    $region18: #{tpu_custom_call.1} parent=1 // pred_check
      _
    $region19: #{tpu_custom_call.1} parent=1 // pred_check_branch
      %73 = sbr.rel (0) target = $region21
    $region20: #{tpu_custom_call.1} parent=1 // pred_region
      %75 = vsyncadd [#allocation9], 0
      %s76 = sshll.u32 %s4, 4
      %s77 = int_to_ptr.hbm [resolvable:$true] %s76
      %s78 = sshll.u32 [#allocation10], 4
      %s79 = int_to_ptr.vmem [resolvable:$true] %s78
      %84 = dma.hbm_to_vmem [thread:$0]  %s77, 256, %s79, [#allocation9], 64, 64, 4
    $region21: #{tpu_custom_call.1} parent=1 // pred_fallthru
      _
    // Predicated region
    $region22: #{tpu_custom_call.1} parent=1 // pred_check
      _
    $region23: #{tpu_custom_call.1} parent=1 // pred_check_branch
      %86 = sbr.rel (0) target = $region25
    $region24: #{tpu_custom_call.1} parent=1 // pred_region
      _
    $region25: #{tpu_custom_call.1} parent=1 // pred_fallthru
      _
    // Predicated region
    $region26: #{tpu_custom_call.1} parent=1 // pred_check
      _
    $region27: #{tpu_custom_call.1} parent=1 // pred_check_branch
      %88 = sbr.rel (0) target = $region29
    $region28: #{tpu_custom_call.1} parent=1 // pred_region
      _
    $region29: #{tpu_custom_call.1} parent=1 // pred_fallthru
      _
    // Predicated region
    $region30: #{tpu_custom_call.1} parent=1 // pred_check
      _
    $region31: #{tpu_custom_call.1} parent=1 // pred_check_branch
      %90 = sbr.rel (0) target = $region33
    $region32: #{tpu_custom_call.1} parent=1 // pred_region
      _
    $region33: #{tpu_custom_call.1} parent=1 // pred_fallthru
      _
    // Predicated region
    $region34: #{tpu_custom_call.1} parent=1 // pred_check
      _
    $region35: #{tpu_custom_call.1} parent=1 // pred_check_branch
      %92 = sbr.rel (0) target = $region37
    $region36: #{tpu_custom_call.1} parent=1 // pred_region
      %94 = vsyncadd [#allocation12], 0
      %s95 = sshll.u32 %s8, 4
      %s96 = int_to_ptr.hbm [resolvable:$true] %s95
      %s97 = sshll.u32 [#allocation11], 4
      %s98 = int_to_ptr.vmem [resolvable:$true] %s97
      %103 = dma.hbm_to_vmem [thread:$0]  %s96, 256, %s98, [#allocation12], 64, 64, 4
    $region37: #{tpu_custom_call.1} parent=1 // pred_fallthru
      _
    // Predicated region
    $region38: #{tpu_custom_call.1} parent=1 // pred_check
      _
    $region39: #{tpu_custom_call.1} parent=1 // pred_check_branch
      %105 = sbr.rel (0) target = $region41
    $region40: #{tpu_custom_call.1} parent=1 // pred_region
      _
    $region41: #{tpu_custom_call.1} parent=1 // pred_fallthru
      _
    // Predicated region
    $region42: #{tpu_custom_call.1} parent=1 // pred_check
      _
    $region43: #{tpu_custom_call.1} parent=1 // pred_check_branch
      %107 = sbr.rel (0) target = $region45
    $region44: #{tpu_custom_call.1} parent=1 // pred_region
      %109 = dma.done [#allocation3], 1024
    $region45: #{tpu_custom_call.1} parent=1 // pred_fallthru
      _
    // Predicated region
    $region46: #{tpu_custom_call.1} parent=1 // pred_check
      _
    $region47: #{tpu_custom_call.1} parent=1 // pred_check_branch
      %111 = sbr.rel (0) target = $region49
    $region48: #{tpu_custom_call.1} parent=1 // pred_region
      %113 = dma.done [#allocation6], 512
    $region49: #{tpu_custom_call.1} parent=1 // pred_fallthru
      _
    // Predicated region
    $region50: #{tpu_custom_call.1} parent=1 // pred_check
      _
    $region51: #{tpu_custom_call.1} parent=1 // pred_check_branch
      %115 = sbr.rel (0) target = $region53
    $region52: #{tpu_custom_call.1} parent=1 // pred_region
      %117 = dma.done [#allocation6], 256
    $region53: #{tpu_custom_call.1} parent=1 // pred_fallthru
      _
    // Predicated region
    $region54: #{tpu_custom_call.1} parent=1 // pred_check
      _
    $region55: #{tpu_custom_call.1} parent=1 // pred_check_branch
      %119 = sbr.rel (0) target = $region57
    $region56: #{tpu_custom_call.1} parent=1 // pred_region
      %121 = dma.done [#allocation9], 256
    $region57: #{tpu_custom_call.1} parent=1 // pred_fallthru
      _
    // Predicated region
    $region58: #{tpu_custom_call.1} parent=1 // pred_check
      _
    $region59: #{tpu_custom_call.1} parent=1 // pred_check_branch
      %123 = sbr.rel (0) target = $region61
    $region60: #{tpu_custom_call.1} parent=1 // pred_region
      %125 = dma.done [#allocation9], 256
    $region61: #{tpu_custom_call.1} parent=1 // pred_fallthru
      _
    // Predicated region
    $region62: #{tpu_custom_call.1} parent=1 // pred_check
      _
    $region63: #{tpu_custom_call.1} parent=1 // pred_check_branch
      %127 = sbr.rel (0) target = $region65
    $region64: #{tpu_custom_call.1} parent=1 // pred_region
      %129 = dma.done [#allocation12], 256
    $region65: #{tpu_custom_call.1} parent=1 // pred_fallthru
      _
    %v131 = vld [vmem:[#allocation5] sm:$0xff]
    %v132 = vld [vmem:[#allocation5 + $0x8] sm:$0xff]
    %v133 = vld [vmem:[#allocation5 + $0x10] sm:$0xff]
    %v134 = vld [vmem:[#allocation5 + $0x18] sm:$0xff]
    %v135 = vld [vmem:[#allocation7] sm:$0xf]
    %v136 = vld [vmem:[#allocation7 + $0x4] sm:$0xf]
    %v137 = vld [vmem:[#allocation7 + $0x8] sm:$0xf]
    %v138 = vld [vmem:[#allocation7 + $0xc] sm:$0xf]
    %v139 = vld [vmem:[#allocation8] sm:$0xf]
    %v140 = vld [vmem:[#allocation8 + $0x4] sm:$0xf]
    %v141 = vld [vmem:[#allocation8 + $0x8] sm:$0xf]
    %v142 = vld [vmem:[#allocation8 + $0xc] sm:$0xf]
    %v143 = vld [vmem:[#allocation10] sm:$0xf]
    %v144 = vld [vmem:[#allocation10 + $0x4] sm:$0xf]
    %v145 = vld [vmem:[#allocation10 + $0x8] sm:$0xf]
    %v146 = vld [vmem:[#allocation10 + $0xc] sm:$0xf]
    %v147 = vld [vmem:[#allocation11] sm:$0xf]
    %v148 = vld [vmem:[#allocation11 + $0x4] sm:$0xf]
    %v149 = vld [vmem:[#allocation11 + $0x8] sm:$0xf]
    %v150 = vld [vmem:[#allocation11 + $0xc] sm:$0xf]
    %v151 = vld [vmem:[%s5] sm:$0x1]
    %v152 = vld [vmem:[%s6] sm:$0x1]
    %v153 = vld [vmem:[%s7] sm:$0x1]
    %v154 = vld [vmem:[%s9] sm:$0x1]
    %v155 = vld [vmem:[#allocation2] sm:$0xff]
    %v156 = vld [vmem:[#allocation2 + $0x8] sm:$0xff]
    %v157 = vld [vmem:[#allocation2 + $0x10] sm:$0xff]
    %v158 = vld [vmem:[#allocation2 + $0x18] sm:$0xff]
    %159 = vxpose.xlu0.b32.start [1/16] %v155, 128
    %160 = vxpose.xlu0.b32.cont [2/16] %v156, 128
    %161 = vxpose.xlu0.b32.cont [3/16] %v157, 128
    %162 = vxpose.xlu0.b32.cont [4/16] %v158, 128
    %163 = vxpose.xlu0.b32.cont [5/16] 0.0, 128
    %164 = vxpose.xlu0.b32.cont [6/16] 0.0, 128
    %165 = vxpose.xlu0.b32.cont [7/16] 0.0, 128
    %166 = vxpose.xlu0.b32.cont [8/16] 0.0, 128
    %167 = vxpose.xlu0.b32.cont [9/16] 0.0, 128
    %168 = vxpose.xlu0.b32.cont [10/16] 0.0, 128
    %169 = vxpose.xlu0.b32.cont [11/16] 0.0, 128
    %170 = vxpose.xlu0.b32.cont [12/16] 0.0, 128
    %171 = vxpose.xlu0.b32.cont [13/16] 0.0, 128
    %172 = vxpose.xlu0.b32.cont [14/16] 0.0, 128
    %173 = vxpose.xlu0.b32.cont [15/16] 0.0, 128
    %174 = vxpose.xlu0.b32.end [16/16] 0.0, 128
    %v175 = vpop.trf.xlu0
    %v176 = vpop.trf.xlu0
    %v177 = vpop.trf.xlu0
    %v178 = vpop.trf.xlu0
    %v179 = vpop.trf.xlu0
    %v180 = vpop.trf.xlu0
    %v181 = vpop.trf.xlu0
    %v182 = vpop.trf.xlu0
    %v183 = vpop.trf.xlu0
    %v184 = vpop.trf.xlu0
    %v185 = vpop.trf.xlu0
    %v186 = vpop.trf.xlu0
    %v187 = vpop.trf.xlu0
    %v188 = vpop.trf.xlu0
    %v189 = vpop.trf.xlu0
    %v190 = vpop.trf.xlu0
    %vm191 = vcmask 261120
    %v192 = vsel %vm191, %v175, 0.0
    %v193 = vsel %vm191, %v176, 0.0
    %v194 = vadd.f32 %v192, %v193
    %v195 = vsel %vm191, %v177, 0.0
    %v196 = vadd.f32 %v194, %v195
    %v197 = vsel %vm191, %v178, 0.0
    %v198 = vadd.f32 %v196, %v197
    %v199 = vsel %vm191, %v179, 0.0
    %v200 = vadd.f32 %v198, %v199
    %v201 = vsel %vm191, %v180, 0.0
    %v202 = vadd.f32 %v200, %v201
    %v203 = vsel %vm191, %v181, 0.0
    %v204 = vadd.f32 %v202, %v203
    %v205 = vsel %vm191, %v182, 0.0
    %v206 = vadd.f32 %v204, %v205
    %v207 = vrot.slane %v206, 4
    %v208 = vadd.f32 %v206, %v207
    %v209 = vrot.slane %v208, 2
    %v210 = vadd.f32 %v208, %v209
    %v211 = vrot.slane %v210, 1
    %v212 = vadd.f32 %v210, %v211
    %v214 = vsel %vm191, %v212, 0
    %216 = vmatpush.msra.mxu0 0.0
    %217 = vmatpush.msra.mxu0 0.0
    %218 = vmatpush.msra.mxu0 0.0
    %219 = vmatpush.msra.mxu0 0.0
    %220 = vmatpush.msra.mxu0 0.0
    %221 = vmatpush.msra.mxu0 0.0
    %222 = vmatpush.msra.mxu0 0.0
    %223 = vmatpush.msra.mxu0 0.0
    %224 = vmatpush.msra.mxu0 0.0
    %225 = vmatpush.msra.mxu0 0.0
    %226 = vmatpush.msra.mxu0 0.0
    %227 = vmatpush.msra.mxu0 0.0
    %228 = vmatpush.msra.mxu0 %v134
    %229 = vmatpush.msra.mxu0 %v133
    %230 = vmatpush.msra.mxu0 %v132
    %231 = vmatpush.msra.mxu0 %v131
    %232 = vmatmul.f32.gmra.mxu0 %v214
    %v233 = vpop.f32.mrf.mxu0
    %v234 = vadd.f32 0.0, %v233
    %235 = vdwg.mxu0
    %v236 = vperm.slane %v234, 0
    %v237 = vsub.f32 %v175, %v236
    %v238 = vsub.f32 %v176, %v236
    %v239 = vsub.f32 %v177, %v236
    %v240 = vsub.f32 %v178, %v236
    %v241 = vsub.f32 %v179, %v236
    %v242 = vsub.f32 %v180, %v236
    %v243 = vsub.f32 %v181, %v236
    %v244 = vsub.f32 %v182, %v236
    %v245 = vmul.f32 %v237, %v237
    %v246 = vmul.f32 %v238, %v238
    %v247 = vmul.f32 %v239, %v239
    %v248 = vmul.f32 %v240, %v240
    %v249 = vmul.f32 %v241, %v241
    %v250 = vmul.f32 %v242, %v242
    %v251 = vmul.f32 %v243, %v243
    %v252 = vmul.f32 %v244, %v244
    %v253 = vsel %vm191, %v245, 0.0
    %v254 = vsel %vm191, %v246, 0.0
    %v255 = vadd.f32 %v253, %v254
    %v256 = vsel %vm191, %v247, 0.0
    %v257 = vadd.f32 %v255, %v256
    %v258 = vsel %vm191, %v248, 0.0
    %v259 = vadd.f32 %v257, %v258
    %v260 = vsel %vm191, %v249, 0.0
    %v261 = vadd.f32 %v259, %v260
    %v262 = vsel %vm191, %v250, 0.0
    %v263 = vadd.f32 %v261, %v262
    %v264 = vsel %vm191, %v251, 0.0
    %v265 = vadd.f32 %v263, %v264
    %v266 = vsel %vm191, %v252, 0.0
    %v267 = vadd.f32 %v265, %v266
    %v268 = vrot.slane %v267, 4
    %v269 = vadd.f32 %v267, %v268
    %v270 = vrot.slane %v269, 2
    %v271 = vadd.f32 %v269, %v270
    %v272 = vrot.slane %v271, 1
    %v273 = vadd.f32 %v271, %v272
    %v275 = vsel %vm191, %v273, 0
    %277 = vmatpush.msra.mxu0 0.0
    %278 = vmatpush.msra.mxu0 0.0
    %279 = vmatpush.msra.mxu0 0.0
    %280 = vmatpush.msra.mxu0 0.0
    %281 = vmatpush.msra.mxu0 0.0
    %282 = vmatpush.msra.mxu0 0.0
    %283 = vmatpush.msra.mxu0 0.0
    %284 = vmatpush.msra.mxu0 0.0
    %285 = vmatpush.msra.mxu0 0.0
    %286 = vmatpush.msra.mxu0 0.0
    %287 = vmatpush.msra.mxu0 0.0
    %288 = vmatpush.msra.mxu0 0.0
    %289 = vmatpush.msra.mxu0 %v134
    %290 = vmatpush.msra.mxu0 %v133
    %291 = vmatpush.msra.mxu0 %v132
    %292 = vmatpush.msra.mxu0 %v131
    %293 = vmatmul.f32.gmra.mxu0 %v275
    %v294 = vpop.f32.mrf.mxu0
    %v295 = vadd.f32 1e-05, %v294
    %296 = vdwg.mxu0
    %v297 = vrsqrt.pop %v295
    %v298 = vmul.f32 %v297, %v295
    %v299 = vmul.f32 %v298, %v297
    %v300 = vmul.f32 0.5, %v299
    %v301 = vsub.f32 1.5, %v300
    %v302 = vmul.f32 %v297, %v301
    %vm303 = vweird.f32 %v295
    %vm304 = vweird.f32 %v297
    %vm305 = vmor %vm303, %vm304
    %v306 = vsel %vm305, %v297, %v302
    %v307 = vperm.slane %v306, 0
    %v308 = vmul.f32 %v237, %v307
    %v309 = vmul.f32 %v238, %v307
    %v310 = vmul.f32 %v239, %v307
    %v311 = vmul.f32 %v240, %v307
    %v312 = vmul.f32 %v241, %v307
    %v313 = vmul.f32 %v242, %v307
    %v314 = vmul.f32 %v243, %v307
    %v315 = vmul.f32 %v244, %v307
    %s316 = scalar_lea.vmem [#allocation2], 32
    %v317 = vld [vmem:[%s316] sm:$0xff]
    %v318 = vld [vmem:[%s316 + $0x8] sm:$0xff]
    %v319 = vld [vmem:[%s316 + $0x10] sm:$0xff]
    %v320 = vld [vmem:[%s316 + $0x18] sm:$0xff]
    %321 = vxpose.xlu0.b32.start [1/16] %v317, 128
    %322 = vxpose.xlu0.b32.cont [2/16] %v318, 128
    %323 = vxpose.xlu0.b32.cont [3/16] %v319, 128
    %324 = vxpose.xlu0.b32.cont [4/16] %v320, 128
    %325 = vxpose.xlu0.b32.cont [5/16] 0.0, 128
    %326 = vxpose.xlu0.b32.cont [6/16] 0.0, 128
    %327 = vxpose.xlu0.b32.cont [7/16] 0.0, 128
    %328 = vxpose.xlu0.b32.cont [8/16] 0.0, 128
    %329 = vxpose.xlu0.b32.cont [9/16] 0.0, 128
    %330 = vxpose.xlu0.b32.cont [10/16] 0.0, 128
    %331 = vxpose.xlu0.b32.cont [11/16] 0.0, 128
    %332 = vxpose.xlu0.b32.cont [12/16] 0.0, 128
    %333 = vxpose.xlu0.b32.cont [13/16] 0.0, 128
    %334 = vxpose.xlu0.b32.cont [14/16] 0.0, 128
    %335 = vxpose.xlu0.b32.cont [15/16] 0.0, 128
    %336 = vxpose.xlu0.b32.end [16/16] 0.0, 128
    %v337 = vpop.trf.xlu0
    %v338 = vpop.trf.xlu0
    %v339 = vpop.trf.xlu0
    %v340 = vpop.trf.xlu0
    %v341 = vpop.trf.xlu0
    %v342 = vpop.trf.xlu0
    %v343 = vpop.trf.xlu0
    %v344 = vpop.trf.xlu0
    %v345 = vpop.trf.xlu0
    %v346 = vpop.trf.xlu0
    %v347 = vpop.trf.xlu0
    %v348 = vpop.trf.xlu0
    %v349 = vpop.trf.xlu0
    %v350 = vpop.trf.xlu0
    %v351 = vpop.trf.xlu0
    %v352 = vpop.trf.xlu0
    %v353 = vsel %vm191, %v337, 0.0
    %v354 = vsel %vm191, %v338, 0.0
    %v355 = vadd.f32 %v353, %v354
    %v356 = vsel %vm191, %v339, 0.0
    %v357 = vadd.f32 %v355, %v356
    %v358 = vsel %vm191, %v340, 0.0
    %v359 = vadd.f32 %v357, %v358
    %v360 = vsel %vm191, %v341, 0.0
    %v361 = vadd.f32 %v359, %v360
    %v362 = vsel %vm191, %v342, 0.0
    %v363 = vadd.f32 %v361, %v362
    %v364 = vsel %vm191, %v343, 0.0
    %v365 = vadd.f32 %v363, %v364
    %v366 = vsel %vm191, %v344, 0.0
    %v367 = vadd.f32 %v365, %v366
    %v368 = vrot.slane %v367, 4
    %v369 = vadd.f32 %v367, %v368
    %v370 = vrot.slane %v369, 2
    %v371 = vadd.f32 %v369, %v370
    %v372 = vrot.slane %v371, 1
    %v373 = vadd.f32 %v371, %v372
    %v375 = vsel %vm191, %v373, 0
    %377 = vmatpush.msra.mxu0 0.0
    %378 = vmatpush.msra.mxu0 0.0
    %379 = vmatpush.msra.mxu0 0.0
    %380 = vmatpush.msra.mxu0 0.0
    %381 = vmatpush.msra.mxu0 0.0
    %382 = vmatpush.msra.mxu0 0.0
    %383 = vmatpush.msra.mxu0 0.0
    %384 = vmatpush.msra.mxu0 0.0
    %385 = vmatpush.msra.mxu0 0.0
    %386 = vmatpush.msra.mxu0 0.0
    %387 = vmatpush.msra.mxu0 0.0
    %388 = vmatpush.msra.mxu0 0.0
    %389 = vmatpush.msra.mxu0 %v134
    %390 = vmatpush.msra.mxu0 %v133
    %391 = vmatpush.msra.mxu0 %v132
    %392 = vmatpush.msra.mxu0 %v131
    %393 = vmatmul.f32.gmra.mxu0 %v375
    %v394 = vpop.f32.mrf.mxu0
    %v395 = vadd.f32 0.0, %v394
    %396 = vdwg.mxu0
    %v397 = vperm.slane %v395, 0
    %v398 = vsub.f32 %v337, %v397
    %v399 = vsub.f32 %v338, %v397
    %v400 = vsub.f32 %v339, %v397
    %v401 = vsub.f32 %v340, %v397
    %v402 = vsub.f32 %v341, %v397
    %v403 = vsub.f32 %v342, %v397
    %v404 = vsub.f32 %v343, %v397
    %v405 = vsub.f32 %v344, %v397
    %v406 = vmul.f32 %v398, %v398
    %v407 = vmul.f32 %v399, %v399
    %v408 = vmul.f32 %v400, %v400
    %v409 = vmul.f32 %v401, %v401
    %v410 = vmul.f32 %v402, %v402
    %v411 = vmul.f32 %v403, %v403
    %v412 = vmul.f32 %v404, %v404
    %v413 = vmul.f32 %v405, %v405
    %v414 = vsel %vm191, %v406, 0.0
    %v415 = vsel %vm191, %v407, 0.0
    %v416 = vadd.f32 %v414, %v415
    %v417 = vsel %vm191, %v408, 0.0
    %v418 = vadd.f32 %v416, %v417
    %v419 = vsel %vm191, %v409, 0.0
    %v420 = vadd.f32 %v418, %v419
    %v421 = vsel %vm191, %v410, 0.0
    %v422 = vadd.f32 %v420, %v421
    %v423 = vsel %vm191, %v411, 0.0
    %v424 = vadd.f32 %v422, %v423
    %v425 = vsel %vm191, %v412, 0.0
    %v426 = vadd.f32 %v424, %v425
    %v427 = vsel %vm191, %v413, 0.0
    %v428 = vadd.f32 %v426, %v427
    %v429 = vrot.slane %v428, 4
    %v430 = vadd.f32 %v428, %v429
    %v431 = vrot.slane %v430, 2
    %v432 = vadd.f32 %v430, %v431
    %v433 = vrot.slane %v432, 1
    %v434 = vadd.f32 %v432, %v433
    %v436 = vsel %vm191, %v434, 0
    %438 = vmatpush.msra.mxu0 0.0
    %439 = vmatpush.msra.mxu0 0.0
    %440 = vmatpush.msra.mxu0 0.0
    %441 = vmatpush.msra.mxu0 0.0
    %442 = vmatpush.msra.mxu0 0.0
    %443 = vmatpush.msra.mxu0 0.0
    %444 = vmatpush.msra.mxu0 0.0
    %445 = vmatpush.msra.mxu0 0.0
    %446 = vmatpush.msra.mxu0 0.0
    %447 = vmatpush.msra.mxu0 0.0
    %448 = vmatpush.msra.mxu0 0.0
    %449 = vmatpush.msra.mxu0 0.0
    %450 = vmatpush.msra.mxu0 %v134
    %451 = vmatpush.msra.mxu0 %v133
    %452 = vmatpush.msra.mxu0 %v132
    %453 = vmatpush.msra.mxu0 %v131
    %454 = vmatmul.f32.gmra.mxu0 %v436
    %v455 = vpop.f32.mrf.mxu0
    %v456 = vadd.f32 1e-05, %v455
    %457 = vdwg.mxu0
    %v458 = vrsqrt.pop %v456
    %v459 = vmul.f32 %v458, %v456
    %v460 = vmul.f32 %v459, %v458
    %v461 = vmul.f32 0.5, %v460
    %v462 = vsub.f32 1.5, %v461
    %v463 = vmul.f32 %v458, %v462
    %vm464 = vweird.f32 %v456
    %vm465 = vweird.f32 %v458
    %vm466 = vmor %vm464, %vm465
    %v467 = vsel %vm466, %v458, %v463
    %v468 = vperm.slane %v467, 0
    %v469 = vmul.f32 %v398, %v468
    %v470 = vmul.f32 %v399, %v468
    %v471 = vmul.f32 %v400, %v468
    %v472 = vmul.f32 %v401, %v468
    %v473 = vmul.f32 %v402, %v468
    %v474 = vmul.f32 %v403, %v468
    %v475 = vmul.f32 %v404, %v468
    %v476 = vmul.f32 %v405, %v468
    %v477 = vpack.c.bf16 %v309, %v308
    %v478 = vpack.c.bf16 %v311, %v310
    %v479 = vpack.c.bf16 %v313, %v312
    %v480 = vpack.c.bf16 %v315, %v314
    %v481 = vpack.c.bf16 %v470, %v469
    %v482 = vpack.c.bf16 %v472, %v471
    %v483 = vpack.c.bf16 %v474, %v473
    %v484 = vpack.c.bf16 %v476, %v475
    %v486 = vperm.slane %v151, 0
    %v492 = vunpack.c.l.b16 %v135
    %v493 = vunpack.c.l.b16 %v136
    %v494 = vunpack.c.l.b16 %v137
    %v495 = vunpack.c.l.b16 %v138
    %v496 = vpack.c.b16 %v493, %v492
    %v497 = vpack.c.b16 %v495, %v494
    %v501 = vsel %vm191, %v477, 0
    %v504 = vsel %vm191, %v478, 0
    %v507 = vsel %vm191, %v479, 0
    %v510 = vsel %vm191, %v480, 0
    %v513 = vsel %vm191, %v481, 0
    %v516 = vsel %vm191, %v482, 0
    %v519 = vsel %vm191, %v483, 0
    %v522 = vsel %vm191, %v484, 0
    %524 = vmatpush.bf16.msra.mxu0 0
    %525 = vmatpush.bf16.msra.mxu0 0
    %526 = vmatpush.bf16.msra.mxu0 0
    %527 = vmatpush.bf16.msra.mxu0 0
    %528 = vmatpush.bf16.msra.mxu0 0
    %529 = vmatpush.bf16.msra.mxu0 0
    %530 = vmatpush.bf16.msra.mxu0 %v497
    %531 = vmatpush.bf16.msra.mxu0 %v496
    %532 = vmatmul.bf16.gmra.mxu0 %v501
    %v533 = vpop.f32.mrf.mxu0
    %v534 = vadd.f32 %v486, %v533
    %v535 = vpop.f32.mrf.mxu0
    %v536 = vadd.f32 %v486, %v535
    %537 = vmatmul.bf16.gmra.mxu0 %v504
    %v538 = vpop.f32.mrf.mxu0
    %v539 = vadd.f32 %v486, %v538
    %v540 = vpop.f32.mrf.mxu0
    %v541 = vadd.f32 %v486, %v540
    %542 = vmatmul.bf16.gmra.mxu0 %v507
    %v543 = vpop.f32.mrf.mxu0
    %v544 = vadd.f32 %v486, %v543
    %v545 = vpop.f32.mrf.mxu0
    %v546 = vadd.f32 %v486, %v545
    %547 = vmatmul.bf16.gmra.mxu0 %v510
    %v548 = vpop.f32.mrf.mxu0
    %v549 = vadd.f32 %v486, %v548
    %v550 = vpop.f32.mrf.mxu0
    %v551 = vadd.f32 %v486, %v550
    %552 = vmatmul.bf16.gmra.mxu0 %v513
    %v553 = vpop.f32.mrf.mxu0
    %v554 = vadd.f32 %v486, %v553
    %v555 = vpop.f32.mrf.mxu0
    %v556 = vadd.f32 %v486, %v555
    %557 = vmatmul.bf16.gmra.mxu0 %v516
    %v558 = vpop.f32.mrf.mxu0
    %v559 = vadd.f32 %v486, %v558
    %v560 = vpop.f32.mrf.mxu0
    %v561 = vadd.f32 %v486, %v560
    %562 = vmatmul.bf16.gmra.mxu0 %v519
    %v563 = vpop.f32.mrf.mxu0
    %v564 = vadd.f32 %v486, %v563
    %v565 = vpop.f32.mrf.mxu0
    %v566 = vadd.f32 %v486, %v565
    %567 = vmatmul.bf16.gmra.mxu0 %v522
    %v568 = vpop.f32.mrf.mxu0
    %v569 = vadd.f32 %v486, %v568
    %v570 = vpop.f32.mrf.mxu0
    %v571 = vadd.f32 %v486, %v570
    %572 = vdwg.mxu0
    %v573 = vpack.c.bf16 %v534, %v534
    %v574 = vpack.c.bf16 %v536, %v536
    %v575 = vpack.c.bf16 %v539, %v539
    %v576 = vpack.c.bf16 %v541, %v541
    %v577 = vpack.c.bf16 %v544, %v544
    %v578 = vpack.c.bf16 %v546, %v546
    %v579 = vpack.c.bf16 %v549, %v549
    %v580 = vpack.c.bf16 %v551, %v551
    %v581 = vpack.c.bf16 %v554, %v554
    %v582 = vpack.c.bf16 %v556, %v556
    %v583 = vpack.c.bf16 %v559, %v559
    %v584 = vpack.c.bf16 %v561, %v561
    %v585 = vpack.c.bf16 %v564, %v564
    %v586 = vpack.c.bf16 %v566, %v566
    %v587 = vpack.c.bf16 %v569, %v569
    %v588 = vpack.c.bf16 %v571, %v571
    %v590 = vperm.slane %v152, 0
    %v596 = vunpack.c.l.b16 %v139
    %v597 = vunpack.c.l.b16 %v140
    %v598 = vunpack.c.l.b16 %v141
    %v599 = vunpack.c.l.b16 %v142
    %v600 = vpack.c.b16 %v597, %v596
    %v601 = vpack.c.b16 %v599, %v598
    %604 = vmatpush.bf16.msra.mxu0 0
    %605 = vmatpush.bf16.msra.mxu0 0
    %606 = vmatpush.bf16.msra.mxu0 0
    %607 = vmatpush.bf16.msra.mxu0 0
    %608 = vmatpush.bf16.msra.mxu0 0
    %609 = vmatpush.bf16.msra.mxu0 0
    %610 = vmatpush.bf16.msra.mxu0 %v601
    %611 = vmatpush.bf16.msra.mxu0 %v600
    %612 = vmatmul.bf16.gmra.mxu0 %v501
    %v613 = vpop.f32.mrf.mxu0
    %v614 = vadd.f32 %v590, %v613
    %v615 = vpop.f32.mrf.mxu0
    %v616 = vadd.f32 %v590, %v615
    %617 = vmatmul.bf16.gmra.mxu0 %v504
    %v618 = vpop.f32.mrf.mxu0
    %v619 = vadd.f32 %v590, %v618
    %v620 = vpop.f32.mrf.mxu0
    %v621 = vadd.f32 %v590, %v620
    %622 = vmatmul.bf16.gmra.mxu0 %v507
    %v623 = vpop.f32.mrf.mxu0
    %v624 = vadd.f32 %v590, %v623
    %v625 = vpop.f32.mrf.mxu0
    %v626 = vadd.f32 %v590, %v625
    %627 = vmatmul.bf16.gmra.mxu0 %v510
    %v628 = vpop.f32.mrf.mxu0
    %v629 = vadd.f32 %v590, %v628
    %v630 = vpop.f32.mrf.mxu0
    %v631 = vadd.f32 %v590, %v630
    %632 = vmatmul.bf16.gmra.mxu0 %v513
    %v633 = vpop.f32.mrf.mxu0
    %v634 = vadd.f32 %v590, %v633
    %v635 = vpop.f32.mrf.mxu0
    %v636 = vadd.f32 %v590, %v635
    %637 = vmatmul.bf16.gmra.mxu0 %v516
    %v638 = vpop.f32.mrf.mxu0
    %v639 = vadd.f32 %v590, %v638
    %v640 = vpop.f32.mrf.mxu0
    %v641 = vadd.f32 %v590, %v640
    %642 = vmatmul.bf16.gmra.mxu0 %v519
    %v643 = vpop.f32.mrf.mxu0
    %v644 = vadd.f32 %v590, %v643
    %v645 = vpop.f32.mrf.mxu0
    %v646 = vadd.f32 %v590, %v645
    %647 = vmatmul.bf16.gmra.mxu0 %v522
    %v648 = vpop.f32.mrf.mxu0
    %v649 = vadd.f32 %v590, %v648
    %v650 = vpop.f32.mrf.mxu0
    %v651 = vadd.f32 %v590, %v650
    %652 = vdwg.mxu0
    %v653 = vpack.c.bf16 %v614, %v614
    %v654 = vpack.c.bf16 %v616, %v616
    %v655 = vpack.c.bf16 %v619, %v619
    %v656 = vpack.c.bf16 %v621, %v621
    %v657 = vpack.c.bf16 %v624, %v624
    %v658 = vpack.c.bf16 %v626, %v626
    %v659 = vpack.c.bf16 %v629, %v629
    %v660 = vpack.c.bf16 %v631, %v631
    %v661 = vpack.c.bf16 %v634, %v634
    %v662 = vpack.c.bf16 %v636, %v636
    %v663 = vpack.c.bf16 %v639, %v639
    %v664 = vpack.c.bf16 %v641, %v641
    %v665 = vpack.c.bf16 %v644, %v644
    %v666 = vpack.c.bf16 %v646, %v646
    %v667 = vpack.c.bf16 %v649, %v649
    %v668 = vpack.c.bf16 %v651, %v651
    %v670 = vperm.slane %v153, 0
    %v676 = vunpack.c.l.b16 %v143
    %v677 = vunpack.c.l.b16 %v144
    %v678 = vunpack.c.l.b16 %v145
    %v679 = vunpack.c.l.b16 %v146
    %v680 = vpack.c.b16 %v677, %v676
    %v681 = vpack.c.b16 %v679, %v678
    %684 = vmatpush.bf16.msra.mxu0 0
    %685 = vmatpush.bf16.msra.mxu0 0
    %686 = vmatpush.bf16.msra.mxu0 0
    %687 = vmatpush.bf16.msra.mxu0 0
    %688 = vmatpush.bf16.msra.mxu0 0
    %689 = vmatpush.bf16.msra.mxu0 0
    %690 = vmatpush.bf16.msra.mxu0 %v681
    %691 = vmatpush.bf16.msra.mxu0 %v680
    %692 = vmatmul.bf16.gmra.mxu0 %v501
    %v693 = vpop.f32.mrf.mxu0
    %v694 = vadd.f32 %v670, %v693
    %v695 = vpop.f32.mrf.mxu0
    %v696 = vadd.f32 %v670, %v695
    %697 = vmatmul.bf16.gmra.mxu0 %v504
    %v698 = vpop.f32.mrf.mxu0
    %v699 = vadd.f32 %v670, %v698
    %v700 = vpop.f32.mrf.mxu0
    %v701 = vadd.f32 %v670, %v700
    %702 = vmatmul.bf16.gmra.mxu0 %v507
    %v703 = vpop.f32.mrf.mxu0
    %v704 = vadd.f32 %v670, %v703
    %v705 = vpop.f32.mrf.mxu0
    %v706 = vadd.f32 %v670, %v705
    %707 = vmatmul.bf16.gmra.mxu0 %v510
    %v708 = vpop.f32.mrf.mxu0
    %v709 = vadd.f32 %v670, %v708
    %v710 = vpop.f32.mrf.mxu0
    %v711 = vadd.f32 %v670, %v710
    %712 = vmatmul.bf16.gmra.mxu0 %v513
    %v713 = vpop.f32.mrf.mxu0
    %v714 = vadd.f32 %v670, %v713
    %v715 = vpop.f32.mrf.mxu0
    %v716 = vadd.f32 %v670, %v715
    %717 = vmatmul.bf16.gmra.mxu0 %v516
    %v718 = vpop.f32.mrf.mxu0
    %v719 = vadd.f32 %v670, %v718
    %v720 = vpop.f32.mrf.mxu0
    %v721 = vadd.f32 %v670, %v720
    %722 = vmatmul.bf16.gmra.mxu0 %v519
    %v723 = vpop.f32.mrf.mxu0
    %v724 = vadd.f32 %v670, %v723
    %v725 = vpop.f32.mrf.mxu0
    %v726 = vadd.f32 %v670, %v725
    %727 = vmatmul.bf16.gmra.mxu0 %v522
    %v728 = vpop.f32.mrf.mxu0
    %v729 = vadd.f32 %v670, %v728
    %v730 = vpop.f32.mrf.mxu0
    %v731 = vadd.f32 %v670, %v730
    %732 = vdwg.mxu0
    %v733 = vpack.c.bf16 %v694, %v694
    %v734 = vpack.c.bf16 %v696, %v696
    %v735 = vpack.c.bf16 %v699, %v699
    %v736 = vpack.c.bf16 %v701, %v701
    %v737 = vpack.c.bf16 %v704, %v704
    %v738 = vpack.c.bf16 %v706, %v706
    %v739 = vpack.c.bf16 %v709, %v709
    %v740 = vpack.c.bf16 %v711, %v711
    %v741 = vpack.c.bf16 %v714, %v714
    %v742 = vpack.c.bf16 %v716, %v716
    %v743 = vpack.c.bf16 %v719, %v719
    %v744 = vpack.c.bf16 %v721, %v721
    %v745 = vpack.c.bf16 %v724, %v724
    %v746 = vpack.c.bf16 %v726, %v726
    %v747 = vpack.c.bf16 %v729, %v729
    %v748 = vpack.c.bf16 %v731, %v731
    %v757 = vunpack.c.l.b16 %v573
    %v758 = vunpack.c.l.b16 %v574
    %v759 = vunpack.c.l.b16 %v575
    %v760 = vunpack.c.l.b16 %v576
    %v761 = vunpack.c.l.b16 %v577
    %v762 = vunpack.c.l.b16 %v578
    %v763 = vunpack.c.l.b16 %v579
    %v764 = vunpack.c.l.b16 %v580
    %v765 = vpack.c.b16 %v758, %v757
    %v766 = vpack.c.b16 %v760, %v759
    %v767 = vpack.c.b16 %v762, %v761
    %v768 = vpack.c.b16 %v764, %v763
    %v777 = vunpack.c.l.b16 %v653
    %v778 = vunpack.c.l.b16 %v654
    %v779 = vunpack.c.l.b16 %v655
    %v780 = vunpack.c.l.b16 %v656
    %v781 = vunpack.c.l.b16 %v657
    %v782 = vunpack.c.l.b16 %v658
    %v783 = vunpack.c.l.b16 %v659
    %v784 = vunpack.c.l.b16 %v660
    %v785 = vpack.c.b16 %v778, %v777
    %v786 = vpack.c.b16 %v780, %v779
    %v787 = vpack.c.b16 %v782, %v781
    %v788 = vpack.c.b16 %v784, %v783
    %vm789 = vcmask 64512
    %v791 = vsel %vm789, %v765, 0
    %v794 = vsel %vm789, %v766, 0
    %v797 = vsel %vm789, %v767, 0
    %v800 = vsel %vm789, %v768, 0
    %v803 = vsel %vm789, %v785, 0
    %v806 = vsel %vm789, %v786, 0
    %v809 = vsel %vm789, %v787, 0
    %v812 = vsel %vm789, %v788, 0
    %814 = vmatpush.bf16.xpose.msra.mxu0 0
    %815 = vmatpush.bf16.xpose.msra.mxu0 0
    %816 = vmatpush.bf16.xpose.msra.mxu0 0
    %817 = vmatpush.bf16.xpose.msra.mxu0 0
    %818 = vmatpush.bf16.xpose.msra.mxu0 %v812
    %819 = vmatpush.bf16.xpose.msra.mxu0 %v809
    %820 = vmatpush.bf16.xpose.msra.mxu0 %v806
    %821 = vmatpush.bf16.xpose.msra.mxu0 %v803
    %822 = vmatmul.bf16.gmra.mxu0 %v791
    %v823 = vpop.f32.mrf.mxu0
    %v824 = vadd.f32 0.0, %v823
    %v825 = vpop.f32.mrf.mxu0
    %v826 = vadd.f32 0.0, %v825
    %827 = vmatmul.bf16.gmra.mxu0 %v794
    %v828 = vpop.f32.mrf.mxu0
    %v829 = vadd.f32 0.0, %v828
    %v830 = vpop.f32.mrf.mxu0
    %v831 = vadd.f32 0.0, %v830
    %832 = vmatmul.bf16.gmra.mxu0 %v797
    %v833 = vpop.f32.mrf.mxu0
    %v834 = vadd.f32 0.0, %v833
    %v835 = vpop.f32.mrf.mxu0
    %v836 = vadd.f32 0.0, %v835
    %837 = vmatmul.bf16.gmra.mxu0 %v800
    %v838 = vpop.f32.mrf.mxu0
    %v839 = vadd.f32 0.0, %v838
    %v840 = vpop.f32.mrf.mxu0
    %v841 = vadd.f32 0.0, %v840
    %842 = vdwg.mxu0
    %vm843 = vcmask 523264
    %v844 = vsel %vm843, %v824, -inf
    %845 = vmax.xlane.f32.xlu0 %v844
    %v846 = vpop.xlane.xlu0 %845
    %v847 = vsel %vm843, %v826, -inf
    %848 = vmax.xlane.f32.xlu0 %v847
    %v849 = vpop.xlane.xlu0 %848
    %v850 = vsel %vm843, %v829, -inf
    %851 = vmax.xlane.f32.xlu0 %v850
    %v852 = vpop.xlane.xlu0 %851
    %v853 = vsel %vm843, %v831, -inf
    %854 = vmax.xlane.f32.xlu0 %v853
    %v855 = vpop.xlane.xlu0 %854
    %v856 = vsel %vm843, %v834, -inf
    %857 = vmax.xlane.f32.xlu0 %v856
    %v858 = vpop.xlane.xlu0 %857
    %v859 = vsel %vm843, %v836, -inf
    %860 = vmax.xlane.f32.xlu0 %v859
    %v861 = vpop.xlane.xlu0 %860
    %v862 = vsel %vm843, %v839, -inf
    %863 = vmax.xlane.f32.xlu0 %v862
    %v864 = vpop.xlane.xlu0 %863
    %v865 = vsel %vm843, %v841, -inf
    %866 = vmax.xlane.f32.xlu0 %v865
    %v867 = vpop.xlane.xlu0 %866
    %v868 = vsub.f32 %v824, %v846
    %v869 = vsub.f32 %v826, %v849
    %v870 = vsub.f32 %v829, %v852
    %v871 = vsub.f32 %v831, %v855
    %v872 = vsub.f32 %v834, %v858
    %v873 = vsub.f32 %v836, %v861
    %v874 = vsub.f32 %v839, %v864
    %v875 = vsub.f32 %v841, %v867
    %v876 = vmul.f32 %v868, 1.442695
    %v877 = vpow.pop %v876
    %v878 = vmul.f32 %v869, 1.442695
    %v879 = vpow.pop %v878
    %v880 = vmul.f32 %v870, 1.442695
    %v881 = vpow.pop %v880
    %v882 = vmul.f32 %v871, 1.442695
    %v883 = vpow.pop %v882
    %v884 = vmul.f32 %v872, 1.442695
    %v885 = vpow.pop %v884
    %v886 = vmul.f32 %v873, 1.442695
    %v887 = vpow.pop %v886
    %v888 = vmul.f32 %v874, 1.442695
    %v889 = vpow.pop %v888
    %v890 = vmul.f32 %v875, 1.442695
    %v891 = vpow.pop %v890
    %v892 = vsel %vm843, %v877, 0.0
    %893 = vadd.xlane.f32.xlu0 %v892
    %v894 = vpop.xlane.xlu0 %893
    %v895 = vsel %vm843, %v879, 0.0
    %896 = vadd.xlane.f32.xlu0 %v895
    %v897 = vpop.xlane.xlu0 %896
    %v898 = vsel %vm843, %v881, 0.0
    %899 = vadd.xlane.f32.xlu0 %v898
    %v900 = vpop.xlane.xlu0 %899
    %v901 = vsel %vm843, %v883, 0.0
    %902 = vadd.xlane.f32.xlu0 %v901
    %v903 = vpop.xlane.xlu0 %902
    %v904 = vsel %vm843, %v885, 0.0
    %905 = vadd.xlane.f32.xlu0 %v904
    %v906 = vpop.xlane.xlu0 %905
    %v907 = vsel %vm843, %v887, 0.0
    %908 = vadd.xlane.f32.xlu0 %v907
    %v909 = vpop.xlane.xlu0 %908
    %v910 = vsel %vm843, %v889, 0.0
    %911 = vadd.xlane.f32.xlu0 %v910
    %v912 = vpop.xlane.xlu0 %911
    %v913 = vsel %vm843, %v891, 0.0
    %914 = vadd.xlane.f32.xlu0 %v913
    %v915 = vpop.xlane.xlu0 %914
    %v916 = vpack.c.bf16 %v879, %v877
    %v917 = vpack.c.bf16 %v883, %v881
    %v918 = vpack.c.bf16 %v887, %v885
    %v919 = vpack.c.bf16 %v891, %v889
    %v928 = vunpack.c.l.b16 %v733
    %v929 = vunpack.c.l.b16 %v734
    %v930 = vunpack.c.l.b16 %v735
    %v931 = vunpack.c.l.b16 %v736
    %v932 = vunpack.c.l.b16 %v737
    %v933 = vunpack.c.l.b16 %v738
    %v934 = vunpack.c.l.b16 %v739
    %v935 = vunpack.c.l.b16 %v740
    %v936 = vpack.c.b16 %v929, %v928
    %v937 = vpack.c.b16 %v931, %v930
    %v938 = vpack.c.b16 %v933, %v932
    %v939 = vpack.c.b16 %v935, %v934
    %v945 = vsel %vm843, %v916, 0
    %v948 = vsel %vm843, %v917, 0
    %v951 = vsel %vm843, %v918, 0
    %v954 = vsel %vm843, %v919, 0
    %956 = vmatpush.bf16.msra.mxu0 0
    %957 = vmatpush.bf16.msra.mxu0 0
    %958 = vmatpush.bf16.msra.mxu0 0
    %959 = vmatpush.bf16.msra.mxu0 0
    %960 = vmatpush.bf16.msra.mxu0 %v939
    %961 = vmatpush.bf16.msra.mxu0 %v938
    %962 = vmatpush.bf16.msra.mxu0 %v937
    %963 = vmatpush.bf16.msra.mxu0 %v936
    %964 = vmatmul.bf16.gmra.mxu0 %v945
    %v965 = vpop.f32.mrf.mxu0
    %v966 = vadd.f32 0.0, %v965
    %v967 = vpop.f32.mrf.mxu0
    %v968 = vadd.f32 0.0, %v967
    %969 = vmatmul.bf16.gmra.mxu0 %v948
    %v970 = vpop.f32.mrf.mxu0
    %v971 = vadd.f32 0.0, %v970
    %v972 = vpop.f32.mrf.mxu0
    %v973 = vadd.f32 0.0, %v972
    %974 = vmatmul.bf16.gmra.mxu0 %v951
    %v975 = vpop.f32.mrf.mxu0
    %v976 = vadd.f32 0.0, %v975
    %v977 = vpop.f32.mrf.mxu0
    %v978 = vadd.f32 0.0, %v977
    %979 = vmatmul.bf16.gmra.mxu0 %v954
    %v980 = vpop.f32.mrf.mxu0
    %v981 = vadd.f32 0.0, %v980
    %v982 = vpop.f32.mrf.mxu0
    %v983 = vadd.f32 0.0, %v982
    %984 = vdwg.mxu0
    %v985 = vrcp.pop %v894
    %v986 = vrcp.pop %v897
    %v987 = vrcp.pop %v900
    %v988 = vrcp.pop %v903
    %v989 = vrcp.pop %v906
    %v990 = vrcp.pop %v909
    %v991 = vrcp.pop %v912
    %v992 = vrcp.pop %v915
    %v993 = vmul.f32 %v966, %v985
    %v994 = vmul.f32 %v968, %v986
    %v995 = vmul.f32 %v971, %v987
    %v996 = vmul.f32 %v973, %v988
    %v997 = vmul.f32 %v976, %v989
    %v998 = vmul.f32 %v978, %v990
    %v999 = vmul.f32 %v981, %v991
    %v1000 = vmul.f32 %v983, %v992
    %v1009 = vunpack.c.l.b16 %v581
    %v1010 = vunpack.c.l.b16 %v582
    %v1011 = vunpack.c.l.b16 %v583
    %v1012 = vunpack.c.l.b16 %v584
    %v1013 = vunpack.c.l.b16 %v585
    %v1014 = vunpack.c.l.b16 %v586
    %v1015 = vunpack.c.l.b16 %v587
    %v1016 = vunpack.c.l.b16 %v588
    %v1017 = vpack.c.b16 %v1010, %v1009
    %v1018 = vpack.c.b16 %v1012, %v1011
    %v1019 = vpack.c.b16 %v1014, %v1013
    %v1020 = vpack.c.b16 %v1016, %v1015
    %v1029 = vunpack.c.l.b16 %v661
    %v1030 = vunpack.c.l.b16 %v662
    %v1031 = vunpack.c.l.b16 %v663
    %v1032 = vunpack.c.l.b16 %v664
    %v1033 = vunpack.c.l.b16 %v665
    %v1034 = vunpack.c.l.b16 %v666
    %v1035 = vunpack.c.l.b16 %v667
    %v1036 = vunpack.c.l.b16 %v668
    %v1037 = vpack.c.b16 %v1030, %v1029
    %v1038 = vpack.c.b16 %v1032, %v1031
    %v1039 = vpack.c.b16 %v1034, %v1033
    %v1040 = vpack.c.b16 %v1036, %v1035
    %v1042 = vsel %vm789, %v1017, 0
    %v1045 = vsel %vm789, %v1018, 0
    %v1048 = vsel %vm789, %v1019, 0
    %v1051 = vsel %vm789, %v1020, 0
    %v1054 = vsel %vm789, %v1037, 0
    %v1057 = vsel %vm789, %v1038, 0
    %v1060 = vsel %vm789, %v1039, 0
    %v1063 = vsel %vm789, %v1040, 0
    %1065 = vmatpush.bf16.xpose.msra.mxu0 0
    %1066 = vmatpush.bf16.xpose.msra.mxu0 0
    %1067 = vmatpush.bf16.xpose.msra.mxu0 0
    %1068 = vmatpush.bf16.xpose.msra.mxu0 0
    %1069 = vmatpush.bf16.xpose.msra.mxu0 %v1063
    %1070 = vmatpush.bf16.xpose.msra.mxu0 %v1060
    %1071 = vmatpush.bf16.xpose.msra.mxu0 %v1057
    %1072 = vmatpush.bf16.xpose.msra.mxu0 %v1054
    %1073 = vmatmul.bf16.gmra.mxu0 %v1042
    %v1074 = vpop.f32.mrf.mxu0
    %v1075 = vadd.f32 0.0, %v1074
    %v1076 = vpop.f32.mrf.mxu0
    %v1077 = vadd.f32 0.0, %v1076
    %1078 = vmatmul.bf16.gmra.mxu0 %v1045
    %v1079 = vpop.f32.mrf.mxu0
    %v1080 = vadd.f32 0.0, %v1079
    %v1081 = vpop.f32.mrf.mxu0
    %v1082 = vadd.f32 0.0, %v1081
    %1083 = vmatmul.bf16.gmra.mxu0 %v1048
    %v1084 = vpop.f32.mrf.mxu0
    %v1085 = vadd.f32 0.0, %v1084
    %v1086 = vpop.f32.mrf.mxu0
    %v1087 = vadd.f32 0.0, %v1086
    %1088 = vmatmul.bf16.gmra.mxu0 %v1051
    %v1089 = vpop.f32.mrf.mxu0
    %v1090 = vadd.f32 0.0, %v1089
    %v1091 = vpop.f32.mrf.mxu0
    %v1092 = vadd.f32 0.0, %v1091
    %1093 = vdwg.mxu0
    %v1094 = vsel %vm843, %v1075, -inf
    %1095 = vmax.xlane.f32.xlu0 %v1094
    %v1096 = vpop.xlane.xlu0 %1095
    %v1097 = vsel %vm843, %v1077, -inf
    %1098 = vmax.xlane.f32.xlu0 %v1097
    %v1099 = vpop.xlane.xlu0 %1098
    %v1100 = vsel %vm843, %v1080, -inf
    %1101 = vmax.xlane.f32.xlu0 %v1100
    %v1102 = vpop.xlane.xlu0 %1101
    %v1103 = vsel %vm843, %v1082, -inf
    %1104 = vmax.xlane.f32.xlu0 %v1103
    %v1105 = vpop.xlane.xlu0 %1104
    %v1106 = vsel %vm843, %v1085, -inf
    %1107 = vmax.xlane.f32.xlu0 %v1106
    %v1108 = vpop.xlane.xlu0 %1107
    %v1109 = vsel %vm843, %v1087, -inf
    %1110 = vmax.xlane.f32.xlu0 %v1109
    %v1111 = vpop.xlane.xlu0 %1110
    %v1112 = vsel %vm843, %v1090, -inf
    %1113 = vmax.xlane.f32.xlu0 %v1112
    %v1114 = vpop.xlane.xlu0 %1113
    %v1115 = vsel %vm843, %v1092, -inf
    %1116 = vmax.xlane.f32.xlu0 %v1115
    %v1117 = vpop.xlane.xlu0 %1116
    %v1118 = vsub.f32 %v1075, %v1096
    %v1119 = vsub.f32 %v1077, %v1099
    %v1120 = vsub.f32 %v1080, %v1102
    %v1121 = vsub.f32 %v1082, %v1105
    %v1122 = vsub.f32 %v1085, %v1108
    %v1123 = vsub.f32 %v1087, %v1111
    %v1124 = vsub.f32 %v1090, %v1114
    %v1125 = vsub.f32 %v1092, %v1117
    %v1126 = vmul.f32 %v1118, 1.442695
    %v1127 = vpow.pop %v1126
    %v1128 = vmul.f32 %v1119, 1.442695
    %v1129 = vpow.pop %v1128
    %v1130 = vmul.f32 %v1120, 1.442695
    %v1131 = vpow.pop %v1130
    %v1132 = vmul.f32 %v1121, 1.442695
    %v1133 = vpow.pop %v1132
    %v1134 = vmul.f32 %v1122, 1.442695
    %v1135 = vpow.pop %v1134
    %v1136 = vmul.f32 %v1123, 1.442695
    %v1137 = vpow.pop %v1136
    %v1138 = vmul.f32 %v1124, 1.442695
    %v1139 = vpow.pop %v1138
    %v1140 = vmul.f32 %v1125, 1.442695
    %v1141 = vpow.pop %v1140
    %v1142 = vsel %vm843, %v1127, 0.0
    %1143 = vadd.xlane.f32.xlu0 %v1142
    %v1144 = vpop.xlane.xlu0 %1143
    %v1145 = vsel %vm843, %v1129, 0.0
    %1146 = vadd.xlane.f32.xlu0 %v1145
    %v1147 = vpop.xlane.xlu0 %1146
    %v1148 = vsel %vm843, %v1131, 0.0
    %1149 = vadd.xlane.f32.xlu0 %v1148
    %v1150 = vpop.xlane.xlu0 %1149
    %v1151 = vsel %vm843, %v1133, 0.0
    %1152 = vadd.xlane.f32.xlu0 %v1151
    %v1153 = vpop.xlane.xlu0 %1152
    %v1154 = vsel %vm843, %v1135, 0.0
    %1155 = vadd.xlane.f32.xlu0 %v1154
    %v1156 = vpop.xlane.xlu0 %1155
    %v1157 = vsel %vm843, %v1137, 0.0
    %1158 = vadd.xlane.f32.xlu0 %v1157
    %v1159 = vpop.xlane.xlu0 %1158
    %v1160 = vsel %vm843, %v1139, 0.0
    %1161 = vadd.xlane.f32.xlu0 %v1160
    %v1162 = vpop.xlane.xlu0 %1161
    %v1163 = vsel %vm843, %v1141, 0.0
    %1164 = vadd.xlane.f32.xlu0 %v1163
    %v1165 = vpop.xlane.xlu0 %1164
    %v1166 = vpack.c.bf16 %v1129, %v1127
    %v1167 = vpack.c.bf16 %v1133, %v1131
    %v1168 = vpack.c.bf16 %v1137, %v1135
    %v1169 = vpack.c.bf16 %v1141, %v1139
    %v1178 = vunpack.c.l.b16 %v741
    %v1179 = vunpack.c.l.b16 %v742
    %v1180 = vunpack.c.l.b16 %v743
    %v1181 = vunpack.c.l.b16 %v744
    %v1182 = vunpack.c.l.b16 %v745
    %v1183 = vunpack.c.l.b16 %v746
    %v1184 = vunpack.c.l.b16 %v747
    %v1185 = vunpack.c.l.b16 %v748
    %v1186 = vpack.c.b16 %v1179, %v1178
    %v1187 = vpack.c.b16 %v1181, %v1180
    %v1188 = vpack.c.b16 %v1183, %v1182
    %v1189 = vpack.c.b16 %v1185, %v1184
    %v1195 = vsel %vm843, %v1166, 0
    %v1198 = vsel %vm843, %v1167, 0
    %v1201 = vsel %vm843, %v1168, 0
    %v1204 = vsel %vm843, %v1169, 0
    %1206 = vmatpush.bf16.msra.mxu0 0
    %1207 = vmatpush.bf16.msra.mxu0 0
    %1208 = vmatpush.bf16.msra.mxu0 0
    %1209 = vmatpush.bf16.msra.mxu0 0
    %1210 = vmatpush.bf16.msra.mxu0 %v1189
    %1211 = vmatpush.bf16.msra.mxu0 %v1188
    %1212 = vmatpush.bf16.msra.mxu0 %v1187
    %1213 = vmatpush.bf16.msra.mxu0 %v1186
    %1214 = vmatmul.bf16.gmra.mxu0 %v1195
    %v1215 = vpop.f32.mrf.mxu0
    %v1216 = vadd.f32 0.0, %v1215
    %v1217 = vpop.f32.mrf.mxu0
    %v1218 = vadd.f32 0.0, %v1217
    %1219 = vmatmul.bf16.gmra.mxu0 %v1198
    %v1220 = vpop.f32.mrf.mxu0
    %v1221 = vadd.f32 0.0, %v1220
    %v1222 = vpop.f32.mrf.mxu0
    %v1223 = vadd.f32 0.0, %v1222
    %1224 = vmatmul.bf16.gmra.mxu0 %v1201
    %v1225 = vpop.f32.mrf.mxu0
    %v1226 = vadd.f32 0.0, %v1225
    %v1227 = vpop.f32.mrf.mxu0
    %v1228 = vadd.f32 0.0, %v1227
    %1229 = vmatmul.bf16.gmra.mxu0 %v1204
    %v1230 = vpop.f32.mrf.mxu0
    %v1231 = vadd.f32 0.0, %v1230
    %v1232 = vpop.f32.mrf.mxu0
    %v1233 = vadd.f32 0.0, %v1232
    %1234 = vdwg.mxu0
    %v1235 = vrcp.pop %v1144
    %v1236 = vrcp.pop %v1147
    %v1237 = vrcp.pop %v1150
    %v1238 = vrcp.pop %v1153
    %v1239 = vrcp.pop %v1156
    %v1240 = vrcp.pop %v1159
    %v1241 = vrcp.pop %v1162
    %v1242 = vrcp.pop %v1165
    %v1243 = vmul.f32 %v1216, %v1235
    %v1244 = vmul.f32 %v1218, %v1236
    %v1245 = vmul.f32 %v1221, %v1237
    %v1246 = vmul.f32 %v1223, %v1238
    %v1247 = vmul.f32 %v1226, %v1239
    %v1248 = vmul.f32 %v1228, %v1240
    %v1249 = vmul.f32 %v1231, %v1241
    %v1250 = vmul.f32 %v1233, %v1242
    %v1251 = vpack.c.bf16 %v994, %v993
    %v1252 = vpack.c.bf16 %v996, %v995
    %v1253 = vpack.c.bf16 %v998, %v997
    %v1254 = vpack.c.bf16 %v1000, %v999
    %v1255 = vpack.c.bf16 %v1244, %v1243
    %v1256 = vpack.c.bf16 %v1246, %v1245
    %v1257 = vpack.c.bf16 %v1248, %v1247
    %v1258 = vpack.c.bf16 %v1250, %v1249
    %1259 = vrot.lane.b32.xlu0 %v765, 120
    %v1260 = vpop.permute.xlu0 %1259
    %1261 = vrot.lane.b32.xlu0 %v766, 120
    %v1262 = vpop.permute.xlu0 %1261
    %1263 = vrot.lane.b32.xlu0 %v767, 120
    %v1264 = vpop.permute.xlu0 %1263
    %1265 = vrot.lane.b32.xlu0 %v768, 120
    %v1266 = vpop.permute.xlu0 %1265
    %1267 = vrot.lane.b32.xlu0 %v785, 120
    %v1268 = vpop.permute.xlu0 %1267
    %1269 = vrot.lane.b32.xlu0 %v786, 120
    %v1270 = vpop.permute.xlu0 %1269
    %1271 = vrot.lane.b32.xlu0 %v787, 120
    %v1272 = vpop.permute.xlu0 %1271
    %1273 = vrot.lane.b32.xlu0 %v788, 120
    %v1274 = vpop.permute.xlu0 %1273
    %v1276 = vsel %vm789, %v1260, 0
    %v1279 = vsel %vm789, %v1262, 0
    %v1282 = vsel %vm789, %v1264, 0
    %v1285 = vsel %vm789, %v1266, 0
    %v1288 = vsel %vm789, %v1268, 0
    %v1291 = vsel %vm789, %v1270, 0
    %v1294 = vsel %vm789, %v1272, 0
    %v1297 = vsel %vm789, %v1274, 0
    %1299 = vmatpush.bf16.xpose.msra.mxu0 0
    %1300 = vmatpush.bf16.xpose.msra.mxu0 0
    %1301 = vmatpush.bf16.xpose.msra.mxu0 0
    %1302 = vmatpush.bf16.xpose.msra.mxu0 0
    %1303 = vmatpush.bf16.xpose.msra.mxu0 %v1297
    %1304 = vmatpush.bf16.xpose.msra.mxu0 %v1294
    %1305 = vmatpush.bf16.xpose.msra.mxu0 %v1291
    %1306 = vmatpush.bf16.xpose.msra.mxu0 %v1288
    %1307 = vmatmul.bf16.gmra.mxu0 %v1276
    %v1308 = vpop.f32.mrf.mxu0
    %v1309 = vadd.f32 0.0, %v1308
    %v1310 = vpop.f32.mrf.mxu0
    %v1311 = vadd.f32 0.0, %v1310
    %1312 = vmatmul.bf16.gmra.mxu0 %v1279
    %v1313 = vpop.f32.mrf.mxu0
    %v1314 = vadd.f32 0.0, %v1313
    %v1315 = vpop.f32.mrf.mxu0
    %v1316 = vadd.f32 0.0, %v1315
    %1317 = vmatmul.bf16.gmra.mxu0 %v1282
    %v1318 = vpop.f32.mrf.mxu0
    %v1319 = vadd.f32 0.0, %v1318
    %v1320 = vpop.f32.mrf.mxu0
    %v1321 = vadd.f32 0.0, %v1320
    %1322 = vmatmul.bf16.gmra.mxu0 %v1285
    %v1323 = vpop.f32.mrf.mxu0
    %v1324 = vadd.f32 0.0, %v1323
    %v1325 = vpop.f32.mrf.mxu0
    %v1326 = vadd.f32 0.0, %v1325
    %1327 = vdwg.mxu0
    %v1328 = vsel %vm843, %v1309, -inf
    %1329 = vmax.xlane.f32.xlu0 %v1328
    %v1330 = vpop.xlane.xlu0 %1329
    %v1331 = vsel %vm843, %v1311, -inf
    %1332 = vmax.xlane.f32.xlu0 %v1331
    %v1333 = vpop.xlane.xlu0 %1332
    %v1334 = vsel %vm843, %v1314, -inf
    %1335 = vmax.xlane.f32.xlu0 %v1334
    %v1336 = vpop.xlane.xlu0 %1335
    %v1337 = vsel %vm843, %v1316, -inf
    %1338 = vmax.xlane.f32.xlu0 %v1337
    %v1339 = vpop.xlane.xlu0 %1338
    %v1340 = vsel %vm843, %v1319, -inf
    %1341 = vmax.xlane.f32.xlu0 %v1340
    %v1342 = vpop.xlane.xlu0 %1341
    %v1343 = vsel %vm843, %v1321, -inf
    %1344 = vmax.xlane.f32.xlu0 %v1343
    %v1345 = vpop.xlane.xlu0 %1344
    %v1346 = vsel %vm843, %v1324, -inf
    %1347 = vmax.xlane.f32.xlu0 %v1346
    %v1348 = vpop.xlane.xlu0 %1347
    %v1349 = vsel %vm843, %v1326, -inf
    %1350 = vmax.xlane.f32.xlu0 %v1349
    %v1351 = vpop.xlane.xlu0 %1350
    %v1352 = vsub.f32 %v1309, %v1330
    %v1353 = vsub.f32 %v1311, %v1333
    %v1354 = vsub.f32 %v1314, %v1336
    %v1355 = vsub.f32 %v1316, %v1339
    %v1356 = vsub.f32 %v1319, %v1342
    %v1357 = vsub.f32 %v1321, %v1345
    %v1358 = vsub.f32 %v1324, %v1348
    %v1359 = vsub.f32 %v1326, %v1351
    %v1360 = vmul.f32 %v1352, 1.442695
    %v1361 = vpow.pop %v1360
    %v1362 = vmul.f32 %v1353, 1.442695
    %v1363 = vpow.pop %v1362
    %v1364 = vmul.f32 %v1354, 1.442695
    %v1365 = vpow.pop %v1364
    %v1366 = vmul.f32 %v1355, 1.442695
    %v1367 = vpow.pop %v1366
    %v1368 = vmul.f32 %v1356, 1.442695
    %v1369 = vpow.pop %v1368
    %v1370 = vmul.f32 %v1357, 1.442695
    %v1371 = vpow.pop %v1370
    %v1372 = vmul.f32 %v1358, 1.442695
    %v1373 = vpow.pop %v1372
    %v1374 = vmul.f32 %v1359, 1.442695
    %v1375 = vpow.pop %v1374
    %v1376 = vsel %vm843, %v1361, 0.0
    %1377 = vadd.xlane.f32.xlu0 %v1376
    %v1378 = vpop.xlane.xlu0 %1377
    %v1379 = vsel %vm843, %v1363, 0.0
    %1380 = vadd.xlane.f32.xlu0 %v1379
    %v1381 = vpop.xlane.xlu0 %1380
    %v1382 = vsel %vm843, %v1365, 0.0
    %1383 = vadd.xlane.f32.xlu0 %v1382
    %v1384 = vpop.xlane.xlu0 %1383
    %v1385 = vsel %vm843, %v1367, 0.0
    %1386 = vadd.xlane.f32.xlu0 %v1385
    %v1387 = vpop.xlane.xlu0 %1386
    %v1388 = vsel %vm843, %v1369, 0.0
    %1389 = vadd.xlane.f32.xlu0 %v1388
    %v1390 = vpop.xlane.xlu0 %1389
    %v1391 = vsel %vm843, %v1371, 0.0
    %1392 = vadd.xlane.f32.xlu0 %v1391
    %v1393 = vpop.xlane.xlu0 %1392
    %v1394 = vsel %vm843, %v1373, 0.0
    %1395 = vadd.xlane.f32.xlu0 %v1394
    %v1396 = vpop.xlane.xlu0 %1395
    %v1397 = vsel %vm843, %v1375, 0.0
    %1398 = vadd.xlane.f32.xlu0 %v1397
    %v1399 = vpop.xlane.xlu0 %1398
    %v1400 = vpack.c.bf16 %v1363, %v1361
    %v1401 = vpack.c.bf16 %v1367, %v1365
    %v1402 = vpack.c.bf16 %v1371, %v1369
    %v1403 = vpack.c.bf16 %v1375, %v1373
    %1404 = vrot.lane.b32.xlu0 %v936, 120
    %v1405 = vpop.permute.xlu0 %1404
    %1406 = vrot.lane.b32.xlu0 %v937, 120
    %v1407 = vpop.permute.xlu0 %1406
    %1408 = vrot.lane.b32.xlu0 %v938, 120
    %v1409 = vpop.permute.xlu0 %1408
    %1410 = vrot.lane.b32.xlu0 %v939, 120
    %v1411 = vpop.permute.xlu0 %1410
    %v1417 = vsel %vm843, %v1400, 0
    %v1420 = vsel %vm843, %v1401, 0
    %v1423 = vsel %vm843, %v1402, 0
    %v1426 = vsel %vm843, %v1403, 0
    %1428 = vmatpush.bf16.msra.mxu0 0
    %1429 = vmatpush.bf16.msra.mxu0 0
    %1430 = vmatpush.bf16.msra.mxu0 0
    %1431 = vmatpush.bf16.msra.mxu0 0
    %1432 = vmatpush.bf16.msra.mxu0 %v1411
    %1433 = vmatpush.bf16.msra.mxu0 %v1409
    %1434 = vmatpush.bf16.msra.mxu0 %v1407
    %1435 = vmatpush.bf16.msra.mxu0 %v1405
    %1436 = vmatmul.bf16.gmra.mxu0 %v1417
    %v1437 = vpop.f32.mrf.mxu0
    %v1438 = vadd.f32 0.0, %v1437
    %v1439 = vpop.f32.mrf.mxu0
    %v1440 = vadd.f32 0.0, %v1439
    %1441 = vmatmul.bf16.gmra.mxu0 %v1420
    %v1442 = vpop.f32.mrf.mxu0
    %v1443 = vadd.f32 0.0, %v1442
    %v1444 = vpop.f32.mrf.mxu0
    %v1445 = vadd.f32 0.0, %v1444
    %1446 = vmatmul.bf16.gmra.mxu0 %v1423
    %v1447 = vpop.f32.mrf.mxu0
    %v1448 = vadd.f32 0.0, %v1447
    %v1449 = vpop.f32.mrf.mxu0
    %v1450 = vadd.f32 0.0, %v1449
    %1451 = vmatmul.bf16.gmra.mxu0 %v1426
    %v1452 = vpop.f32.mrf.mxu0
    %v1453 = vadd.f32 0.0, %v1452
    %v1454 = vpop.f32.mrf.mxu0
    %v1455 = vadd.f32 0.0, %v1454
    %1456 = vdwg.mxu0
    %v1457 = vrcp.pop %v1378
    %v1458 = vrcp.pop %v1381
    %v1459 = vrcp.pop %v1384
    %v1460 = vrcp.pop %v1387
    %v1461 = vrcp.pop %v1390
    %v1462 = vrcp.pop %v1393
    %v1463 = vrcp.pop %v1396
    %v1464 = vrcp.pop %v1399
    %v1465 = vmul.f32 %v1438, %v1457
    %v1466 = vmul.f32 %v1440, %v1458
    %v1467 = vmul.f32 %v1443, %v1459
    %v1468 = vmul.f32 %v1445, %v1460
    %v1469 = vmul.f32 %v1448, %v1461
    %v1470 = vmul.f32 %v1450, %v1462
    %v1471 = vmul.f32 %v1453, %v1463
    %v1472 = vmul.f32 %v1455, %v1464
    %1473 = vrot.lane.b32.xlu0 %v1017, 120
    %v1474 = vpop.permute.xlu0 %1473
    %1475 = vrot.lane.b32.xlu0 %v1018, 120
    %v1476 = vpop.permute.xlu0 %1475
    %1477 = vrot.lane.b32.xlu0 %v1019, 120
    %v1478 = vpop.permute.xlu0 %1477
    %1479 = vrot.lane.b32.xlu0 %v1020, 120
    %v1480 = vpop.permute.xlu0 %1479
    %1481 = vrot.lane.b32.xlu0 %v1037, 120
    %v1482 = vpop.permute.xlu0 %1481
    %1483 = vrot.lane.b32.xlu0 %v1038, 120
    %v1484 = vpop.permute.xlu0 %1483
    %1485 = vrot.lane.b32.xlu0 %v1039, 120
    %v1486 = vpop.permute.xlu0 %1485
    %1487 = vrot.lane.b32.xlu0 %v1040, 120
    %v1488 = vpop.permute.xlu0 %1487
    %v1490 = vsel %vm789, %v1474, 0
    %v1493 = vsel %vm789, %v1476, 0
    %v1496 = vsel %vm789, %v1478, 0
    %v1499 = vsel %vm789, %v1480, 0
    %v1502 = vsel %vm789, %v1482, 0
    %v1505 = vsel %vm789, %v1484, 0
    %v1508 = vsel %vm789, %v1486, 0
    %v1511 = vsel %vm789, %v1488, 0
    %1513 = vmatpush.bf16.xpose.msra.mxu0 0
    %1514 = vmatpush.bf16.xpose.msra.mxu0 0
    %1515 = vmatpush.bf16.xpose.msra.mxu0 0
    %1516 = vmatpush.bf16.xpose.msra.mxu0 0
    %1517 = vmatpush.bf16.xpose.msra.mxu0 %v1511
    %1518 = vmatpush.bf16.xpose.msra.mxu0 %v1508
    %1519 = vmatpush.bf16.xpose.msra.mxu0 %v1505
    %1520 = vmatpush.bf16.xpose.msra.mxu0 %v1502
    %1521 = vmatmul.bf16.gmra.mxu0 %v1490
    %v1522 = vpop.f32.mrf.mxu0
    %v1523 = vadd.f32 0.0, %v1522
    %v1524 = vpop.f32.mrf.mxu0
    %v1525 = vadd.f32 0.0, %v1524
    %1526 = vmatmul.bf16.gmra.mxu0 %v1493
    %v1527 = vpop.f32.mrf.mxu0
    %v1528 = vadd.f32 0.0, %v1527
    %v1529 = vpop.f32.mrf.mxu0
    %v1530 = vadd.f32 0.0, %v1529
    %1531 = vmatmul.bf16.gmra.mxu0 %v1496
    %v1532 = vpop.f32.mrf.mxu0
    %v1533 = vadd.f32 0.0, %v1532
    %v1534 = vpop.f32.mrf.mxu0
    %v1535 = vadd.f32 0.0, %v1534
    %1536 = vmatmul.bf16.gmra.mxu0 %v1499
    %v1537 = vpop.f32.mrf.mxu0
    %v1538 = vadd.f32 0.0, %v1537
    %v1539 = vpop.f32.mrf.mxu0
    %v1540 = vadd.f32 0.0, %v1539
    %1541 = vdwg.mxu0
    %v1542 = vsel %vm843, %v1523, -inf
    %1543 = vmax.xlane.f32.xlu0 %v1542
    %v1544 = vpop.xlane.xlu0 %1543
    %v1545 = vsel %vm843, %v1525, -inf
    %1546 = vmax.xlane.f32.xlu0 %v1545
    %v1547 = vpop.xlane.xlu0 %1546
    %v1548 = vsel %vm843, %v1528, -inf
    %1549 = vmax.xlane.f32.xlu0 %v1548
    %v1550 = vpop.xlane.xlu0 %1549
    %v1551 = vsel %vm843, %v1530, -inf
    %1552 = vmax.xlane.f32.xlu0 %v1551
    %v1553 = vpop.xlane.xlu0 %1552
    %v1554 = vsel %vm843, %v1533, -inf
    %1555 = vmax.xlane.f32.xlu0 %v1554
    %v1556 = vpop.xlane.xlu0 %1555
    %v1557 = vsel %vm843, %v1535, -inf
    %1558 = vmax.xlane.f32.xlu0 %v1557
    %v1559 = vpop.xlane.xlu0 %1558
    %v1560 = vsel %vm843, %v1538, -inf
    %1561 = vmax.xlane.f32.xlu0 %v1560
    %v1562 = vpop.xlane.xlu0 %1561
    %v1563 = vsel %vm843, %v1540, -inf
    %1564 = vmax.xlane.f32.xlu0 %v1563
    %v1565 = vpop.xlane.xlu0 %1564
    %v1566 = vsub.f32 %v1523, %v1544
    %v1567 = vsub.f32 %v1525, %v1547
    %v1568 = vsub.f32 %v1528, %v1550
    %v1569 = vsub.f32 %v1530, %v1553
    %v1570 = vsub.f32 %v1533, %v1556
    %v1571 = vsub.f32 %v1535, %v1559
    %v1572 = vsub.f32 %v1538, %v1562
    %v1573 = vsub.f32 %v1540, %v1565
    %v1574 = vmul.f32 %v1566, 1.442695
    %v1575 = vpow.pop %v1574
    %v1576 = vmul.f32 %v1567, 1.442695
    %v1577 = vpow.pop %v1576
    %v1578 = vmul.f32 %v1568, 1.442695
    %v1579 = vpow.pop %v1578
    %v1580 = vmul.f32 %v1569, 1.442695
    %v1581 = vpow.pop %v1580
    %v1582 = vmul.f32 %v1570, 1.442695
    %v1583 = vpow.pop %v1582
    %v1584 = vmul.f32 %v1571, 1.442695
    %v1585 = vpow.pop %v1584
    %v1586 = vmul.f32 %v1572, 1.442695
    %v1587 = vpow.pop %v1586
    %v1588 = vmul.f32 %v1573, 1.442695
    %v1589 = vpow.pop %v1588
    %v1590 = vsel %vm843, %v1575, 0.0
    %1591 = vadd.xlane.f32.xlu0 %v1590
    %v1592 = vpop.xlane.xlu0 %1591
    %v1593 = vsel %vm843, %v1577, 0.0
    %1594 = vadd.xlane.f32.xlu0 %v1593
    %v1595 = vpop.xlane.xlu0 %1594
    %v1596 = vsel %vm843, %v1579, 0.0
    %1597 = vadd.xlane.f32.xlu0 %v1596
    %v1598 = vpop.xlane.xlu0 %1597
    %v1599 = vsel %vm843, %v1581, 0.0
    %1600 = vadd.xlane.f32.xlu0 %v1599
    %v1601 = vpop.xlane.xlu0 %1600
    %v1602 = vsel %vm843, %v1583, 0.0
    %1603 = vadd.xlane.f32.xlu0 %v1602
    %v1604 = vpop.xlane.xlu0 %1603
    %v1605 = vsel %vm843, %v1585, 0.0
    %1606 = vadd.xlane.f32.xlu0 %v1605
    %v1607 = vpop.xlane.xlu0 %1606
    %v1608 = vsel %vm843, %v1587, 0.0
    %1609 = vadd.xlane.f32.xlu0 %v1608
    %v1610 = vpop.xlane.xlu0 %1609
    %v1611 = vsel %vm843, %v1589, 0.0
    %1612 = vadd.xlane.f32.xlu0 %v1611
    %v1613 = vpop.xlane.xlu0 %1612
    %v1614 = vpack.c.bf16 %v1577, %v1575
    %v1615 = vpack.c.bf16 %v1581, %v1579
    %v1616 = vpack.c.bf16 %v1585, %v1583
    %v1617 = vpack.c.bf16 %v1589, %v1587
    %1618 = vrot.lane.b32.xlu0 %v1186, 120
    %v1619 = vpop.permute.xlu0 %1618
    %1620 = vrot.lane.b32.xlu0 %v1187, 120
    %v1621 = vpop.permute.xlu0 %1620
    %1622 = vrot.lane.b32.xlu0 %v1188, 120
    %v1623 = vpop.permute.xlu0 %1622
    %1624 = vrot.lane.b32.xlu0 %v1189, 120
    %v1625 = vpop.permute.xlu0 %1624
    %v1631 = vsel %vm843, %v1614, 0
    %v1634 = vsel %vm843, %v1615, 0
    %v1637 = vsel %vm843, %v1616, 0
    %v1640 = vsel %vm843, %v1617, 0
    %1642 = vmatpush.bf16.msra.mxu0 0
    %1643 = vmatpush.bf16.msra.mxu0 0
    %1644 = vmatpush.bf16.msra.mxu0 0
    %1645 = vmatpush.bf16.msra.mxu0 0
    %1646 = vmatpush.bf16.msra.mxu0 %v1625
    %1647 = vmatpush.bf16.msra.mxu0 %v1623
    %1648 = vmatpush.bf16.msra.mxu0 %v1621
    %1649 = vmatpush.bf16.msra.mxu0 %v1619
    %1650 = vmatmul.bf16.gmra.mxu0 %v1631
    %v1651 = vpop.f32.mrf.mxu0
    %v1652 = vadd.f32 0.0, %v1651
    %v1653 = vpop.f32.mrf.mxu0
    %v1654 = vadd.f32 0.0, %v1653
    %1655 = vmatmul.bf16.gmra.mxu0 %v1634
    %v1656 = vpop.f32.mrf.mxu0
    %v1657 = vadd.f32 0.0, %v1656
    %v1658 = vpop.f32.mrf.mxu0
    %v1659 = vadd.f32 0.0, %v1658
    %1660 = vmatmul.bf16.gmra.mxu0 %v1637
    %v1661 = vpop.f32.mrf.mxu0
    %v1662 = vadd.f32 0.0, %v1661
    %v1663 = vpop.f32.mrf.mxu0
    %v1664 = vadd.f32 0.0, %v1663
    %1665 = vmatmul.bf16.gmra.mxu0 %v1640
    %v1666 = vpop.f32.mrf.mxu0
    %v1667 = vadd.f32 0.0, %v1666
    %v1668 = vpop.f32.mrf.mxu0
    %v1669 = vadd.f32 0.0, %v1668
    %1670 = vdwg.mxu0
    %v1671 = vrcp.pop %v1592
    %v1672 = vrcp.pop %v1595
    %v1673 = vrcp.pop %v1598
    %v1674 = vrcp.pop %v1601
    %v1675 = vrcp.pop %v1604
    %v1676 = vrcp.pop %v1607
    %v1677 = vrcp.pop %v1610
    %v1678 = vrcp.pop %v1613
    %v1679 = vmul.f32 %v1652, %v1671
    %v1680 = vmul.f32 %v1654, %v1672
    %v1681 = vmul.f32 %v1657, %v1673
    %v1682 = vmul.f32 %v1659, %v1674
    %v1683 = vmul.f32 %v1662, %v1675
    %v1684 = vmul.f32 %v1664, %v1676
    %v1685 = vmul.f32 %v1667, %v1677
    %v1686 = vmul.f32 %v1669, %v1678
    %v1687 = vpack.c.bf16 %v1466, %v1465
    %v1688 = vpack.c.bf16 %v1468, %v1467
    %v1689 = vpack.c.bf16 %v1470, %v1469
    %v1690 = vpack.c.bf16 %v1472, %v1471
    %v1691 = vpack.c.bf16 %v1680, %v1679
    %v1692 = vpack.c.bf16 %v1682, %v1681
    %v1693 = vpack.c.bf16 %v1684, %v1683
    %v1694 = vpack.c.bf16 %v1686, %v1685
    %v1696 = vsel %vm789, %v1687, 0
    %v1699 = vsel %vm789, %v1688, 0
    %v1702 = vsel %vm789, %v1689, 0
    %v1705 = vsel %vm789, %v1690, 0
    %v1708 = vsel %vm789, %v1691, 0
    %v1711 = vsel %vm789, %v1692, 0
    %v1714 = vsel %vm789, %v1693, 0
    %v1717 = vsel %vm789, %v1694, 0
    %vm1719 = vcmask 1043456
    %v1721 = vsel %vm1719, %v148, 0
    %1723 = vmatpush.bf16.msra.mxu0 0
    %1724 = vmatpush.bf16.msra.mxu0 0
    %1725 = vmatpush.bf16.msra.mxu0 0
    %1726 = vmatpush.bf16.msra.mxu0 0
    %1727 = vmatpush.bf16.msra.mxu0 0
    %1728 = vmatpush.bf16.msra.mxu0 0
    %1729 = vmatpush.bf16.msra.mxu0 0
    %1730 = vmatpush.bf16.msra.mxu0 %v1721
    %1731 = vmatmul.bf16.gmra.mxu0 %v1696
    %v1732 = vpop.f32.mrf.mxu0
    %v1733 = vadd.f32 0.0, %v1732
    %v1734 = vpop.f32.mrf.mxu0
    %v1735 = vadd.f32 0.0, %v1734
    %1736 = vmatmul.bf16.gmra.mxu0 %v1699
    %v1737 = vpop.f32.mrf.mxu0
    %v1738 = vadd.f32 0.0, %v1737
    %v1739 = vpop.f32.mrf.mxu0
    %v1740 = vadd.f32 0.0, %v1739
    %1741 = vmatmul.bf16.gmra.mxu0 %v1702
    %v1742 = vpop.f32.mrf.mxu0
    %v1743 = vadd.f32 0.0, %v1742
    %v1744 = vpop.f32.mrf.mxu0
    %v1745 = vadd.f32 0.0, %v1744
    %1746 = vmatmul.bf16.gmra.mxu0 %v1705
    %v1747 = vpop.f32.mrf.mxu0
    %v1748 = vadd.f32 0.0, %v1747
    %v1749 = vpop.f32.mrf.mxu0
    %v1750 = vadd.f32 0.0, %v1749
    %1751 = vmatmul.bf16.gmra.mxu0 %v1708
    %v1752 = vpop.f32.mrf.mxu0
    %v1753 = vadd.f32 0.0, %v1752
    %v1754 = vpop.f32.mrf.mxu0
    %v1755 = vadd.f32 0.0, %v1754
    %1756 = vmatmul.bf16.gmra.mxu0 %v1711
    %v1757 = vpop.f32.mrf.mxu0
    %v1758 = vadd.f32 0.0, %v1757
    %v1759 = vpop.f32.mrf.mxu0
    %v1760 = vadd.f32 0.0, %v1759
    %1761 = vmatmul.bf16.gmra.mxu0 %v1714
    %v1762 = vpop.f32.mrf.mxu0
    %v1763 = vadd.f32 0.0, %v1762
    %v1764 = vpop.f32.mrf.mxu0
    %v1765 = vadd.f32 0.0, %v1764
    %1766 = vmatmul.bf16.gmra.mxu0 %v1717
    %v1767 = vpop.f32.mrf.mxu0
    %v1768 = vadd.f32 0.0, %v1767
    %v1769 = vpop.f32.mrf.mxu0
    %v1770 = vadd.f32 0.0, %v1769
    %1771 = vdwg.mxu0
    %v1773 = vsel %vm789, %v1251, 0
    %v1776 = vsel %vm789, %v1252, 0
    %v1779 = vsel %vm789, %v1253, 0
    %v1782 = vsel %vm789, %v1254, 0
    %v1785 = vsel %vm789, %v1255, 0
    %v1788 = vsel %vm789, %v1256, 0
    %v1791 = vsel %vm789, %v1257, 0
    %v1794 = vsel %vm789, %v1258, 0
    %v1797 = vsel %vm1719, %v147, 0
    %1799 = vmatpush.bf16.msra.mxu0 0
    %1800 = vmatpush.bf16.msra.mxu0 0
    %1801 = vmatpush.bf16.msra.mxu0 0
    %1802 = vmatpush.bf16.msra.mxu0 0
    %1803 = vmatpush.bf16.msra.mxu0 0
    %1804 = vmatpush.bf16.msra.mxu0 0
    %1805 = vmatpush.bf16.msra.mxu0 0
    %1806 = vmatpush.bf16.msra.mxu0 %v1797
    %1807 = vmatmul.bf16.gmra.mxu0 %v1773
    %v1808 = vpop.f32.mrf.mxu0
    %v1809 = vadd.f32 %v1733, %v1808
    %v1810 = vpop.f32.mrf.mxu0
    %v1811 = vadd.f32 %v1735, %v1810
    %1812 = vmatmul.bf16.gmra.mxu0 %v1776
    %v1813 = vpop.f32.mrf.mxu0
    %v1814 = vadd.f32 %v1738, %v1813
    %v1815 = vpop.f32.mrf.mxu0
    %v1816 = vadd.f32 %v1740, %v1815
    %1817 = vmatmul.bf16.gmra.mxu0 %v1779
    %v1818 = vpop.f32.mrf.mxu0
    %v1819 = vadd.f32 %v1743, %v1818
    %v1820 = vpop.f32.mrf.mxu0
    %v1821 = vadd.f32 %v1745, %v1820
    %1822 = vmatmul.bf16.gmra.mxu0 %v1782
    %v1823 = vpop.f32.mrf.mxu0
    %v1824 = vadd.f32 %v1748, %v1823
    %v1825 = vpop.f32.mrf.mxu0
    %v1826 = vadd.f32 %v1750, %v1825
    %1827 = vmatmul.bf16.gmra.mxu0 %v1785
    %v1828 = vpop.f32.mrf.mxu0
    %v1829 = vadd.f32 %v1753, %v1828
    %v1830 = vpop.f32.mrf.mxu0
    %v1831 = vadd.f32 %v1755, %v1830
    %1832 = vmatmul.bf16.gmra.mxu0 %v1788
    %v1833 = vpop.f32.mrf.mxu0
    %v1834 = vadd.f32 %v1758, %v1833
    %v1835 = vpop.f32.mrf.mxu0
    %v1836 = vadd.f32 %v1760, %v1835
    %1837 = vmatmul.bf16.gmra.mxu0 %v1791
    %v1838 = vpop.f32.mrf.mxu0
    %v1839 = vadd.f32 %v1763, %v1838
    %v1840 = vpop.f32.mrf.mxu0
    %v1841 = vadd.f32 %v1765, %v1840
    %1842 = vmatmul.bf16.gmra.mxu0 %v1794
    %v1843 = vpop.f32.mrf.mxu0
    %v1844 = vadd.f32 %v1768, %v1843
    %v1845 = vpop.f32.mrf.mxu0
    %v1846 = vadd.f32 %v1770, %v1845
    %1847 = vdwg.mxu0
    %1848 = vrot.lane.b32.xlu0 %v765, 112
    %v1849 = vpop.permute.xlu0 %1848
    %1850 = vrot.lane.b32.xlu0 %v766, 112
    %v1851 = vpop.permute.xlu0 %1850
    %1852 = vrot.lane.b32.xlu0 %v767, 112
    %v1853 = vpop.permute.xlu0 %1852
    %1854 = vrot.lane.b32.xlu0 %v768, 112
    %v1855 = vpop.permute.xlu0 %1854
    %1856 = vrot.lane.b32.xlu0 %v785, 112
    %v1857 = vpop.permute.xlu0 %1856
    %1858 = vrot.lane.b32.xlu0 %v786, 112
    %v1859 = vpop.permute.xlu0 %1858
    %1860 = vrot.lane.b32.xlu0 %v787, 112
    %v1861 = vpop.permute.xlu0 %1860
    %1862 = vrot.lane.b32.xlu0 %v788, 112
    %v1863 = vpop.permute.xlu0 %1862
    %v1865 = vsel %vm789, %v1849, 0
    %v1868 = vsel %vm789, %v1851, 0
    %v1871 = vsel %vm789, %v1853, 0
    %v1874 = vsel %vm789, %v1855, 0
    %v1877 = vsel %vm789, %v1857, 0
    %v1880 = vsel %vm789, %v1859, 0
    %v1883 = vsel %vm789, %v1861, 0
    %v1886 = vsel %vm789, %v1863, 0
    %1888 = vmatpush.bf16.xpose.msra.mxu0 0
    %1889 = vmatpush.bf16.xpose.msra.mxu0 0
    %1890 = vmatpush.bf16.xpose.msra.mxu0 0
    %1891 = vmatpush.bf16.xpose.msra.mxu0 0
    %1892 = vmatpush.bf16.xpose.msra.mxu0 %v1886
    %1893 = vmatpush.bf16.xpose.msra.mxu0 %v1883
    %1894 = vmatpush.bf16.xpose.msra.mxu0 %v1880
    %1895 = vmatpush.bf16.xpose.msra.mxu0 %v1877
    %1896 = vmatmul.bf16.gmra.mxu0 %v1865
    %v1897 = vpop.f32.mrf.mxu0
    %v1898 = vadd.f32 0.0, %v1897
    %v1899 = vpop.f32.mrf.mxu0
    %v1900 = vadd.f32 0.0, %v1899
    %1901 = vmatmul.bf16.gmra.mxu0 %v1868
    %v1902 = vpop.f32.mrf.mxu0
    %v1903 = vadd.f32 0.0, %v1902
    %v1904 = vpop.f32.mrf.mxu0
    %v1905 = vadd.f32 0.0, %v1904
    %1906 = vmatmul.bf16.gmra.mxu0 %v1871
    %v1907 = vpop.f32.mrf.mxu0
    %v1908 = vadd.f32 0.0, %v1907
    %v1909 = vpop.f32.mrf.mxu0
    %v1910 = vadd.f32 0.0, %v1909
    %1911 = vmatmul.bf16.gmra.mxu0 %v1874
    %v1912 = vpop.f32.mrf.mxu0
    %v1913 = vadd.f32 0.0, %v1912
    %v1914 = vpop.f32.mrf.mxu0
    %v1915 = vadd.f32 0.0, %v1914
    %1916 = vdwg.mxu0
    %v1917 = vsel %vm843, %v1898, -inf
    %1918 = vmax.xlane.f32.xlu0 %v1917
    %v1919 = vpop.xlane.xlu0 %1918
    %v1920 = vsel %vm843, %v1900, -inf
    %1921 = vmax.xlane.f32.xlu0 %v1920
    %v1922 = vpop.xlane.xlu0 %1921
    %v1923 = vsel %vm843, %v1903, -inf
    %1924 = vmax.xlane.f32.xlu0 %v1923
    %v1925 = vpop.xlane.xlu0 %1924
    %v1926 = vsel %vm843, %v1905, -inf
    %1927 = vmax.xlane.f32.xlu0 %v1926
    %v1928 = vpop.xlane.xlu0 %1927
    %v1929 = vsel %vm843, %v1908, -inf
    %1930 = vmax.xlane.f32.xlu0 %v1929
    %v1931 = vpop.xlane.xlu0 %1930
    %v1932 = vsel %vm843, %v1910, -inf
    %1933 = vmax.xlane.f32.xlu0 %v1932
    %v1934 = vpop.xlane.xlu0 %1933
    %v1935 = vsel %vm843, %v1913, -inf
    %1936 = vmax.xlane.f32.xlu0 %v1935
    %v1937 = vpop.xlane.xlu0 %1936
    %v1938 = vsel %vm843, %v1915, -inf
    %1939 = vmax.xlane.f32.xlu0 %v1938
    %v1940 = vpop.xlane.xlu0 %1939
    %v1941 = vsub.f32 %v1898, %v1919
    %v1942 = vsub.f32 %v1900, %v1922
    %v1943 = vsub.f32 %v1903, %v1925
    %v1944 = vsub.f32 %v1905, %v1928
    %v1945 = vsub.f32 %v1908, %v1931
    %v1946 = vsub.f32 %v1910, %v1934
    %v1947 = vsub.f32 %v1913, %v1937
    %v1948 = vsub.f32 %v1915, %v1940
    %v1949 = vmul.f32 %v1941, 1.442695
    %v1950 = vpow.pop %v1949
    %v1951 = vmul.f32 %v1942, 1.442695
    %v1952 = vpow.pop %v1951
    %v1953 = vmul.f32 %v1943, 1.442695
    %v1954 = vpow.pop %v1953
    %v1955 = vmul.f32 %v1944, 1.442695
    %v1956 = vpow.pop %v1955
    %v1957 = vmul.f32 %v1945, 1.442695
    %v1958 = vpow.pop %v1957
    %v1959 = vmul.f32 %v1946, 1.442695
    %v1960 = vpow.pop %v1959
    %v1961 = vmul.f32 %v1947, 1.442695
    %v1962 = vpow.pop %v1961
    %v1963 = vmul.f32 %v1948, 1.442695
    %v1964 = vpow.pop %v1963
    %v1965 = vsel %vm843, %v1950, 0.0
    %1966 = vadd.xlane.f32.xlu0 %v1965
    %v1967 = vpop.xlane.xlu0 %1966
    %v1968 = vsel %vm843, %v1952, 0.0
    %1969 = vadd.xlane.f32.xlu0 %v1968
    %v1970 = vpop.xlane.xlu0 %1969
    %v1971 = vsel %vm843, %v1954, 0.0
    %1972 = vadd.xlane.f32.xlu0 %v1971
    %v1973 = vpop.xlane.xlu0 %1972
    %v1974 = vsel %vm843, %v1956, 0.0
    %1975 = vadd.xlane.f32.xlu0 %v1974
    %v1976 = vpop.xlane.xlu0 %1975
    %v1977 = vsel %vm843, %v1958, 0.0
    %1978 = vadd.xlane.f32.xlu0 %v1977
    %v1979 = vpop.xlane.xlu0 %1978
    %v1980 = vsel %vm843, %v1960, 0.0
    %1981 = vadd.xlane.f32.xlu0 %v1980
    %v1982 = vpop.xlane.xlu0 %1981
    %v1983 = vsel %vm843, %v1962, 0.0
    %1984 = vadd.xlane.f32.xlu0 %v1983
    %v1985 = vpop.xlane.xlu0 %1984
    %v1986 = vsel %vm843, %v1964, 0.0
    %1987 = vadd.xlane.f32.xlu0 %v1986
    %v1988 = vpop.xlane.xlu0 %1987
    %v1989 = vpack.c.bf16 %v1952, %v1950
    %v1990 = vpack.c.bf16 %v1956, %v1954
    %v1991 = vpack.c.bf16 %v1960, %v1958
    %v1992 = vpack.c.bf16 %v1964, %v1962
    %1993 = vrot.lane.b32.xlu0 %v936, 112
    %v1994 = vpop.permute.xlu0 %1993
    %1995 = vrot.lane.b32.xlu0 %v937, 112
    %v1996 = vpop.permute.xlu0 %1995
    %1997 = vrot.lane.b32.xlu0 %v938, 112
    %v1998 = vpop.permute.xlu0 %1997
    %1999 = vrot.lane.b32.xlu0 %v939, 112
    %v2000 = vpop.permute.xlu0 %1999
    %v2006 = vsel %vm843, %v1989, 0
    %v2009 = vsel %vm843, %v1990, 0
    %v2012 = vsel %vm843, %v1991, 0
    %v2015 = vsel %vm843, %v1992, 0
    %2017 = vmatpush.bf16.msra.mxu0 0
    %2018 = vmatpush.bf16.msra.mxu0 0
    %2019 = vmatpush.bf16.msra.mxu0 0
    %2020 = vmatpush.bf16.msra.mxu0 0
    %2021 = vmatpush.bf16.msra.mxu0 %v2000
    %2022 = vmatpush.bf16.msra.mxu0 %v1998
    %2023 = vmatpush.bf16.msra.mxu0 %v1996
    %2024 = vmatpush.bf16.msra.mxu0 %v1994
    %2025 = vmatmul.bf16.gmra.mxu0 %v2006
    %v2026 = vpop.f32.mrf.mxu0
    %v2027 = vadd.f32 0.0, %v2026
    %v2028 = vpop.f32.mrf.mxu0
    %v2029 = vadd.f32 0.0, %v2028
    %2030 = vmatmul.bf16.gmra.mxu0 %v2009
    %v2031 = vpop.f32.mrf.mxu0
    %v2032 = vadd.f32 0.0, %v2031
    %v2033 = vpop.f32.mrf.mxu0
    %v2034 = vadd.f32 0.0, %v2033
    %2035 = vmatmul.bf16.gmra.mxu0 %v2012
    %v2036 = vpop.f32.mrf.mxu0
    %v2037 = vadd.f32 0.0, %v2036
    %v2038 = vpop.f32.mrf.mxu0
    %v2039 = vadd.f32 0.0, %v2038
    %2040 = vmatmul.bf16.gmra.mxu0 %v2015
    %v2041 = vpop.f32.mrf.mxu0
    %v2042 = vadd.f32 0.0, %v2041
    %v2043 = vpop.f32.mrf.mxu0
    %v2044 = vadd.f32 0.0, %v2043
    %2045 = vdwg.mxu0
    %v2046 = vrcp.pop %v1967
    %v2047 = vrcp.pop %v1970
    %v2048 = vrcp.pop %v1973
    %v2049 = vrcp.pop %v1976
    %v2050 = vrcp.pop %v1979
    %v2051 = vrcp.pop %v1982
    %v2052 = vrcp.pop %v1985
    %v2053 = vrcp.pop %v1988
    %v2054 = vmul.f32 %v2027, %v2046
    %v2055 = vmul.f32 %v2029, %v2047
    %v2056 = vmul.f32 %v2032, %v2048
    %v2057 = vmul.f32 %v2034, %v2049
    %v2058 = vmul.f32 %v2037, %v2050
    %v2059 = vmul.f32 %v2039, %v2051
    %v2060 = vmul.f32 %v2042, %v2052
    %v2061 = vmul.f32 %v2044, %v2053
    %2062 = vrot.lane.b32.xlu0 %v1017, 112
    %v2063 = vpop.permute.xlu0 %2062
    %2064 = vrot.lane.b32.xlu0 %v1018, 112
    %v2065 = vpop.permute.xlu0 %2064
    %2066 = vrot.lane.b32.xlu0 %v1019, 112
    %v2067 = vpop.permute.xlu0 %2066
    %2068 = vrot.lane.b32.xlu0 %v1020, 112
    %v2069 = vpop.permute.xlu0 %2068
    %2070 = vrot.lane.b32.xlu0 %v1037, 112
    %v2071 = vpop.permute.xlu0 %2070
    %2072 = vrot.lane.b32.xlu0 %v1038, 112
    %v2073 = vpop.permute.xlu0 %2072
    %2074 = vrot.lane.b32.xlu0 %v1039, 112
    %v2075 = vpop.permute.xlu0 %2074
    %2076 = vrot.lane.b32.xlu0 %v1040, 112
    %v2077 = vpop.permute.xlu0 %2076
    %v2079 = vsel %vm789, %v2063, 0
    %v2082 = vsel %vm789, %v2065, 0
    %v2085 = vsel %vm789, %v2067, 0
    %v2088 = vsel %vm789, %v2069, 0
    %v2091 = vsel %vm789, %v2071, 0
    %v2094 = vsel %vm789, %v2073, 0
    %v2097 = vsel %vm789, %v2075, 0
    %v2100 = vsel %vm789, %v2077, 0
    %2102 = vmatpush.bf16.xpose.msra.mxu0 0
    %2103 = vmatpush.bf16.xpose.msra.mxu0 0
    %2104 = vmatpush.bf16.xpose.msra.mxu0 0
    %2105 = vmatpush.bf16.xpose.msra.mxu0 0
    %2106 = vmatpush.bf16.xpose.msra.mxu0 %v2100
    %2107 = vmatpush.bf16.xpose.msra.mxu0 %v2097
    %2108 = vmatpush.bf16.xpose.msra.mxu0 %v2094
    %2109 = vmatpush.bf16.xpose.msra.mxu0 %v2091
    %2110 = vmatmul.bf16.gmra.mxu0 %v2079
    %v2111 = vpop.f32.mrf.mxu0
    %v2112 = vadd.f32 0.0, %v2111
    %v2113 = vpop.f32.mrf.mxu0
    %v2114 = vadd.f32 0.0, %v2113
    %2115 = vmatmul.bf16.gmra.mxu0 %v2082
    %v2116 = vpop.f32.mrf.mxu0
    %v2117 = vadd.f32 0.0, %v2116
    %v2118 = vpop.f32.mrf.mxu0
    %v2119 = vadd.f32 0.0, %v2118
    %2120 = vmatmul.bf16.gmra.mxu0 %v2085
    %v2121 = vpop.f32.mrf.mxu0
    %v2122 = vadd.f32 0.0, %v2121
    %v2123 = vpop.f32.mrf.mxu0
    %v2124 = vadd.f32 0.0, %v2123
    %2125 = vmatmul.bf16.gmra.mxu0 %v2088
    %v2126 = vpop.f32.mrf.mxu0
    %v2127 = vadd.f32 0.0, %v2126
    %v2128 = vpop.f32.mrf.mxu0
    %v2129 = vadd.f32 0.0, %v2128
    %2130 = vdwg.mxu0
    %v2131 = vsel %vm843, %v2112, -inf
    %2132 = vmax.xlane.f32.xlu0 %v2131
    %v2133 = vpop.xlane.xlu0 %2132
    %v2134 = vsel %vm843, %v2114, -inf
    %2135 = vmax.xlane.f32.xlu0 %v2134
    %v2136 = vpop.xlane.xlu0 %2135
    %v2137 = vsel %vm843, %v2117, -inf
    %2138 = vmax.xlane.f32.xlu0 %v2137
    %v2139 = vpop.xlane.xlu0 %2138
    %v2140 = vsel %vm843, %v2119, -inf
    %2141 = vmax.xlane.f32.xlu0 %v2140
    %v2142 = vpop.xlane.xlu0 %2141
    %v2143 = vsel %vm843, %v2122, -inf
    %2144 = vmax.xlane.f32.xlu0 %v2143
    %v2145 = vpop.xlane.xlu0 %2144
    %v2146 = vsel %vm843, %v2124, -inf
    %2147 = vmax.xlane.f32.xlu0 %v2146
    %v2148 = vpop.xlane.xlu0 %2147
    %v2149 = vsel %vm843, %v2127, -inf
    %2150 = vmax.xlane.f32.xlu0 %v2149
    %v2151 = vpop.xlane.xlu0 %2150
    %v2152 = vsel %vm843, %v2129, -inf
    %2153 = vmax.xlane.f32.xlu0 %v2152
    %v2154 = vpop.xlane.xlu0 %2153
    %v2155 = vsub.f32 %v2112, %v2133
    %v2156 = vsub.f32 %v2114, %v2136
    %v2157 = vsub.f32 %v2117, %v2139
    %v2158 = vsub.f32 %v2119, %v2142
    %v2159 = vsub.f32 %v2122, %v2145
    %v2160 = vsub.f32 %v2124, %v2148
    %v2161 = vsub.f32 %v2127, %v2151
    %v2162 = vsub.f32 %v2129, %v2154
    %v2163 = vmul.f32 %v2155, 1.442695
    %v2164 = vpow.pop %v2163
    %v2165 = vmul.f32 %v2156, 1.442695
    %v2166 = vpow.pop %v2165
    %v2167 = vmul.f32 %v2157, 1.442695
    %v2168 = vpow.pop %v2167
    %v2169 = vmul.f32 %v2158, 1.442695
    %v2170 = vpow.pop %v2169
    %v2171 = vmul.f32 %v2159, 1.442695
    %v2172 = vpow.pop %v2171
    %v2173 = vmul.f32 %v2160, 1.442695
    %v2174 = vpow.pop %v2173
    %v2175 = vmul.f32 %v2161, 1.442695
    %v2176 = vpow.pop %v2175
    %v2177 = vmul.f32 %v2162, 1.442695
    %v2178 = vpow.pop %v2177
    %v2179 = vsel %vm843, %v2164, 0.0
    %2180 = vadd.xlane.f32.xlu0 %v2179
    %v2181 = vpop.xlane.xlu0 %2180
    %v2182 = vsel %vm843, %v2166, 0.0
    %2183 = vadd.xlane.f32.xlu0 %v2182
    %v2184 = vpop.xlane.xlu0 %2183
    %v2185 = vsel %vm843, %v2168, 0.0
    %2186 = vadd.xlane.f32.xlu0 %v2185
    %v2187 = vpop.xlane.xlu0 %2186
    %v2188 = vsel %vm843, %v2170, 0.0
    %2189 = vadd.xlane.f32.xlu0 %v2188
    %v2190 = vpop.xlane.xlu0 %2189
    %v2191 = vsel %vm843, %v2172, 0.0
    %2192 = vadd.xlane.f32.xlu0 %v2191
    %v2193 = vpop.xlane.xlu0 %2192
    %v2194 = vsel %vm843, %v2174, 0.0
    %2195 = vadd.xlane.f32.xlu0 %v2194
    %v2196 = vpop.xlane.xlu0 %2195
    %v2197 = vsel %vm843, %v2176, 0.0
    %2198 = vadd.xlane.f32.xlu0 %v2197
    %v2199 = vpop.xlane.xlu0 %2198
    %v2200 = vsel %vm843, %v2178, 0.0
    %2201 = vadd.xlane.f32.xlu0 %v2200
    %v2202 = vpop.xlane.xlu0 %2201
    %v2203 = vpack.c.bf16 %v2166, %v2164
    %v2204 = vpack.c.bf16 %v2170, %v2168
    %v2205 = vpack.c.bf16 %v2174, %v2172
    %v2206 = vpack.c.bf16 %v2178, %v2176
    %2207 = vrot.lane.b32.xlu0 %v1186, 112
    %v2208 = vpop.permute.xlu0 %2207
    %2209 = vrot.lane.b32.xlu0 %v1187, 112
    %v2210 = vpop.permute.xlu0 %2209
    %2211 = vrot.lane.b32.xlu0 %v1188, 112
    %v2212 = vpop.permute.xlu0 %2211
    %2213 = vrot.lane.b32.xlu0 %v1189, 112
    %v2214 = vpop.permute.xlu0 %2213
    %v2220 = vsel %vm843, %v2203, 0
    %v2223 = vsel %vm843, %v2204, 0
    %v2226 = vsel %vm843, %v2205, 0
    %v2229 = vsel %vm843, %v2206, 0
    %2231 = vmatpush.bf16.msra.mxu0 0
    %2232 = vmatpush.bf16.msra.mxu0 0
    %2233 = vmatpush.bf16.msra.mxu0 0
    %2234 = vmatpush.bf16.msra.mxu0 0
    %2235 = vmatpush.bf16.msra.mxu0 %v2214
    %2236 = vmatpush.bf16.msra.mxu0 %v2212
    %2237 = vmatpush.bf16.msra.mxu0 %v2210
    %2238 = vmatpush.bf16.msra.mxu0 %v2208
    %2239 = vmatmul.bf16.gmra.mxu0 %v2220
    %v2240 = vpop.f32.mrf.mxu0
    %v2241 = vadd.f32 0.0, %v2240
    %v2242 = vpop.f32.mrf.mxu0
    %v2243 = vadd.f32 0.0, %v2242
    %2244 = vmatmul.bf16.gmra.mxu0 %v2223
    %v2245 = vpop.f32.mrf.mxu0
    %v2246 = vadd.f32 0.0, %v2245
    %v2247 = vpop.f32.mrf.mxu0
    %v2248 = vadd.f32 0.0, %v2247
    %2249 = vmatmul.bf16.gmra.mxu0 %v2226
    %v2250 = vpop.f32.mrf.mxu0
    %v2251 = vadd.f32 0.0, %v2250
    %v2252 = vpop.f32.mrf.mxu0
    %v2253 = vadd.f32 0.0, %v2252
    %2254 = vmatmul.bf16.gmra.mxu0 %v2229
    %v2255 = vpop.f32.mrf.mxu0
    %v2256 = vadd.f32 0.0, %v2255
    %v2257 = vpop.f32.mrf.mxu0
    %v2258 = vadd.f32 0.0, %v2257
    %2259 = vdwg.mxu0
    %v2260 = vrcp.pop %v2181
    %v2261 = vrcp.pop %v2184
    %v2262 = vrcp.pop %v2187
    %v2263 = vrcp.pop %v2190
    %v2264 = vrcp.pop %v2193
    %v2265 = vrcp.pop %v2196
    %v2266 = vrcp.pop %v2199
    %v2267 = vrcp.pop %v2202
    %v2268 = vmul.f32 %v2241, %v2260
    %v2269 = vmul.f32 %v2243, %v2261
    %v2270 = vmul.f32 %v2246, %v2262
    %v2271 = vmul.f32 %v2248, %v2263
    %v2272 = vmul.f32 %v2251, %v2264
    %v2273 = vmul.f32 %v2253, %v2265
    %v2274 = vmul.f32 %v2256, %v2266
    %v2275 = vmul.f32 %v2258, %v2267
    %v2276 = vpack.c.bf16 %v2055, %v2054
    %v2277 = vpack.c.bf16 %v2057, %v2056
    %v2278 = vpack.c.bf16 %v2059, %v2058
    %v2279 = vpack.c.bf16 %v2061, %v2060
    %v2280 = vpack.c.bf16 %v2269, %v2268
    %v2281 = vpack.c.bf16 %v2271, %v2270
    %v2282 = vpack.c.bf16 %v2273, %v2272
    %v2283 = vpack.c.bf16 %v2275, %v2274
    %v2285 = vsel %vm789, %v2276, 0
    %v2288 = vsel %vm789, %v2277, 0
    %v2291 = vsel %vm789, %v2278, 0
    %v2294 = vsel %vm789, %v2279, 0
    %v2297 = vsel %vm789, %v2280, 0
    %v2300 = vsel %vm789, %v2281, 0
    %v2303 = vsel %vm789, %v2282, 0
    %v2306 = vsel %vm789, %v2283, 0
    %v2309 = vsel %vm1719, %v149, 0
    %2311 = vmatpush.bf16.msra.mxu0 0
    %2312 = vmatpush.bf16.msra.mxu0 0
    %2313 = vmatpush.bf16.msra.mxu0 0
    %2314 = vmatpush.bf16.msra.mxu0 0
    %2315 = vmatpush.bf16.msra.mxu0 0
    %2316 = vmatpush.bf16.msra.mxu0 0
    %2317 = vmatpush.bf16.msra.mxu0 0
    %2318 = vmatpush.bf16.msra.mxu0 %v2309
    %2319 = vmatmul.bf16.gmra.mxu0 %v2285
    %v2320 = vpop.f32.mrf.mxu0
    %v2321 = vadd.f32 0.0, %v2320
    %v2322 = vpop.f32.mrf.mxu0
    %v2323 = vadd.f32 0.0, %v2322
    %2324 = vmatmul.bf16.gmra.mxu0 %v2288
    %v2325 = vpop.f32.mrf.mxu0
    %v2326 = vadd.f32 0.0, %v2325
    %v2327 = vpop.f32.mrf.mxu0
    %v2328 = vadd.f32 0.0, %v2327
    %2329 = vmatmul.bf16.gmra.mxu0 %v2291
    %v2330 = vpop.f32.mrf.mxu0
    %v2331 = vadd.f32 0.0, %v2330
    %v2332 = vpop.f32.mrf.mxu0
    %v2333 = vadd.f32 0.0, %v2332
    %2334 = vmatmul.bf16.gmra.mxu0 %v2294
    %v2335 = vpop.f32.mrf.mxu0
    %v2336 = vadd.f32 0.0, %v2335
    %v2337 = vpop.f32.mrf.mxu0
    %v2338 = vadd.f32 0.0, %v2337
    %2339 = vmatmul.bf16.gmra.mxu0 %v2297
    %v2340 = vpop.f32.mrf.mxu0
    %v2341 = vadd.f32 0.0, %v2340
    %v2342 = vpop.f32.mrf.mxu0
    %v2343 = vadd.f32 0.0, %v2342
    %2344 = vmatmul.bf16.gmra.mxu0 %v2300
    %v2345 = vpop.f32.mrf.mxu0
    %v2346 = vadd.f32 0.0, %v2345
    %v2347 = vpop.f32.mrf.mxu0
    %v2348 = vadd.f32 0.0, %v2347
    %2349 = vmatmul.bf16.gmra.mxu0 %v2303
    %v2350 = vpop.f32.mrf.mxu0
    %v2351 = vadd.f32 0.0, %v2350
    %v2352 = vpop.f32.mrf.mxu0
    %v2353 = vadd.f32 0.0, %v2352
    %2354 = vmatmul.bf16.gmra.mxu0 %v2306
    %v2355 = vpop.f32.mrf.mxu0
    %v2356 = vadd.f32 0.0, %v2355
    %v2357 = vpop.f32.mrf.mxu0
    %v2358 = vadd.f32 0.0, %v2357
    %2359 = vdwg.mxu0
    %v2360 = vadd.f32 %v1809, %v2321
    %v2361 = vadd.f32 %v1811, %v2323
    %v2362 = vadd.f32 %v1814, %v2326
    %v2363 = vadd.f32 %v1816, %v2328
    %v2364 = vadd.f32 %v1819, %v2331
    %v2365 = vadd.f32 %v1821, %v2333
    %v2366 = vadd.f32 %v1824, %v2336
    %v2367 = vadd.f32 %v1826, %v2338
    %v2368 = vadd.f32 %v1829, %v2341
    %v2369 = vadd.f32 %v1831, %v2343
    %v2370 = vadd.f32 %v1834, %v2346
    %v2371 = vadd.f32 %v1836, %v2348
    %v2372 = vadd.f32 %v1839, %v2351
    %v2373 = vadd.f32 %v1841, %v2353
    %v2374 = vadd.f32 %v1844, %v2356
    %v2375 = vadd.f32 %v1846, %v2358
    %2376 = vrot.lane.b32.xlu0 %v765, 104
    %v2377 = vpop.permute.xlu0 %2376
    %2378 = vrot.lane.b32.xlu0 %v766, 104
    %v2379 = vpop.permute.xlu0 %2378
    %2380 = vrot.lane.b32.xlu0 %v767, 104
    %v2381 = vpop.permute.xlu0 %2380
    %2382 = vrot.lane.b32.xlu0 %v768, 104
    %v2383 = vpop.permute.xlu0 %2382
    %2384 = vrot.lane.b32.xlu0 %v785, 104
    %v2385 = vpop.permute.xlu0 %2384
    %2386 = vrot.lane.b32.xlu0 %v786, 104
    %v2387 = vpop.permute.xlu0 %2386
    %2388 = vrot.lane.b32.xlu0 %v787, 104
    %v2389 = vpop.permute.xlu0 %2388
    %2390 = vrot.lane.b32.xlu0 %v788, 104
    %v2391 = vpop.permute.xlu0 %2390
    %v2393 = vsel %vm789, %v2377, 0
    %v2396 = vsel %vm789, %v2379, 0
    %v2399 = vsel %vm789, %v2381, 0
    %v2402 = vsel %vm789, %v2383, 0
    %v2405 = vsel %vm789, %v2385, 0
    %v2408 = vsel %vm789, %v2387, 0
    %v2411 = vsel %vm789, %v2389, 0
    %v2414 = vsel %vm789, %v2391, 0
    %2416 = vmatpush.bf16.xpose.msra.mxu0 0
    %2417 = vmatpush.bf16.xpose.msra.mxu0 0
    %2418 = vmatpush.bf16.xpose.msra.mxu0 0
    %2419 = vmatpush.bf16.xpose.msra.mxu0 0
    %2420 = vmatpush.bf16.xpose.msra.mxu0 %v2414
    %2421 = vmatpush.bf16.xpose.msra.mxu0 %v2411
    %2422 = vmatpush.bf16.xpose.msra.mxu0 %v2408
    %2423 = vmatpush.bf16.xpose.msra.mxu0 %v2405
    %2424 = vmatmul.bf16.gmra.mxu0 %v2393
    %v2425 = vpop.f32.mrf.mxu0
    %v2426 = vadd.f32 0.0, %v2425
    %v2427 = vpop.f32.mrf.mxu0
    %v2428 = vadd.f32 0.0, %v2427
    %2429 = vmatmul.bf16.gmra.mxu0 %v2396
    %v2430 = vpop.f32.mrf.mxu0
    %v2431 = vadd.f32 0.0, %v2430
    %v2432 = vpop.f32.mrf.mxu0
    %v2433 = vadd.f32 0.0, %v2432
    %2434 = vmatmul.bf16.gmra.mxu0 %v2399
    %v2435 = vpop.f32.mrf.mxu0
    %v2436 = vadd.f32 0.0, %v2435
    %v2437 = vpop.f32.mrf.mxu0
    %v2438 = vadd.f32 0.0, %v2437
    %2439 = vmatmul.bf16.gmra.mxu0 %v2402
    %v2440 = vpop.f32.mrf.mxu0
    %v2441 = vadd.f32 0.0, %v2440
    %v2442 = vpop.f32.mrf.mxu0
    %v2443 = vadd.f32 0.0, %v2442
    %2444 = vdwg.mxu0
    %v2445 = vsel %vm843, %v2426, -inf
    %2446 = vmax.xlane.f32.xlu0 %v2445
    %v2447 = vpop.xlane.xlu0 %2446
    %v2448 = vsel %vm843, %v2428, -inf
    %2449 = vmax.xlane.f32.xlu0 %v2448
    %v2450 = vpop.xlane.xlu0 %2449
    %v2451 = vsel %vm843, %v2431, -inf
    %2452 = vmax.xlane.f32.xlu0 %v2451
    %v2453 = vpop.xlane.xlu0 %2452
    %v2454 = vsel %vm843, %v2433, -inf
    %2455 = vmax.xlane.f32.xlu0 %v2454
    %v2456 = vpop.xlane.xlu0 %2455
    %v2457 = vsel %vm843, %v2436, -inf
    %2458 = vmax.xlane.f32.xlu0 %v2457
    %v2459 = vpop.xlane.xlu0 %2458
    %v2460 = vsel %vm843, %v2438, -inf
    %2461 = vmax.xlane.f32.xlu0 %v2460
    %v2462 = vpop.xlane.xlu0 %2461
    %v2463 = vsel %vm843, %v2441, -inf
    %2464 = vmax.xlane.f32.xlu0 %v2463
    %v2465 = vpop.xlane.xlu0 %2464
    %v2466 = vsel %vm843, %v2443, -inf
    %2467 = vmax.xlane.f32.xlu0 %v2466
    %v2468 = vpop.xlane.xlu0 %2467
    %v2469 = vsub.f32 %v2426, %v2447
    %v2470 = vsub.f32 %v2428, %v2450
    %v2471 = vsub.f32 %v2431, %v2453
    %v2472 = vsub.f32 %v2433, %v2456
    %v2473 = vsub.f32 %v2436, %v2459
    %v2474 = vsub.f32 %v2438, %v2462
    %v2475 = vsub.f32 %v2441, %v2465
    %v2476 = vsub.f32 %v2443, %v2468
    %v2477 = vmul.f32 %v2469, 1.442695
    %v2478 = vpow.pop %v2477
    %v2479 = vmul.f32 %v2470, 1.442695
    %v2480 = vpow.pop %v2479
    %v2481 = vmul.f32 %v2471, 1.442695
    %v2482 = vpow.pop %v2481
    %v2483 = vmul.f32 %v2472, 1.442695
    %v2484 = vpow.pop %v2483
    %v2485 = vmul.f32 %v2473, 1.442695
    %v2486 = vpow.pop %v2485
    %v2487 = vmul.f32 %v2474, 1.442695
    %v2488 = vpow.pop %v2487
    %v2489 = vmul.f32 %v2475, 1.442695
    %v2490 = vpow.pop %v2489
    %v2491 = vmul.f32 %v2476, 1.442695
    %v2492 = vpow.pop %v2491
    %v2493 = vsel %vm843, %v2478, 0.0
    %2494 = vadd.xlane.f32.xlu0 %v2493
    %v2495 = vpop.xlane.xlu0 %2494
    %v2496 = vsel %vm843, %v2480, 0.0
    %2497 = vadd.xlane.f32.xlu0 %v2496
    %v2498 = vpop.xlane.xlu0 %2497
    %v2499 = vsel %vm843, %v2482, 0.0
    %2500 = vadd.xlane.f32.xlu0 %v2499
    %v2501 = vpop.xlane.xlu0 %2500
    %v2502 = vsel %vm843, %v2484, 0.0
    %2503 = vadd.xlane.f32.xlu0 %v2502
    %v2504 = vpop.xlane.xlu0 %2503
    %v2505 = vsel %vm843, %v2486, 0.0
    %2506 = vadd.xlane.f32.xlu0 %v2505
    %v2507 = vpop.xlane.xlu0 %2506
    %v2508 = vsel %vm843, %v2488, 0.0
    %2509 = vadd.xlane.f32.xlu0 %v2508
    %v2510 = vpop.xlane.xlu0 %2509
    %v2511 = vsel %vm843, %v2490, 0.0
    %2512 = vadd.xlane.f32.xlu0 %v2511
    %v2513 = vpop.xlane.xlu0 %2512
    %v2514 = vsel %vm843, %v2492, 0.0
    %2515 = vadd.xlane.f32.xlu0 %v2514
    %v2516 = vpop.xlane.xlu0 %2515
    %v2517 = vpack.c.bf16 %v2480, %v2478
    %v2518 = vpack.c.bf16 %v2484, %v2482
    %v2519 = vpack.c.bf16 %v2488, %v2486
    %v2520 = vpack.c.bf16 %v2492, %v2490
    %2521 = vrot.lane.b32.xlu0 %v936, 104
    %v2522 = vpop.permute.xlu0 %2521
    %2523 = vrot.lane.b32.xlu0 %v937, 104
    %v2524 = vpop.permute.xlu0 %2523
    %2525 = vrot.lane.b32.xlu0 %v938, 104
    %v2526 = vpop.permute.xlu0 %2525
    %2527 = vrot.lane.b32.xlu0 %v939, 104
    %v2528 = vpop.permute.xlu0 %2527
    %v2534 = vsel %vm843, %v2517, 0
    %v2537 = vsel %vm843, %v2518, 0
    %v2540 = vsel %vm843, %v2519, 0
    %v2543 = vsel %vm843, %v2520, 0
    %2545 = vmatpush.bf16.msra.mxu0 0
    %2546 = vmatpush.bf16.msra.mxu0 0
    %2547 = vmatpush.bf16.msra.mxu0 0
    %2548 = vmatpush.bf16.msra.mxu0 0
    %2549 = vmatpush.bf16.msra.mxu0 %v2528
    %2550 = vmatpush.bf16.msra.mxu0 %v2526
    %2551 = vmatpush.bf16.msra.mxu0 %v2524
    %2552 = vmatpush.bf16.msra.mxu0 %v2522
    %2553 = vmatmul.bf16.gmra.mxu0 %v2534
    %v2554 = vpop.f32.mrf.mxu0
    %v2555 = vadd.f32 0.0, %v2554
    %v2556 = vpop.f32.mrf.mxu0
    %v2557 = vadd.f32 0.0, %v2556
    %2558 = vmatmul.bf16.gmra.mxu0 %v2537
    %v2559 = vpop.f32.mrf.mxu0
    %v2560 = vadd.f32 0.0, %v2559
    %v2561 = vpop.f32.mrf.mxu0
    %v2562 = vadd.f32 0.0, %v2561
    %2563 = vmatmul.bf16.gmra.mxu0 %v2540
    %v2564 = vpop.f32.mrf.mxu0
    %v2565 = vadd.f32 0.0, %v2564
    %v2566 = vpop.f32.mrf.mxu0
    %v2567 = vadd.f32 0.0, %v2566
    %2568 = vmatmul.bf16.gmra.mxu0 %v2543
    %v2569 = vpop.f32.mrf.mxu0
    %v2570 = vadd.f32 0.0, %v2569
    %v2571 = vpop.f32.mrf.mxu0
    %v2572 = vadd.f32 0.0, %v2571
    %2573 = vdwg.mxu0
    %v2574 = vrcp.pop %v2495
    %v2575 = vrcp.pop %v2498
    %v2576 = vrcp.pop %v2501
    %v2577 = vrcp.pop %v2504
    %v2578 = vrcp.pop %v2507
    %v2579 = vrcp.pop %v2510
    %v2580 = vrcp.pop %v2513
    %v2581 = vrcp.pop %v2516
    %v2582 = vmul.f32 %v2555, %v2574
    %v2583 = vmul.f32 %v2557, %v2575
    %v2584 = vmul.f32 %v2560, %v2576
    %v2585 = vmul.f32 %v2562, %v2577
    %v2586 = vmul.f32 %v2565, %v2578
    %v2587 = vmul.f32 %v2567, %v2579
    %v2588 = vmul.f32 %v2570, %v2580
    %v2589 = vmul.f32 %v2572, %v2581
    %2590 = vrot.lane.b32.xlu0 %v1017, 104
    %v2591 = vpop.permute.xlu0 %2590
    %2592 = vrot.lane.b32.xlu0 %v1018, 104
    %v2593 = vpop.permute.xlu0 %2592
    %2594 = vrot.lane.b32.xlu0 %v1019, 104
    %v2595 = vpop.permute.xlu0 %2594
    %2596 = vrot.lane.b32.xlu0 %v1020, 104
    %v2597 = vpop.permute.xlu0 %2596
    %2598 = vrot.lane.b32.xlu0 %v1037, 104
    %v2599 = vpop.permute.xlu0 %2598
    %2600 = vrot.lane.b32.xlu0 %v1038, 104
    %v2601 = vpop.permute.xlu0 %2600
    %2602 = vrot.lane.b32.xlu0 %v1039, 104
    %v2603 = vpop.permute.xlu0 %2602
    %2604 = vrot.lane.b32.xlu0 %v1040, 104
    %v2605 = vpop.permute.xlu0 %2604
    %v2607 = vsel %vm789, %v2591, 0
    %v2610 = vsel %vm789, %v2593, 0
    %v2613 = vsel %vm789, %v2595, 0
    %v2616 = vsel %vm789, %v2597, 0
    %v2619 = vsel %vm789, %v2599, 0
    %v2622 = vsel %vm789, %v2601, 0
    %v2625 = vsel %vm789, %v2603, 0
    %v2628 = vsel %vm789, %v2605, 0
    %2630 = vmatpush.bf16.xpose.msra.mxu0 0
    %2631 = vmatpush.bf16.xpose.msra.mxu0 0
    %2632 = vmatpush.bf16.xpose.msra.mxu0 0
    %2633 = vmatpush.bf16.xpose.msra.mxu0 0
    %2634 = vmatpush.bf16.xpose.msra.mxu0 %v2628
    %2635 = vmatpush.bf16.xpose.msra.mxu0 %v2625
    %2636 = vmatpush.bf16.xpose.msra.mxu0 %v2622
    %2637 = vmatpush.bf16.xpose.msra.mxu0 %v2619
    %2638 = vmatmul.bf16.gmra.mxu0 %v2607
    %v2639 = vpop.f32.mrf.mxu0
    %v2640 = vadd.f32 0.0, %v2639
    %v2641 = vpop.f32.mrf.mxu0
    %v2642 = vadd.f32 0.0, %v2641
    %2643 = vmatmul.bf16.gmra.mxu0 %v2610
    %v2644 = vpop.f32.mrf.mxu0
    %v2645 = vadd.f32 0.0, %v2644
    %v2646 = vpop.f32.mrf.mxu0
    %v2647 = vadd.f32 0.0, %v2646
    %2648 = vmatmul.bf16.gmra.mxu0 %v2613
    %v2649 = vpop.f32.mrf.mxu0
    %v2650 = vadd.f32 0.0, %v2649
    %v2651 = vpop.f32.mrf.mxu0
    %v2652 = vadd.f32 0.0, %v2651
    %2653 = vmatmul.bf16.gmra.mxu0 %v2616
    %v2654 = vpop.f32.mrf.mxu0
    %v2655 = vadd.f32 0.0, %v2654
    %v2656 = vpop.f32.mrf.mxu0
    %v2657 = vadd.f32 0.0, %v2656
    %2658 = vdwg.mxu0
    %v2659 = vsel %vm843, %v2640, -inf
    %2660 = vmax.xlane.f32.xlu0 %v2659
    %v2661 = vpop.xlane.xlu0 %2660
    %v2662 = vsel %vm843, %v2642, -inf
    %2663 = vmax.xlane.f32.xlu0 %v2662
    %v2664 = vpop.xlane.xlu0 %2663
    %v2665 = vsel %vm843, %v2645, -inf
    %2666 = vmax.xlane.f32.xlu0 %v2665
    %v2667 = vpop.xlane.xlu0 %2666
    %v2668 = vsel %vm843, %v2647, -inf
    %2669 = vmax.xlane.f32.xlu0 %v2668
    %v2670 = vpop.xlane.xlu0 %2669
    %v2671 = vsel %vm843, %v2650, -inf
    %2672 = vmax.xlane.f32.xlu0 %v2671
    %v2673 = vpop.xlane.xlu0 %2672
    %v2674 = vsel %vm843, %v2652, -inf
    %2675 = vmax.xlane.f32.xlu0 %v2674
    %v2676 = vpop.xlane.xlu0 %2675
    %v2677 = vsel %vm843, %v2655, -inf
    %2678 = vmax.xlane.f32.xlu0 %v2677
    %v2679 = vpop.xlane.xlu0 %2678
    %v2680 = vsel %vm843, %v2657, -inf
    %2681 = vmax.xlane.f32.xlu0 %v2680
    %v2682 = vpop.xlane.xlu0 %2681
    %v2683 = vsub.f32 %v2640, %v2661
    %v2684 = vsub.f32 %v2642, %v2664
    %v2685 = vsub.f32 %v2645, %v2667
    %v2686 = vsub.f32 %v2647, %v2670
    %v2687 = vsub.f32 %v2650, %v2673
    %v2688 = vsub.f32 %v2652, %v2676
    %v2689 = vsub.f32 %v2655, %v2679
    %v2690 = vsub.f32 %v2657, %v2682
    %v2691 = vmul.f32 %v2683, 1.442695
    %v2692 = vpow.pop %v2691
    %v2693 = vmul.f32 %v2684, 1.442695
    %v2694 = vpow.pop %v2693
    %v2695 = vmul.f32 %v2685, 1.442695
    %v2696 = vpow.pop %v2695
    %v2697 = vmul.f32 %v2686, 1.442695
    %v2698 = vpow.pop %v2697
    %v2699 = vmul.f32 %v2687, 1.442695
    %v2700 = vpow.pop %v2699
    %v2701 = vmul.f32 %v2688, 1.442695
    %v2702 = vpow.pop %v2701
    %v2703 = vmul.f32 %v2689, 1.442695
    %v2704 = vpow.pop %v2703
    %v2705 = vmul.f32 %v2690, 1.442695
    %v2706 = vpow.pop %v2705
    %v2707 = vsel %vm843, %v2692, 0.0
    %2708 = vadd.xlane.f32.xlu0 %v2707
    %v2709 = vpop.xlane.xlu0 %2708
    %v2710 = vsel %vm843, %v2694, 0.0
    %2711 = vadd.xlane.f32.xlu0 %v2710
    %v2712 = vpop.xlane.xlu0 %2711
    %v2713 = vsel %vm843, %v2696, 0.0
    %2714 = vadd.xlane.f32.xlu0 %v2713
    %v2715 = vpop.xlane.xlu0 %2714
    %v2716 = vsel %vm843, %v2698, 0.0
    %2717 = vadd.xlane.f32.xlu0 %v2716
    %v2718 = vpop.xlane.xlu0 %2717
    %v2719 = vsel %vm843, %v2700, 0.0
    %2720 = vadd.xlane.f32.xlu0 %v2719
    %v2721 = vpop.xlane.xlu0 %2720
    %v2722 = vsel %vm843, %v2702, 0.0
    %2723 = vadd.xlane.f32.xlu0 %v2722
    %v2724 = vpop.xlane.xlu0 %2723
    %v2725 = vsel %vm843, %v2704, 0.0
    %2726 = vadd.xlane.f32.xlu0 %v2725
    %v2727 = vpop.xlane.xlu0 %2726
    %v2728 = vsel %vm843, %v2706, 0.0
    %2729 = vadd.xlane.f32.xlu0 %v2728
    %v2730 = vpop.xlane.xlu0 %2729
    %v2731 = vpack.c.bf16 %v2694, %v2692
    %v2732 = vpack.c.bf16 %v2698, %v2696
    %v2733 = vpack.c.bf16 %v2702, %v2700
    %v2734 = vpack.c.bf16 %v2706, %v2704
    %2735 = vrot.lane.b32.xlu0 %v1186, 104
    %v2736 = vpop.permute.xlu0 %2735
    %2737 = vrot.lane.b32.xlu0 %v1187, 104
    %v2738 = vpop.permute.xlu0 %2737
    %2739 = vrot.lane.b32.xlu0 %v1188, 104
    %v2740 = vpop.permute.xlu0 %2739
    %2741 = vrot.lane.b32.xlu0 %v1189, 104
    %v2742 = vpop.permute.xlu0 %2741
    %v2748 = vsel %vm843, %v2731, 0
    %v2751 = vsel %vm843, %v2732, 0
    %v2754 = vsel %vm843, %v2733, 0
    %v2757 = vsel %vm843, %v2734, 0
    %2759 = vmatpush.bf16.msra.mxu0 0
    %2760 = vmatpush.bf16.msra.mxu0 0
    %2761 = vmatpush.bf16.msra.mxu0 0
    %2762 = vmatpush.bf16.msra.mxu0 0
    %2763 = vmatpush.bf16.msra.mxu0 %v2742
    %2764 = vmatpush.bf16.msra.mxu0 %v2740
    %2765 = vmatpush.bf16.msra.mxu0 %v2738
    %2766 = vmatpush.bf16.msra.mxu0 %v2736
    %2767 = vmatmul.bf16.gmra.mxu0 %v2748
    %v2768 = vpop.f32.mrf.mxu0
    %v2769 = vadd.f32 0.0, %v2768
    %v2770 = vpop.f32.mrf.mxu0
    %v2771 = vadd.f32 0.0, %v2770
    %2772 = vmatmul.bf16.gmra.mxu0 %v2751
    %v2773 = vpop.f32.mrf.mxu0
    %v2774 = vadd.f32 0.0, %v2773
    %v2775 = vpop.f32.mrf.mxu0
    %v2776 = vadd.f32 0.0, %v2775
    %2777 = vmatmul.bf16.gmra.mxu0 %v2754
    %v2778 = vpop.f32.mrf.mxu0
    %v2779 = vadd.f32 0.0, %v2778
    %v2780 = vpop.f32.mrf.mxu0
    %v2781 = vadd.f32 0.0, %v2780
    %2782 = vmatmul.bf16.gmra.mxu0 %v2757
    %v2783 = vpop.f32.mrf.mxu0
    %v2784 = vadd.f32 0.0, %v2783
    %v2785 = vpop.f32.mrf.mxu0
    %v2786 = vadd.f32 0.0, %v2785
    %2787 = vdwg.mxu0
    %v2788 = vrcp.pop %v2709
    %v2789 = vrcp.pop %v2712
    %v2790 = vrcp.pop %v2715
    %v2791 = vrcp.pop %v2718
    %v2792 = vrcp.pop %v2721
    %v2793 = vrcp.pop %v2724
    %v2794 = vrcp.pop %v2727
    %v2795 = vrcp.pop %v2730
    %v2796 = vmul.f32 %v2769, %v2788
    %v2797 = vmul.f32 %v2771, %v2789
    %v2798 = vmul.f32 %v2774, %v2790
    %v2799 = vmul.f32 %v2776, %v2791
    %v2800 = vmul.f32 %v2779, %v2792
    %v2801 = vmul.f32 %v2781, %v2793
    %v2802 = vmul.f32 %v2784, %v2794
    %v2803 = vmul.f32 %v2786, %v2795
    %v2804 = vpack.c.bf16 %v2583, %v2582
    %v2805 = vpack.c.bf16 %v2585, %v2584
    %v2806 = vpack.c.bf16 %v2587, %v2586
    %v2807 = vpack.c.bf16 %v2589, %v2588
    %v2808 = vpack.c.bf16 %v2797, %v2796
    %v2809 = vpack.c.bf16 %v2799, %v2798
    %v2810 = vpack.c.bf16 %v2801, %v2800
    %v2811 = vpack.c.bf16 %v2803, %v2802
    %v2813 = vsel %vm789, %v2804, 0
    %v2816 = vsel %vm789, %v2805, 0
    %v2819 = vsel %vm789, %v2806, 0
    %v2822 = vsel %vm789, %v2807, 0
    %v2825 = vsel %vm789, %v2808, 0
    %v2828 = vsel %vm789, %v2809, 0
    %v2831 = vsel %vm789, %v2810, 0
    %v2834 = vsel %vm789, %v2811, 0
    %v2837 = vsel %vm1719, %v150, 0
    %2839 = vmatpush.bf16.msra.mxu0 0
    %2840 = vmatpush.bf16.msra.mxu0 0
    %2841 = vmatpush.bf16.msra.mxu0 0
    %2842 = vmatpush.bf16.msra.mxu0 0
    %2843 = vmatpush.bf16.msra.mxu0 0
    %2844 = vmatpush.bf16.msra.mxu0 0
    %2845 = vmatpush.bf16.msra.mxu0 0
    %2846 = vmatpush.bf16.msra.mxu0 %v2837
    %2847 = vmatmul.bf16.gmra.mxu0 %v2813
    %v2848 = vpop.f32.mrf.mxu0
    %v2849 = vadd.f32 0.0, %v2848
    %v2850 = vpop.f32.mrf.mxu0
    %v2851 = vadd.f32 0.0, %v2850
    %2852 = vmatmul.bf16.gmra.mxu0 %v2816
    %v2853 = vpop.f32.mrf.mxu0
    %v2854 = vadd.f32 0.0, %v2853
    %v2855 = vpop.f32.mrf.mxu0
    %v2856 = vadd.f32 0.0, %v2855
    %2857 = vmatmul.bf16.gmra.mxu0 %v2819
    %v2858 = vpop.f32.mrf.mxu0
    %v2859 = vadd.f32 0.0, %v2858
    %v2860 = vpop.f32.mrf.mxu0
    %v2861 = vadd.f32 0.0, %v2860
    %2862 = vmatmul.bf16.gmra.mxu0 %v2822
    %v2863 = vpop.f32.mrf.mxu0
    %v2864 = vadd.f32 0.0, %v2863
    %v2865 = vpop.f32.mrf.mxu0
    %v2866 = vadd.f32 0.0, %v2865
    %2867 = vmatmul.bf16.gmra.mxu0 %v2825
    %v2868 = vpop.f32.mrf.mxu0
    %v2869 = vadd.f32 0.0, %v2868
    %v2870 = vpop.f32.mrf.mxu0
    %v2871 = vadd.f32 0.0, %v2870
    %2872 = vmatmul.bf16.gmra.mxu0 %v2828
    %v2873 = vpop.f32.mrf.mxu0
    %v2874 = vadd.f32 0.0, %v2873
    %v2875 = vpop.f32.mrf.mxu0
    %v2876 = vadd.f32 0.0, %v2875
    %2877 = vmatmul.bf16.gmra.mxu0 %v2831
    %v2878 = vpop.f32.mrf.mxu0
    %v2879 = vadd.f32 0.0, %v2878
    %v2880 = vpop.f32.mrf.mxu0
    %v2881 = vadd.f32 0.0, %v2880
    %2882 = vmatmul.bf16.gmra.mxu0 %v2834
    %v2883 = vpop.f32.mrf.mxu0
    %v2884 = vadd.f32 0.0, %v2883
    %v2885 = vpop.f32.mrf.mxu0
    %v2886 = vadd.f32 0.0, %v2885
    %2887 = vdwg.mxu0
    %v2888 = vadd.f32 %v2360, %v2849
    %v2889 = vadd.f32 %v2361, %v2851
    %v2890 = vadd.f32 %v2362, %v2854
    %v2891 = vadd.f32 %v2363, %v2856
    %v2892 = vadd.f32 %v2364, %v2859
    %v2893 = vadd.f32 %v2365, %v2861
    %v2894 = vadd.f32 %v2366, %v2864
    %v2895 = vadd.f32 %v2367, %v2866
    %v2896 = vadd.f32 %v2368, %v2869
    %v2897 = vadd.f32 %v2369, %v2871
    %v2898 = vadd.f32 %v2370, %v2874
    %v2899 = vadd.f32 %v2371, %v2876
    %v2900 = vadd.f32 %v2372, %v2879
    %v2901 = vadd.f32 %v2373, %v2881
    %v2902 = vadd.f32 %v2374, %v2884
    %v2903 = vadd.f32 %v2375, %v2886
    %v2905 = vperm.slane %v154, 0
    %v2907 = vadd.f32 %v2888, %v2905
    %v2908 = vadd.f32 %v2889, %v2905
    %v2909 = vadd.f32 %v2890, %v2905
    %v2910 = vadd.f32 %v2891, %v2905
    %v2911 = vadd.f32 %v2892, %v2905
    %v2912 = vadd.f32 %v2893, %v2905
    %v2913 = vadd.f32 %v2894, %v2905
    %v2914 = vadd.f32 %v2895, %v2905
    %v2915 = vadd.f32 %v2896, %v2905
    %v2916 = vadd.f32 %v2897, %v2905
    %v2917 = vadd.f32 %v2898, %v2905
    %v2918 = vadd.f32 %v2899, %v2905
    %v2919 = vadd.f32 %v2900, %v2905
    %v2920 = vadd.f32 %v2901, %v2905
    %v2921 = vadd.f32 %v2902, %v2905
    %v2922 = vadd.f32 %v2903, %v2905
    %2923 = vxpose.xlu0.b32.start [1/16] %v2907, 128
    %2924 = vxpose.xlu0.b32.cont [2/16] %v2908, 128
    %2925 = vxpose.xlu0.b32.cont [3/16] %v2909, 128
    %2926 = vxpose.xlu0.b32.cont [4/16] %v2910, 128
    %2927 = vxpose.xlu0.b32.cont [5/16] %v2911, 128
    %2928 = vxpose.xlu0.b32.cont [6/16] %v2912, 128
    %2929 = vxpose.xlu0.b32.cont [7/16] %v2913, 128
    %2930 = vxpose.xlu0.b32.cont [8/16] %v2914, 128
    %2931 = vxpose.xlu0.b32.cont [9/16] 0.0, 128
    %2932 = vxpose.xlu0.b32.cont [10/16] 0.0, 128
    %2933 = vxpose.xlu0.b32.cont [11/16] 0.0, 128
    %2934 = vxpose.xlu0.b32.cont [12/16] 0.0, 128
    %2935 = vxpose.xlu0.b32.cont [13/16] 0.0, 128
    %2936 = vxpose.xlu0.b32.cont [14/16] 0.0, 128
    %2937 = vxpose.xlu0.b32.cont [15/16] 0.0, 128
    %2938 = vxpose.xlu0.b32.end [16/16] 0.0, 128
    %v2939 = vpop.trf.xlu0
    %v2940 = vpop.trf.xlu0
    %v2941 = vpop.trf.xlu0
    %v2942 = vpop.trf.xlu0
    %v2943 = vpop.trf.xlu0
    %v2944 = vpop.trf.xlu0
    %v2945 = vpop.trf.xlu0
    %v2946 = vpop.trf.xlu0
    %v2947 = vpop.trf.xlu0
    %v2948 = vpop.trf.xlu0
    %v2949 = vpop.trf.xlu0
    %v2950 = vpop.trf.xlu0
    %v2951 = vpop.trf.xlu0
    %v2952 = vpop.trf.xlu0
    %v2953 = vpop.trf.xlu0
    %v2954 = vpop.trf.xlu0
    %2955 = vst.msk [vmem:[#allocation13] sm:$0xff] %vm843, %v2939
    %2956 = vst.msk [vmem:[#allocation13 + $0x8] sm:$0xff] %vm843, %v2940
    %2957 = vst.msk [vmem:[#allocation13 + $0x10] sm:$0xff] %vm843, %v2941
    %2958 = vst.msk [vmem:[#allocation13 + $0x18] sm:$0xff] %vm843, %v2942
    %2959 = vxpose.xlu0.b32.start [1/16] %v2915, 128
    %2960 = vxpose.xlu0.b32.cont [2/16] %v2916, 128
    %2961 = vxpose.xlu0.b32.cont [3/16] %v2917, 128
    %2962 = vxpose.xlu0.b32.cont [4/16] %v2918, 128
    %2963 = vxpose.xlu0.b32.cont [5/16] %v2919, 128
    %2964 = vxpose.xlu0.b32.cont [6/16] %v2920, 128
    %2965 = vxpose.xlu0.b32.cont [7/16] %v2921, 128
    %2966 = vxpose.xlu0.b32.cont [8/16] %v2922, 128
    %2967 = vxpose.xlu0.b32.cont [9/16] 0.0, 128
    %2968 = vxpose.xlu0.b32.cont [10/16] 0.0, 128
    %2969 = vxpose.xlu0.b32.cont [11/16] 0.0, 128
    %2970 = vxpose.xlu0.b32.cont [12/16] 0.0, 128
    %2971 = vxpose.xlu0.b32.cont [13/16] 0.0, 128
    %2972 = vxpose.xlu0.b32.cont [14/16] 0.0, 128
    %2973 = vxpose.xlu0.b32.cont [15/16] 0.0, 128
    %2974 = vxpose.xlu0.b32.end [16/16] 0.0, 128
    %v2975 = vpop.trf.xlu0
    %v2976 = vpop.trf.xlu0
    %v2977 = vpop.trf.xlu0
    %v2978 = vpop.trf.xlu0
    %v2979 = vpop.trf.xlu0
    %v2980 = vpop.trf.xlu0
    %v2981 = vpop.trf.xlu0
    %v2982 = vpop.trf.xlu0
    %v2983 = vpop.trf.xlu0
    %v2984 = vpop.trf.xlu0
    %v2985 = vpop.trf.xlu0
    %v2986 = vpop.trf.xlu0
    %v2987 = vpop.trf.xlu0
    %v2988 = vpop.trf.xlu0
    %v2989 = vpop.trf.xlu0
    %v2990 = vpop.trf.xlu0
    %s2991 = scalar_lea.vmem [#allocation13], 32
    %2992 = vst.msk [vmem:[%s2991] sm:$0xff] %vm843, %v2975
    %2993 = vst.msk [vmem:[%s2991 + $0x8] sm:$0xff] %vm843, %v2976
    %2994 = vst.msk [vmem:[%s2991 + $0x10] sm:$0xff] %vm843, %v2977
    %2995 = vst.msk [vmem:[%s2991 + $0x18] sm:$0xff] %vm843, %v2978
    // Predicated region
    $region66: #{tpu_custom_call.1} parent=1 // pred_check
      _
    $region67: #{tpu_custom_call.1} parent=1 // pred_check_branch
      %2997 = sbr.rel (0) target = $region69
    $region68: #{tpu_custom_call.1} parent=1 // pred_region
      %2999 = vsyncadd [#allocation4], 0
      %s3000 = sshll.u32 [#allocation13], 4
      %s3001 = int_to_ptr.vmem [resolvable:$true] %s3000
      %s3002 = sshll.u32 %s10, 4
      %s3003 = int_to_ptr.hbm [resolvable:$true] %s3002
      %3008 = dma.vmem_to_hbm [thread:$0]  %s3001, 1024, %s3003, [#allocation4], 128, 128, 8
    $region69: #{tpu_custom_call.1} parent=1 // pred_fallthru
      _
    // Predicated region
    $region70: #{tpu_custom_call.1} parent=1 // pred_check
      _
    $region71: #{tpu_custom_call.1} parent=1 // pred_check_branch
      %3010 = sbr.rel (0) target = $region73
    $region72: #{tpu_custom_call.1} parent=1 // pred_region
      %3012 = dma.done [#allocation4], 1024
    $region73: #{tpu_custom_call.1} parent=1 // pred_fallthru
      _
    %3013 = vsyncpa [#allocation3], 1
    %3014 = vsyncpa [#allocation6], 1
    %3015 = vsyncpa [#allocation9], 1
    %3016 = vsyncpa [#allocation12], 1
    %3017 = vsyncpa [#allocation4], 1

</llo_original>
